<compile_context>
chip_gen: v6e
topology: v6e:2x2x1
jax: 0.10.0
libtpu: 0.0.40
codegen_flags: <defaults>
</compile_context>

<pallas_src>
import math
import functools

import jax
import jax.numpy as jnp
from jax.experimental import pallas as pl
from jax.experimental.pallas import tpu as pltpu

NEG_INF = -1e30  # stands in for float('-inf') used by PyTorch's key-padding merge


# ------------------------------ fused kernel --------------------------------

def _smha_kernel(sf_ref, q_ref, k_ref, v_ref, mask_ref, *refs,
                 num_heads, head_dim, batch_block, tgt_len, src_len,
                 has_kpm, mxu_dtype):
    """One batch block per grid step: QKV proj + soft-masked MHA + out proj."""
    if has_kpm:
        (kpm_ref, wq_ref, wk_ref, wv_ref, wo3_ref,
         bq_ref, bk_ref, bv_ref, bo_ref, o_ref) = refs
    else:
        (wq_ref, wk_ref, wv_ref, wo3_ref,
         bq_ref, bk_ref, bv_ref, bo_ref, o_ref) = refs

    f32 = jnp.float32
    H, hd = num_heads, head_dim
    BB, T, S = batch_block, tgt_len, src_len

    # ---- QKV in-projection over the whole batch block (tall MXU M dim) ----
    xq = q_ref[...].astype(mxu_dtype)      # [BB*T, E]
    xk = k_ref[...].astype(mxu_dtype)      # [BB*S, E]
    xv = v_ref[...].astype(mxu_dtype)      # [BB*S, E]

    # w_q / b_q already carry the 1/sqrt(head_dim) query scale (folded at prep).
    q = jnp.dot(xq, wq_ref[...], preferred_element_type=f32) + bq_ref[...]
    k = jnp.dot(xk, wk_ref[...], preferred_element_type=f32) + bk_ref[...]
    v = jnp.dot(xv, wv_ref[...], preferred_element_type=f32) + bv_ref[...]

    # heads -> leading batch axis (one slice+stack relayout per tensor)
    def split_heads(x):                    # [N, E] -> [H, N, hd]
        return jnp.stack([x[:, h * hd:(h + 1) * hd] for h in range(H)], axis=0)

    qh = split_heads(q)                    # [H, BB*T, hd] f32
    kh = split_heads(k)                    # [H, BB*S, hd]
    vh = split_heads(v)                    # [H, BB*S, hd]

    # hoisted, loop-invariant loads
    maskf = mask_ref[...].astype(f32)      # [BB, T, S] additive soft mask
    sf = sf_ref[...]                       # [H, 1, 1]  per-head scale
    wo3 = wo3_ref[...]                     # [H, hd, E] out-proj (head-major)
    bo = bo_ref[...]                       # [1, E]
    if has_kpm:
        kpm_bias = jnp.where(kpm_ref[...] != 0, NEG_INF, 0.0).astype(f32)  # [BB,1,S]

    # ---- per-batch-element attention, all heads batched per dot_general ----
    outs = []
    for b in range(BB):                    # small unrolled inner loop
        qb = qh[:, b * T:(b + 1) * T, :].astype(mxu_dtype)   # [H, T, hd]
        kb = kh[:, b * S:(b + 1) * S, :].astype(mxu_dtype)   # [H, S, hd]
        vb = vh[:, b * S:(b + 1) * S, :].astype(mxu_dtype)   # [H, S, hd]

        s = jnp.einsum('htd,hsd->hts', qb, kb,
                       preferred_element_type=f32)           # [H, T, S]
        bias = maskf[b][None, :, :] * sf                     # [H, T, S]
        if has_kpm:
            bias = bias + kpm_bias[b][None]                  # [1, 1, S] broadcast
        s = s + bias

        # numerically stable softmax over src_len (reciprocal on the EUP slot)
        m = jnp.max(s, axis=-1, keepdims=True)
        p = jnp.exp(s - m)
        denom = jnp.sum(p, axis=-1, keepdims=True)
        p = p * pl.reciprocal(denom, approx=True)

        ctx = jnp.einsum('hts,hsd->htd', p.astype(mxu_dtype), vb,
                         preferred_element_type=f32)         # [H, T, hd]
        # out-projection accumulated per head (no lane concat of head chunks)
        proj = jnp.einsum('htd,hde->hte', ctx.astype(mxu_dtype), wo3,
                          preferred_element_type=f32)        # [H, T, E]
        outs.append(jnp.sum(proj, axis=0) + bo)              # [T, E]

    out = outs[0] if BB == 1 else jnp.concatenate(outs, axis=0)   # [BB*T, E]
    o_ref[...] = out.astype(o_ref.dtype)                          # one tall store


# ------------------------------ host wrappers --------------------------------

def prepare_kernel_params(params, num_heads=8, mxu_dtype=jnp.float32):
    """One-time weight prep (call once at init, NOT per forward step)."""
    E = params["w_q"].shape[0]
    assert E % num_heads == 0
    hd = E // num_heads
    inv = 1.0 / math.sqrt(hd)
    return {
        "w_q": (params["w_q"] * inv).astype(mxu_dtype),      # query scale folded in
        "w_k": params["w_k"].astype(mxu_dtype),
        "w_v": params["w_v"].astype(mxu_dtype),
        "w_o3": params["w_o"].reshape(num_heads, hd, E).astype(mxu_dtype),
        "b_q": (params["b_q"] * inv).reshape(1, E).astype(jnp.float32),
        "b_k": params["b_k"].reshape(1, E).astype(jnp.float32),
        "b_v": params["b_v"].reshape(1, E).astype(jnp.float32),
        "b_o": params["b_o"].reshape(1, E).astype(jnp.float32),
        "sf": params["scaling_factors"].reshape(num_heads, 1, 1).astype(jnp.float32),
        "num_heads": num_heads,
        "head_dim": hd,
        "mxu_dtype": mxu_dtype,
    }


def soft_masked_attention(kparams, query, key, value, mask,
                          key_padding_mask=None, batch_block=None):
    bs, T, E = query.shape
    S = key.shape[1]
    H, hd = kparams["num_heads"], kparams["head_dim"]
    assert E == H * hd

    if batch_block is None:
        batch_block = bs                 # one fat grid step by default
    BB = batch_block
    assert bs % BB == 0
    grid = (bs // BB,)

    # metadata-only reshapes -> tall, lane-dense 2-D matmul inputs
    q2 = query.reshape(bs * T, E)
    k2 = key.reshape(bs * S, E)
    v2 = value.reshape(bs * S, E)
    if mask.dtype == jnp.bool_:
        # torch: bool mask * float scaling factors -> float additive mask
        mask = mask.astype(jnp.float32)

    has_kpm = key_padding_mask is not None

    vmem = pl.BlockSpec(memory_space=pltpu.MemorySpace.VMEM)  # resident, 1-buffered
    in_specs = [
        vmem,                                                  # scaling factors
        pl.BlockSpec((BB * T, E), lambda i: (i, 0)),           # query rows
        pl.BlockSpec((BB * S, E), lambda i: (i, 0)),           # key rows
        pl.BlockSpec((BB * S, E), lambda i: (i, 0)),           # value rows
        pl.BlockSpec((BB, T, S), lambda i: (i, 0, 0)),         # soft mask
    ]
    inputs = [kparams["sf"], q2, k2, v2, mask]
    if has_kpm:
        in_specs.append(pl.BlockSpec((BB, 1, S), lambda i: (i, 0, 0)))
        inputs.append(key_padding_mask.astype(jnp.int32).reshape(bs, 1, S))
    in_specs += [vmem] * 8                                     # weights / biases
    inputs += [kparams["w_q"], kparams["w_k"], kparams["w_v"], kparams["w_o3"],
               kparams["b_q"], kparams["b_k"], kparams["b_v"], kparams["b_o"]]

    kernel = functools.partial(
        _smha_kernel, num_heads=H, head_dim=hd, batch_block=BB,
        tgt_len=T, src_len=S, has_kpm=has_kpm, mxu_dtype=kparams["mxu_dtype"])

    out2 = pl.pallas_call(
        kernel,
        out_shape=jax.ShapeDtypeStruct((bs * T, E), query.dtype),
        grid=grid,
        in_specs=in_specs,
        out_specs=pl.BlockSpec((BB * T, E), lambda i: (i, 0)),
        compiler_params=pltpu.CompilerParams(
            dimension_semantics=("parallel",)),
    )(*inputs)
    return out2.reshape(bs, T, E)


# ------------------------------ params / ref --------------------------------

def init_params(key, embed_dim, num_heads=8):
    assert embed_dim % num_heads == 0
    assert num_heads == 8, "default scaling factors require num_heads == 8"
    ks = jax.random.split(key, 8)
    s = 1.0 / math.sqrt(embed_dim)
    u = lambda k, shape: jax.random.uniform(k, shape, jnp.float32, -s, s)
    return {
        # weights stored as [in_dim, out_dim] (PyTorch weight transposed)
        "w_q": u(ks[0], (embed_dim, embed_dim)),
        "w_k": u(ks[1], (embed_dim, embed_dim)),
        "w_v": u(ks[2], (embed_dim, embed_dim)),
        "b_q": u(ks[3], (embed_dim,)),
        "b_k": u(ks[4], (embed_dim,)),
        "b_v": u(ks[5], (embed_dim,)),
        "w_o": u(ks[6], (embed_dim, embed_dim)),
        "b_o": u(ks[7], (embed_dim,)),
        "scaling_factors": jnp.asarray([32., 32., 16., 16., 8., 8., 4., 4.],
                                       jnp.float32),
    }


def reference_soft_masked_attention(params, query, key, value, mask,
                                    key_padding_mask=None, num_heads=8):
    bs, T, E = query.shape
    S = key.shape[1]
    hd = E // num_heads
    split = lambda x, L: x.reshape(bs, L, num_heads, hd).transpose(0, 2, 1, 3)
    q = split(query @ params["w_q"] + params["b_q"], T)
    k = split(key @ params["w_k"] + params["b_k"], S)
    v = split(value @ params["w_v"] + params["b_v"], S)
    scores = jnp.einsum("bhtd,bhsd->bhts", q, k) / math.sqrt(hd)
    bias = mask[:, None].astype(jnp.float32) * \
        params["scaling_factors"][None, :, None, None]
    if key_padding_mask is not None:
        bias = bias + jnp.where(key_padding_mask, NEG_INF, 0.0)[:, None, None, :]
    p = jax.nn.softmax(scores + bias, axis=-1)
    ctx = jnp.einsum("bhts,bhsd->bhtd", p, v).transpose(0, 2, 1, 3).reshape(bs, T, E)
    return ctx @ params["w_o"] + params["b_o"]


# ----------------------------------- main -----------------------------------

if __name__ == "__main__":
    bs, num_heads, embed_dim = 2, 8, 32
    num_instances, src_len = 8, 16

    root = jax.random.PRNGKey(0)
    kp, kq, kk, kv, km = jax.random.split(root, 5)
    params = init_params(kp, embed_dim, num_heads)

    query = jax.random.normal(kq, (bs, num_instances, embed_dim), jnp.float32)
    key = jax.random.normal(kk, (bs, src_len, embed_dim), jnp.float32)
    value = jax.random.normal(kv, (bs, src_len, embed_dim), jnp.float32)
    mask = jax.random.uniform(km, (bs, num_instances, src_len), jnp.float32)
    key_padding_mask = jnp.zeros((bs, src_len), bool).at[1, -3:].set(True)

    ref = reference_soft_masked_attention(params, query, key, value, mask,
                                          key_padding_mask, num_heads)

    # --- f32 MXU path (tight check; tolerance covers approx EUP reciprocal) ---
    kp32 = prepare_kernel_params(params, num_heads, jnp.float32)
    out = soft_masked_attention(kp32, query, key, value, mask, key_padding_mask)
    out = jax.block_until_ready(out)
    assert out.shape == (bs, num_instances, embed_dim)
    err32 = float(jnp.max(jnp.abs(out - ref)))
    assert jnp.allclose(out, ref, atol=2e-3, rtol=2e-3), err32

    # --- bf16 MXU path (v5e/v6e/v7x production config; looser check) ---
    kpbf = prepare_kernel_params(params, num_heads, jnp.bfloat16)
    out_bf = jax.block_until_ready(
        soft_masked_attention(kpbf, query, key, value, mask, key_padding_mask))
    err16 = float(jnp.max(jnp.abs(out_bf - ref)))
    assert jnp.allclose(out_bf, ref, atol=8e-2, rtol=8e-2), err16

    # --- no key_padding_mask path ---
    out_nk = jax.block_until_ready(
        soft_masked_attention(kp32, query, key, value, mask, None))
    ref_nk = reference_soft_masked_attention(params, query, key, value, mask,
                                             None, num_heads)
    assert jnp.allclose(out_nk, ref_nk, atol=2e-3, rtol=2e-3)

    print("KERNEL_OK")
</pallas_src>

<mosaic_0001>
module attributes {stable_mosaic.version = 11 : i64} {
  func.func @_smha_kernel(%arg0: i32, %arg1: memref<8x1x1xf32, #tpu.memory_space<vmem>>, %arg2: memref<16x32xf32, #tpu.memory_space<vmem>>, %arg3: memref<32x32xf32, #tpu.memory_space<vmem>>, %arg4: memref<32x32xf32, #tpu.memory_space<vmem>>, %arg5: memref<2x8x16xf32, #tpu.memory_space<vmem>>, %arg6: memref<2x1x16xi32, #tpu.memory_space<vmem>>, %arg7: memref<32x32xf32, #tpu.memory_space<vmem>>, %arg8: memref<32x32xf32, #tpu.memory_space<vmem>>, %arg9: memref<32x32xf32, #tpu.memory_space<vmem>>, %arg10: memref<8x4x32xf32, #tpu.memory_space<vmem>>, %arg11: memref<1x32xf32, #tpu.memory_space<vmem>>, %arg12: memref<1x32xf32, #tpu.memory_space<vmem>>, %arg13: memref<1x32xf32, #tpu.memory_space<vmem>>, %arg14: memref<1x32xf32, #tpu.memory_space<vmem>>, %arg15: memref<16x32xf32, #tpu.memory_space<vmem>>) attributes {dimension_semantics = [#tpu.dimension_semantics<parallel>], iteration_bounds = array<i64: 1>, scalar_prefetch = 0 : i64, scratch_operands = 0 : i64, tpu.core_type = #tpu.core_type<tc>, window_params = [{pipeline_mode = #tpu.pipeline_mode<synchronous>, transform_indices = @transform_0, window_bounds = array<i64: 8, 1, 1>}, {transform_indices = @transform_1, window_bounds = array<i64: 16, 32>}, {transform_indices = @transform_2, window_bounds = array<i64: 32, 32>}, {transform_indices = @transform_3, window_bounds = array<i64: 32, 32>}, {transform_indices = @transform_4, window_bounds = array<i64: 2, 8, 16>}, {transform_indices = @transform_5, window_bounds = array<i64: 2, 1, 16>}, {pipeline_mode = #tpu.pipeline_mode<synchronous>, transform_indices = @transform_6, window_bounds = array<i64: 32, 32>}, {pipeline_mode = #tpu.pipeline_mode<synchronous>, transform_indices = @transform_7, window_bounds = array<i64: 32, 32>}, {pipeline_mode = #tpu.pipeline_mode<synchronous>, transform_indices = @transform_8, window_bounds = array<i64: 32, 32>}, {pipeline_mode = #tpu.pipeline_mode<synchronous>, transform_indices = @transform_9, window_bounds = array<i64: 8, 4, 32>}, {pipeline_mode = #tpu.pipeline_mode<synchronous>, transform_indices = @transform_10, window_bounds = array<i64: 1, 32>}, {pipeline_mode = #tpu.pipeline_mode<synchronous>, transform_indices = @transform_11, window_bounds = array<i64: 1, 32>}, {pipeline_mode = #tpu.pipeline_mode<synchronous>, transform_indices = @transform_12, window_bounds = array<i64: 1, 32>}, {pipeline_mode = #tpu.pipeline_mode<synchronous>, transform_indices = @transform_13, window_bounds = array<i64: 1, 32>}, {transform_indices = @transform_14, window_bounds = array<i64: 16, 32>}]} {
    %c0 = arith.constant 0 : index
    %c0_0 = arith.constant 0 : index
    %0 = vector.load %arg2[%c0, %c0_0] : memref<16x32xf32, #tpu.memory_space<vmem>>, vector<16x32xf32>
    %c0_1 = arith.constant 0 : index
    %c0_2 = arith.constant 0 : index
    %1 = vector.load %arg3[%c0_1, %c0_2] : memref<32x32xf32, #tpu.memory_space<vmem>>, vector<32x32xf32>
    %c0_3 = arith.constant 0 : index
    %c0_4 = arith.constant 0 : index
    %2 = vector.load %arg4[%c0_3, %c0_4] : memref<32x32xf32, #tpu.memory_space<vmem>>, vector<32x32xf32>
    %c0_5 = arith.constant 0 : index
    %c0_6 = arith.constant 0 : index
    %3 = vector.load %arg7[%c0_5, %c0_6] : memref<32x32xf32, #tpu.memory_space<vmem>>, vector<32x32xf32>
    %cst = arith.constant dense<0.000000e+00> : vector<16x32xf32>
    %4 = tpu.matmul %0, %3, %cst {dimension_numbers = #tpu.dot_dimension_numbers<[1], [0], [0], [1], [0, 0, 1, 1], [], []>} : vector<16x32xf32>, vector<32x32xf32>, vector<16x32xf32> -> vector<16x32xf32>
    %c0_7 = arith.constant 0 : index
    %c0_8 = arith.constant 0 : index
    %5 = vector.load %arg11[%c0_7, %c0_8] : memref<1x32xf32, #tpu.memory_space<vmem>>, vector<1x32xf32>
    %6 = vector.broadcast %5 : vector<1x32xf32> to vector<16x32xf32>
    %7 = arith.addf %4, %6 : vector<16x32xf32>
    %c0_9 = arith.constant 0 : index
    %c0_10 = arith.constant 0 : index
    %8 = vector.load %arg8[%c0_9, %c0_10] : memref<32x32xf32, #tpu.memory_space<vmem>>, vector<32x32xf32>
    %cst_11 = arith.constant dense<0.000000e+00> : vector<32x32xf32>
    %9 = tpu.matmul %1, %8, %cst_11 {dimension_numbers = #tpu.dot_dimension_numbers<[1], [0], [0], [1], [0, 0, 1, 1], [], []>} : vector<32x32xf32>, vector<32x32xf32>, vector<32x32xf32> -> vector<32x32xf32>
    %c0_12 = arith.constant 0 : index
    %c0_13 = arith.constant 0 : index
    %10 = vector.load %arg12[%c0_12, %c0_13] : memref<1x32xf32, #tpu.memory_space<vmem>>, vector<1x32xf32>
    %11 = vector.broadcast %10 : vector<1x32xf32> to vector<32x32xf32>
    %12 = arith.addf %9, %11 : vector<32x32xf32>
    %c0_14 = arith.constant 0 : index
    %c0_15 = arith.constant 0 : index
    %13 = vector.load %arg9[%c0_14, %c0_15] : memref<32x32xf32, #tpu.memory_space<vmem>>, vector<32x32xf32>
    %cst_16 = arith.constant dense<0.000000e+00> : vector<32x32xf32>
    %14 = tpu.matmul %2, %13, %cst_16 {dimension_numbers = #tpu.dot_dimension_numbers<[1], [0], [0], [1], [0, 0, 1, 1], [], []>} : vector<32x32xf32>, vector<32x32xf32>, vector<32x32xf32> -> vector<32x32xf32>
    %c0_17 = arith.constant 0 : index
    %c0_18 = arith.constant 0 : index
    %15 = vector.load %arg13[%c0_17, %c0_18] : memref<1x32xf32, #tpu.memory_space<vmem>>, vector<1x32xf32>
    %16 = vector.broadcast %15 : vector<1x32xf32> to vector<32x32xf32>
    %17 = arith.addf %14, %16 : vector<32x32xf32>
    %18 = vector.extract_strided_slice %7 {offsets = [0, 0], sizes = [16, 4], strides = [1, 1]} : vector<16x32xf32> to vector<16x4xf32>
    %19 = vector.extract_strided_slice %7 {offsets = [0, 4], sizes = [16, 4], strides = [1, 1]} : vector<16x32xf32> to vector<16x4xf32>
    %20 = vector.extract_strided_slice %7 {offsets = [0, 8], sizes = [16, 4], strides = [1, 1]} : vector<16x32xf32> to vector<16x4xf32>
    %21 = vector.extract_strided_slice %7 {offsets = [0, 12], sizes = [16, 4], strides = [1, 1]} : vector<16x32xf32> to vector<16x4xf32>
    %22 = vector.extract_strided_slice %7 {offsets = [0, 16], sizes = [16, 4], strides = [1, 1]} : vector<16x32xf32> to vector<16x4xf32>
    %23 = vector.extract_strided_slice %7 {offsets = [0, 20], sizes = [16, 4], strides = [1, 1]} : vector<16x32xf32> to vector<16x4xf32>
    %24 = vector.extract_strided_slice %7 {offsets = [0, 24], sizes = [16, 4], strides = [1, 1]} : vector<16x32xf32> to vector<16x4xf32>
    %25 = vector.extract_strided_slice %7 {offsets = [0, 28], sizes = [16, 4], strides = [1, 1]} : vector<16x32xf32> to vector<16x4xf32>
    %26 = vector.shape_cast %18 : vector<16x4xf32> to vector<1x16x4xf32>
    %27 = vector.shape_cast %19 : vector<16x4xf32> to vector<1x16x4xf32>
    %28 = vector.shape_cast %20 : vector<16x4xf32> to vector<1x16x4xf32>
    %29 = vector.shape_cast %21 : vector<16x4xf32> to vector<1x16x4xf32>
    %30 = vector.shape_cast %22 : vector<16x4xf32> to vector<1x16x4xf32>
    %31 = vector.shape_cast %23 : vector<16x4xf32> to vector<1x16x4xf32>
    %32 = vector.shape_cast %24 : vector<16x4xf32> to vector<1x16x4xf32>
    %33 = vector.shape_cast %25 : vector<16x4xf32> to vector<1x16x4xf32>
    %34 = tpu.concatenate %26, %27, %28, %29, %30, %31, %32, %33 in 0 : vector<1x16x4xf32>, vector<1x16x4xf32>, vector<1x16x4xf32>, vector<1x16x4xf32>, vector<1x16x4xf32>, vector<1x16x4xf32>, vector<1x16x4xf32>, vector<1x16x4xf32> -> vector<8x16x4xf32>
    %35 = vector.extract_strided_slice %12 {offsets = [0, 0], sizes = [32, 4], strides = [1, 1]} : vector<32x32xf32> to vector<32x4xf32>
    %36 = vector.extract_strided_slice %12 {offsets = [0, 4], sizes = [32, 4], strides = [1, 1]} : vector<32x32xf32> to vector<32x4xf32>
    %37 = vector.extract_strided_slice %12 {offsets = [0, 8], sizes = [32, 4], strides = [1, 1]} : vector<32x32xf32> to vector<32x4xf32>
    %38 = vector.extract_strided_slice %12 {offsets = [0, 12], sizes = [32, 4], strides = [1, 1]} : vector<32x32xf32> to vector<32x4xf32>
    %39 = vector.extract_strided_slice %12 {offsets = [0, 16], sizes = [32, 4], strides = [1, 1]} : vector<32x32xf32> to vector<32x4xf32>
    %40 = vector.extract_strided_slice %12 {offsets = [0, 20], sizes = [32, 4], strides = [1, 1]} : vector<32x32xf32> to vector<32x4xf32>
    %41 = vector.extract_strided_slice %12 {offsets = [0, 24], sizes = [32, 4], strides = [1, 1]} : vector<32x32xf32> to vector<32x4xf32>
    %42 = vector.extract_strided_slice %12 {offsets = [0, 28], sizes = [32, 4], strides = [1, 1]} : vector<32x32xf32> to vector<32x4xf32>
    %43 = vector.shape_cast %35 : vector<32x4xf32> to vector<1x32x4xf32>
    %44 = vector.shape_cast %36 : vector<32x4xf32> to vector<1x32x4xf32>
    %45 = vector.shape_cast %37 : vector<32x4xf32> to vector<1x32x4xf32>
    %46 = vector.shape_cast %38 : vector<32x4xf32> to vector<1x32x4xf32>
    %47 = vector.shape_cast %39 : vector<32x4xf32> to vector<1x32x4xf32>
    %48 = vector.shape_cast %40 : vector<32x4xf32> to vector<1x32x4xf32>
    %49 = vector.shape_cast %41 : vector<32x4xf32> to vector<1x32x4xf32>
    %50 = vector.shape_cast %42 : vector<32x4xf32> to vector<1x32x4xf32>
    %51 = tpu.concatenate %43, %44, %45, %46, %47, %48, %49, %50 in 0 : vector<1x32x4xf32>, vector<1x32x4xf32>, vector<1x32x4xf32>, vector<1x32x4xf32>, vector<1x32x4xf32>, vector<1x32x4xf32>, vector<1x32x4xf32>, vector<1x32x4xf32> -> vector<8x32x4xf32>
    %52 = vector.extract_strided_slice %17 {offsets = [0, 0], sizes = [32, 4], strides = [1, 1]} : vector<32x32xf32> to vector<32x4xf32>
    %53 = vector.extract_strided_slice %17 {offsets = [0, 4], sizes = [32, 4], strides = [1, 1]} : vector<32x32xf32> to vector<32x4xf32>
    %54 = vector.extract_strided_slice %17 {offsets = [0, 8], sizes = [32, 4], strides = [1, 1]} : vector<32x32xf32> to vector<32x4xf32>
    %55 = vector.extract_strided_slice %17 {offsets = [0, 12], sizes = [32, 4], strides = [1, 1]} : vector<32x32xf32> to vector<32x4xf32>
    %56 = vector.extract_strided_slice %17 {offsets = [0, 16], sizes = [32, 4], strides = [1, 1]} : vector<32x32xf32> to vector<32x4xf32>
    %57 = vector.extract_strided_slice %17 {offsets = [0, 20], sizes = [32, 4], strides = [1, 1]} : vector<32x32xf32> to vector<32x4xf32>
    %58 = vector.extract_strided_slice %17 {offsets = [0, 24], sizes = [32, 4], strides = [1, 1]} : vector<32x32xf32> to vector<32x4xf32>
    %59 = vector.extract_strided_slice %17 {offsets = [0, 28], sizes = [32, 4], strides = [1, 1]} : vector<32x32xf32> to vector<32x4xf32>
    %60 = vector.shape_cast %52 : vector<32x4xf32> to vector<1x32x4xf32>
    %61 = vector.shape_cast %53 : vector<32x4xf32> to vector<1x32x4xf32>
    %62 = vector.shape_cast %54 : vector<32x4xf32> to vector<1x32x4xf32>
    %63 = vector.shape_cast %55 : vector<32x4xf32> to vector<1x32x4xf32>
    %64 = vector.shape_cast %56 : vector<32x4xf32> to vector<1x32x4xf32>
    %65 = vector.shape_cast %57 : vector<32x4xf32> to vector<1x32x4xf32>
    %66 = vector.shape_cast %58 : vector<32x4xf32> to vector<1x32x4xf32>
    %67 = vector.shape_cast %59 : vector<32x4xf32> to vector<1x32x4xf32>
    %68 = tpu.concatenate %60, %61, %62, %63, %64, %65, %66, %67 in 0 : vector<1x32x4xf32>, vector<1x32x4xf32>, vector<1x32x4xf32>, vector<1x32x4xf32>, vector<1x32x4xf32>, vector<1x32x4xf32>, vector<1x32x4xf32>, vector<1x32x4xf32> -> vector<8x32x4xf32>
    %c0_19 = arith.constant 0 : index
    %c0_20 = arith.constant 0 : index
    %c0_21 = arith.constant 0 : index
    %69 = vector.load %arg5[%c0_19, %c0_20, %c0_21] : memref<2x8x16xf32, #tpu.memory_space<vmem>>, vector<2x8x16xf32>
    %c0_22 = arith.constant 0 : index
    %c0_23 = arith.constant 0 : index
    %c0_24 = arith.constant 0 : index
    %70 = vector.load %arg1[%c0_22, %c0_23, %c0_24] : memref<8x1x1xf32, #tpu.memory_space<vmem>>, vector<8x1x1xf32>
    %c0_25 = arith.constant 0 : index
    %c0_26 = arith.constant 0 : index
    %c0_27 = arith.constant 0 : index
    %71 = vector.load %arg10[%c0_25, %c0_26, %c0_27] : memref<8x4x32xf32, #tpu.memory_space<vmem>>, vector<8x4x32xf32>
    %c0_28 = arith.constant 0 : index
    %c0_29 = arith.constant 0 : index
    %72 = vector.load %arg14[%c0_28, %c0_29] : memref<1x32xf32, #tpu.memory_space<vmem>>, vector<1x32xf32>
    %c0_30 = arith.constant 0 : index
    %c0_31 = arith.constant 0 : index
    %c0_32 = arith.constant 0 : index
    %73 = vector.load %arg6[%c0_30, %c0_31, %c0_32] : memref<2x1x16xi32, #tpu.memory_space<vmem>>, vector<2x1x16xi32>
    %c0_i32 = arith.constant 0 : i32
    %74 = vector.broadcast %c0_i32 : i32 to vector<2x1x16xi32>
    %75 = arith.cmpi ne, %73, %74 : vector<2x1x16xi32>
    %cst_33 = arith.constant -1.000000e+30 : f32
    %cst_34 = arith.constant 0.000000e+00 : f32
    %76 = vector.broadcast %cst_33 : f32 to vector<2x1x16xf32>
    %77 = vector.broadcast %cst_34 : f32 to vector<2x1x16xf32>
    %78 = arith.select %75, %76, %77 : vector<2x1x16xi1>, vector<2x1x16xf32>
    %79 = vector.extract_strided_slice %34 {offsets = [0, 0, 0], sizes = [8, 8, 4], strides = [1, 1, 1]} : vector<8x16x4xf32> to vector<8x8x4xf32>
    %80 = vector.extract_strided_slice %51 {offsets = [0, 0, 0], sizes = [8, 16, 4], strides = [1, 1, 1]} : vector<8x32x4xf32> to vector<8x16x4xf32>
    %81 = vector.extract_strided_slice %68 {offsets = [0, 0, 0], sizes = [8, 16, 4], strides = [1, 1, 1]} : vector<8x32x4xf32> to vector<8x16x4xf32>
    "tpu.trace_start"() <{level = 10 : i32, message = "htd,hsd->hts"}> : () -> ()
    %cst_35 = arith.constant dense<0.000000e+00> : vector<8x8x16xf32>
    %82 = tpu.matmul %79, %80, %cst_35 {dimension_numbers = #tpu.dot_dimension_numbers<[2], [2], [1], [1], [0, 0, 0, 1, 1, 1], [0], [0]>} : vector<8x8x4xf32>, vector<8x16x4xf32>, vector<8x8x16xf32> -> vector<8x8x16xf32>
    "tpu.trace_stop"() : () -> ()
    %83 = vector.extract_strided_slice %69 {offsets = [0, 0, 0], sizes = [1, 8, 16], strides = [1, 1, 1]} : vector<2x8x16xf32> to vector<1x8x16xf32>
    %84 = vector.shape_cast %83 : vector<1x8x16xf32> to vector<8x16xf32>
    %85 = vector.shape_cast %84 : vector<8x16xf32> to vector<1x8x16xf32>
    %86 = vector.broadcast %85 : vector<1x8x16xf32> to vector<8x8x16xf32>
    %87 = vector.broadcast %70 : vector<8x1x1xf32> to vector<8x8x16xf32>
    %88 = arith.mulf %86, %87 : vector<8x8x16xf32>
    %89 = vector.extract_strided_slice %78 {offsets = [0, 0, 0], sizes = [1, 1, 16], strides = [1, 1, 1]} : vector<2x1x16xf32> to vector<1x1x16xf32>
    %90 = vector.shape_cast %89 : vector<1x1x16xf32> to vector<1x16xf32>
    %91 = vector.shape_cast %90 : vector<1x16xf32> to vector<1x1x16xf32>
    %92 = vector.broadcast %91 : vector<1x1x16xf32> to vector<8x8x16xf32>
    %93 = arith.addf %88, %92 : vector<8x8x16xf32>
    %94 = arith.addf %82, %93 : vector<8x8x16xf32>
    %cst_36 = arith.constant dense<0xFF800000> : vector<8x8xf32>
    %95 = vector.multi_reduction <maximumf>, %94, %cst_36 [2] : vector<8x8x16xf32> to vector<8x8xf32>
    %96 = vector.shape_cast %95 : vector<8x8xf32> to vector<8x8x1xf32>
    %97 = vector.broadcast %96 : vector<8x8x1xf32> to vector<8x8x16xf32>
    %98 = arith.subf %94, %97 : vector<8x8x16xf32>
    %99 = math.exp %98 : vector<8x8x16xf32>
    %cst_37 = arith.constant dense<0.000000e+00> : vector<8x8xf32>
    %100 = vector.multi_reduction <add>, %99, %cst_37 [2] : vector<8x8x16xf32> to vector<8x8xf32>
    %101 = vector.shape_cast %100 : vector<8x8xf32> to vector<8x8x1xf32>
    %102 = tpu.reciprocal %101 {approx = true} : vector<8x8x1xf32> -> vector<8x8x1xf32>
    %103 = vector.broadcast %102 : vector<8x8x1xf32> to vector<8x8x16xf32>
    %104 = arith.mulf %99, %103 : vector<8x8x16xf32>
    "tpu.trace_start"() <{level = 10 : i32, message = "hts,hsd->htd"}> : () -> ()
    %cst_38 = arith.constant dense<0.000000e+00> : vector<8x8x4xf32>
    %105 = tpu.matmul %104, %81, %cst_38 {dimension_numbers = #tpu.dot_dimension_numbers<[2], [1], [1], [2], [0, 0, 0, 1, 1, 2], [0], [0]>} : vector<8x8x16xf32>, vector<8x16x4xf32>, vector<8x8x4xf32> -> vector<8x8x4xf32>
    "tpu.trace_stop"() : () -> ()
    "tpu.trace_start"() <{level = 10 : i32, message = "htd,hde->hte"}> : () -> ()
    %cst_39 = arith.constant dense<0.000000e+00> : vector<8x8x32xf32>
    %106 = tpu.matmul %105, %71, %cst_39 {dimension_numbers = #tpu.dot_dimension_numbers<[2], [1], [1], [2], [0, 0, 0, 1, 1, 2], [0], [0]>} : vector<8x8x4xf32>, vector<8x4x32xf32>, vector<8x8x32xf32> -> vector<8x8x32xf32>
    "tpu.trace_stop"() : () -> ()
    %cst_40 = arith.constant dense<0.000000e+00> : vector<8x32xf32>
    %107 = vector.multi_reduction <add>, %106, %cst_40 [0] : vector<8x8x32xf32> to vector<8x32xf32>
    %108 = vector.broadcast %72 : vector<1x32xf32> to vector<8x32xf32>
    %109 = arith.addf %107, %108 : vector<8x32xf32>
    %110 = vector.extract_strided_slice %34 {offsets = [0, 8, 0], sizes = [8, 8, 4], strides = [1, 1, 1]} : vector<8x16x4xf32> to vector<8x8x4xf32>
    %111 = vector.extract_strided_slice %51 {offsets = [0, 16, 0], sizes = [8, 16, 4], strides = [1, 1, 1]} : vector<8x32x4xf32> to vector<8x16x4xf32>
    %112 = vector.extract_strided_slice %68 {offsets = [0, 16, 0], sizes = [8, 16, 4], strides = [1, 1, 1]} : vector<8x32x4xf32> to vector<8x16x4xf32>
    "tpu.trace_start"() <{level = 10 : i32, message = "htd,hsd->hts"}> : () -> ()
    %cst_41 = arith.constant dense<0.000000e+00> : vector<8x8x16xf32>
    %113 = tpu.matmul %110, %111, %cst_41 {dimension_numbers = #tpu.dot_dimension_numbers<[2], [2], [1], [1], [0, 0, 0, 1, 1, 1], [0], [0]>} : vector<8x8x4xf32>, vector<8x16x4xf32>, vector<8x8x16xf32> -> vector<8x8x16xf32>
    "tpu.trace_stop"() : () -> ()
    %114 = vector.extract_strided_slice %69 {offsets = [1, 0, 0], sizes = [1, 8, 16], strides = [1, 1, 1]} : vector<2x8x16xf32> to vector<1x8x16xf32>
    %115 = vector.shape_cast %114 : vector<1x8x16xf32> to vector<8x16xf32>
    %116 = vector.shape_cast %115 : vector<8x16xf32> to vector<1x8x16xf32>
    %117 = vector.broadcast %116 : vector<1x8x16xf32> to vector<8x8x16xf32>
    %118 = vector.broadcast %70 : vector<8x1x1xf32> to vector<8x8x16xf32>
    %119 = arith.mulf %117, %118 : vector<8x8x16xf32>
    %120 = vector.extract_strided_slice %78 {offsets = [1, 0, 0], sizes = [1, 1, 16], strides = [1, 1, 1]} : vector<2x1x16xf32> to vector<1x1x16xf32>
    %121 = vector.shape_cast %120 : vector<1x1x16xf32> to vector<1x16xf32>
    %122 = vector.shape_cast %121 : vector<1x16xf32> to vector<1x1x16xf32>
    %123 = vector.broadcast %122 : vector<1x1x16xf32> to vector<8x8x16xf32>
    %124 = arith.addf %119, %123 : vector<8x8x16xf32>
    %125 = arith.addf %113, %124 : vector<8x8x16xf32>
    %cst_42 = arith.constant dense<0xFF800000> : vector<8x8xf32>
    %126 = vector.multi_reduction <maximumf>, %125, %cst_42 [2] : vector<8x8x16xf32> to vector<8x8xf32>
    %127 = vector.shape_cast %126 : vector<8x8xf32> to vector<8x8x1xf32>
    %128 = vector.broadcast %127 : vector<8x8x1xf32> to vector<8x8x16xf32>
    %129 = arith.subf %125, %128 : vector<8x8x16xf32>
    %130 = math.exp %129 : vector<8x8x16xf32>
    %cst_43 = arith.constant dense<0.000000e+00> : vector<8x8xf32>
    %131 = vector.multi_reduction <add>, %130, %cst_43 [2] : vector<8x8x16xf32> to vector<8x8xf32>
    %132 = vector.shape_cast %131 : vector<8x8xf32> to vector<8x8x1xf32>
    %133 = tpu.reciprocal %132 {approx = true} : vector<8x8x1xf32> -> vector<8x8x1xf32>
    %134 = vector.broadcast %133 : vector<8x8x1xf32> to vector<8x8x16xf32>
    %135 = arith.mulf %130, %134 : vector<8x8x16xf32>
    "tpu.trace_start"() <{level = 10 : i32, message = "hts,hsd->htd"}> : () -> ()
    %cst_44 = arith.constant dense<0.000000e+00> : vector<8x8x4xf32>
    %136 = tpu.matmul %135, %112, %cst_44 {dimension_numbers = #tpu.dot_dimension_numbers<[2], [1], [1], [2], [0, 0, 0, 1, 1, 2], [0], [0]>} : vector<8x8x16xf32>, vector<8x16x4xf32>, vector<8x8x4xf32> -> vector<8x8x4xf32>
    "tpu.trace_stop"() : () -> ()
    "tpu.trace_start"() <{level = 10 : i32, message = "htd,hde->hte"}> : () -> ()
    %cst_45 = arith.constant dense<0.000000e+00> : vector<8x8x32xf32>
    %137 = tpu.matmul %136, %71, %cst_45 {dimension_numbers = #tpu.dot_dimension_numbers<[2], [1], [1], [2], [0, 0, 0, 1, 1, 2], [0], [0]>} : vector<8x8x4xf32>, vector<8x4x32xf32>, vector<8x8x32xf32> -> vector<8x8x32xf32>
    "tpu.trace_stop"() : () -> ()
    %cst_46 = arith.constant dense<0.000000e+00> : vector<8x32xf32>
    %138 = vector.multi_reduction <add>, %137, %cst_46 [0] : vector<8x8x32xf32> to vector<8x32xf32>
    %139 = vector.broadcast %72 : vector<1x32xf32> to vector<8x32xf32>
    %140 = arith.addf %138, %139 : vector<8x32xf32>
    %141 = tpu.concatenate %109, %140 in 0 : vector<8x32xf32>, vector<8x32xf32> -> vector<16x32xf32>
    %c0_47 = arith.constant 0 : index
    %c0_48 = arith.constant 0 : index
    %142 = vector.load %arg15[%c0_47, %c0_48] : memref<16x32xf32, #tpu.memory_space<vmem>>, vector<16x32xf32>
    tpu.vector_store %arg15[%c0_47, %c0_48], %141 {strides = array<i32>} : memref<16x32xf32, #tpu.memory_space<vmem>>, vector<16x32xf32>,
    return
  }
  func.func @transform_0(%arg0: i32) -> (i32, i32, i32) {
    %c0_i32 = arith.constant 0 : i32
    %c0_i32_0 = arith.constant 0 : i32
    %c0_i32_1 = arith.constant 0 : i32
    %c0_i32_2 = arith.constant 0 : i32
    return %c0_i32, %c0_i32_0, %c0_i32_1 : i32, i32, i32
  }
  func.func @transform_1(%arg0: i32) -> (i32, i32) {
    %c0_i32 = arith.constant 0 : i32
    %c0_i32_0 = arith.constant 0 : i32
    return %arg0, %c0_i32 : i32, i32
  }
  func.func @transform_2(%arg0: i32) -> (i32, i32) {
    %c0_i32 = arith.constant 0 : i32
    %c0_i32_0 = arith.constant 0 : i32
    return %arg0, %c0_i32 : i32, i32
  }
  func.func @transform_3(%arg0: i32) -> (i32, i32) {
    %c0_i32 = arith.constant 0 : i32
    %c0_i32_0 = arith.constant 0 : i32
    return %arg0, %c0_i32 : i32, i32
  }
  func.func @transform_4(%arg0: i32) -> (i32, i32, i32) {
    %c0_i32 = arith.constant 0 : i32
    %c0_i32_0 = arith.constant 0 : i32
    %c0_i32_1 = arith.constant 0 : i32
    return %arg0, %c0_i32, %c0_i32_0 : i32, i32, i32
  }
  func.func @transform_5(%arg0: i32) -> (i32, i32, i32) {
    %c0_i32 = arith.constant 0 : i32
    %c0_i32_0 = arith.constant 0 : i32
    %c0_i32_1 = arith.constant 0 : i32
    return %arg0, %c0_i32, %c0_i32_0 : i32, i32, i32
  }
  func.func @transform_6(%arg0: i32) -> (i32, i32) {
    %c0_i32 = arith.constant 0 : i32
    %c0_i32_0 = arith.constant 0 : i32
    %c0_i32_1 = arith.constant 0 : i32
    return %c0_i32, %c0_i32_0 : i32, i32
  }
  func.func @transform_7(%arg0: i32) -> (i32, i32) {
    %c0_i32 = arith.constant 0 : i32
    %c0_i32_0 = arith.constant 0 : i32
    %c0_i32_1 = arith.constant 0 : i32
    return %c0_i32, %c0_i32_0 : i32, i32
  }
  func.func @transform_8(%arg0: i32) -> (i32, i32) {
    %c0_i32 = arith.constant 0 : i32
    %c0_i32_0 = arith.constant 0 : i32
    %c0_i32_1 = arith.constant 0 : i32
    return %c0_i32, %c0_i32_0 : i32, i32
  }
  func.func @transform_9(%arg0: i32) -> (i32, i32, i32) {
    %c0_i32 = arith.constant 0 : i32
    %c0_i32_0 = arith.constant 0 : i32
    %c0_i32_1 = arith.constant 0 : i32
    %c0_i32_2 = arith.constant 0 : i32
    return %c0_i32, %c0_i32_0, %c0_i32_1 : i32, i32, i32
  }
  func.func @transform_10(%arg0: i32) -> (i32, i32) {
    %c0_i32 = arith.constant 0 : i32
    %c0_i32_0 = arith.constant 0 : i32
    %c0_i32_1 = arith.constant 0 : i32
    return %c0_i32, %c0_i32_0 : i32, i32
  }
  func.func @transform_11(%arg0: i32) -> (i32, i32) {
    %c0_i32 = arith.constant 0 : i32
    %c0_i32_0 = arith.constant 0 : i32
    %c0_i32_1 = arith.constant 0 : i32
    return %c0_i32, %c0_i32_0 : i32, i32
  }
  func.func @transform_12(%arg0: i32) -> (i32, i32) {
    %c0_i32 = arith.constant 0 : i32
    %c0_i32_0 = arith.constant 0 : i32
    %c0_i32_1 = arith.constant 0 : i32
    return %c0_i32, %c0_i32_0 : i32, i32
  }
  func.func @transform_13(%arg0: i32) -> (i32, i32) {
    %c0_i32 = arith.constant 0 : i32
    %c0_i32_0 = arith.constant 0 : i32
    %c0_i32_1 = arith.constant 0 : i32
    return %c0_i32, %c0_i32_0 : i32, i32
  }
  func.func @transform_14(%arg0: i32) -> (i32, i32) {
    %c0_i32 = arith.constant 0 : i32
    %c0_i32_0 = arith.constant 0 : i32
    return %arg0, %c0_i32 : i32, i32
  }
}

</mosaic_0001>

<llo_original>
// kernel: tpu_custom_call.1
$region0: #{tpu_custom_call.1}
  #allocation0 [shape = 'u32[]', space=smem, size = 0x4, offset = 0x4, fixed_abs, tag = 'smem constant byte address 0x4 - core index']
  #allocation1 [shape = 'u32[144,128]{1,0:T(1,128)}', space=vmem, size = 0x12000, scoped, tag = 'internal scratch']
  %s0 = inlined_call_operand.vmem [shape: f32[8,1,1], index: 0, kind: input, shape index: {}]
  %s1 = inlined_call_operand.hbm [shape: f32[16,32], index: 1, kind: input, shape index: {}]
  %s2 = inlined_call_operand.hbm [shape: f32[32,32], index: 2, kind: input, shape index: {}]
  %s3 = inlined_call_operand.hbm [shape: f32[32,32], index: 3, kind: input, shape index: {}]
  %s4 = inlined_call_operand.vmem [shape: f32[2,8,16], index: 4, kind: input, shape index: {}]
  %s5 = inlined_call_operand.vmem [shape: s32[2,1,16], index: 5, kind: input, shape index: {}]
  %s6 = inlined_call_operand.hbm [shape: f32[32,32], index: 6, kind: input, shape index: {}]
  %s7 = inlined_call_operand.hbm [shape: f32[32,32], index: 7, kind: input, shape index: {}]
  %s8 = inlined_call_operand.hbm [shape: f32[32,32], index: 8, kind: input, shape index: {}]
  %s9 = inlined_call_operand.hbm [shape: f32[8,4,32], index: 9, kind: input, shape index: {}]
  %s10 = inlined_call_operand.vmem [shape: f32[1,32], index: 10, kind: input, shape index: {}]
  %s11 = inlined_call_operand.vmem [shape: f32[1,32], index: 11, kind: input, shape index: {}]
  %s12 = inlined_call_operand.vmem [shape: f32[1,32], index: 12, kind: input, shape index: {}]
  %s13 = inlined_call_operand.vmem [shape: f32[1,32], index: 13, kind: input, shape index: {}]
  %s14 = inlined_call_operand.hbm [shape: f32[16,32], index: 14, kind: output, shape index: {}]
  %s15 = sld [smem:[#allocation0]]
  $region94: #{tpu_custom_call.1} parent=0
    _
  %s17 = ssub.s32 1, %s15
  %s18 = scalar_select 0, %s17, %s15
  $region1: #{tpu_custom_call.1} parent=0
    #allocation2 [shape = 'u8[8192]{0}', space=vmem, size = 0x2000, scoped, tag = 'input window, operand 1, single buffered']
    #allocation3 [shape = 's32[1]{0}', space=sflag, size = 0x4, scoped, tag = 'scoped memory for tpu_custom_call.1']
    #allocation4 [shape = 's32[1]{0}', space=sflag, size = 0x4, scoped, tag = 'scoped memory for tpu_custom_call.1']
    #allocation5 [shape = 'u8[16384]{0}', space=vmem, size = 0x4000, scoped, tag = 'input window, operand 2, single buffered']
    #allocation6 [shape = 's32[1]{0}', space=sflag, size = 0x4, scoped, tag = 'scoped memory for tpu_custom_call.1']
    #allocation7 [shape = 'u8[16384]{0}', space=vmem, size = 0x4000, scoped, tag = 'input window, operand 3, single buffered']
    #allocation8 [shape = 'u8[16384]{0}', space=vmem, size = 0x4000, scoped, tag = 'input window, operand 6, single buffered']
    #allocation9 [shape = 's32[1]{0}', space=sflag, size = 0x4, scoped, tag = 'scoped memory for tpu_custom_call.1']
    #allocation10 [shape = 'u8[16384]{0}', space=vmem, size = 0x4000, scoped, tag = 'input window, operand 7, single buffered']
    #allocation11 [shape = 'u8[16384]{0}', space=vmem, size = 0x4000, scoped, tag = 'input window, operand 8, single buffered']
    #allocation12 [shape = 's32[1]{0}', space=sflag, size = 0x4, scoped, tag = 'scoped memory for tpu_custom_call.1']
    #allocation13 [shape = 'u8[16384]{0}', space=vmem, size = 0x4000, scoped, tag = 'input window, operand 9, single buffered']
    #allocation14 [shape = 'u8[8192]{0}', space=vmem, size = 0x2000, scoped, tag = 'output window, operand 0, single buffered']
    %19 = vsyncpa [#allocation3], 0
    %20 = vsyncpa [#allocation6], 0
    %21 = vsyncpa [#allocation9], 0
    %22 = vsyncpa [#allocation12], 0
    %23 = vsyncpa [#allocation4], 0
    // Predicated region
    $region2: #{tpu_custom_call.1} parent=1 // pred_check
      _
    $region3: #{tpu_custom_call.1} parent=1 // pred_check_branch
      %25 = sbr.rel (0) target = $region5
    $region4: #{tpu_custom_call.1} parent=1 // pred_region
      _
    $region5: #{tpu_custom_call.1} parent=1 // pred_fallthru
      _
    // Predicated region
    $region6: #{tpu_custom_call.1} parent=1 // pred_check
      _
    $region7: #{tpu_custom_call.1} parent=1 // pred_check_branch
      %27 = sbr.rel (0) target = $region9
    $region8: #{tpu_custom_call.1} parent=1 // pred_region
      %s29 = ssub.s32 256, 256
      %30 = vsyncadd [#allocation3], %s29
      %s31 = sshll.u32 [#allocation2], 4
      %s32 = int_to_ptr.vmem [resolvable:$true] %s31
      %37 = dma.hbm_to_vmem [thread:$0]  %s1, 256, %s32, [#allocation3], 128, 128, 8
    $region9: #{tpu_custom_call.1} parent=1 // pred_fallthru
      _
    // Predicated region
    $region10: #{tpu_custom_call.1} parent=1 // pred_check
      _
    $region11: #{tpu_custom_call.1} parent=1 // pred_check_branch
      %39 = sbr.rel (0) target = $region13
    $region12: #{tpu_custom_call.1} parent=1 // pred_region
      %s41 = ssub.s32 512, 512
      %42 = vsyncadd [#allocation6], %s41
      %s43 = sshll.u32 [#allocation5], 4
      %s44 = int_to_ptr.vmem [resolvable:$true] %s43
      %49 = dma.hbm_to_vmem [thread:$0]  %s2, 512, %s44, [#allocation6], 128, 128, 8
    $region13: #{tpu_custom_call.1} parent=1 // pred_fallthru
      _
    // Predicated region
    $region14: #{tpu_custom_call.1} parent=1 // pred_check
      _
    $region15: #{tpu_custom_call.1} parent=1 // pred_check_branch
      %51 = sbr.rel (0) target = $region17
    $region16: #{tpu_custom_call.1} parent=1 // pred_region
      %s53 = ssub.s32 512, 512
      %54 = vsyncadd [#allocation6], %s53
      %s55 = sshll.u32 [#allocation7], 4
      %s56 = int_to_ptr.vmem [resolvable:$true] %s55
      %61 = dma.hbm_to_vmem [thread:$0]  %s3, 512, %s56, [#allocation6], 128, 128, 8
    $region17: #{tpu_custom_call.1} parent=1 // pred_fallthru
      _
    // Predicated region
    $region18: #{tpu_custom_call.1} parent=1 // pred_check
      _
    $region19: #{tpu_custom_call.1} parent=1 // pred_check_branch
      %63 = sbr.rel (0) target = $region21
    $region20: #{tpu_custom_call.1} parent=1 // pred_region
      _
    $region21: #{tpu_custom_call.1} parent=1 // pred_fallthru
      _
    // Predicated region
    $region22: #{tpu_custom_call.1} parent=1 // pred_check
      _
    $region23: #{tpu_custom_call.1} parent=1 // pred_check_branch
      %65 = sbr.rel (0) target = $region25
    $region24: #{tpu_custom_call.1} parent=1 // pred_region
      _
    $region25: #{tpu_custom_call.1} parent=1 // pred_fallthru
      _
    // Predicated region
    $region26: #{tpu_custom_call.1} parent=1 // pred_check
      _
    $region27: #{tpu_custom_call.1} parent=1 // pred_check_branch
      %67 = sbr.rel (0) target = $region29
    $region28: #{tpu_custom_call.1} parent=1 // pred_region
      %s69 = ssub.s32 512, 512
      %70 = vsyncadd [#allocation9], %s69
      %s71 = sshll.u32 [#allocation8], 4
      %s72 = int_to_ptr.vmem [resolvable:$true] %s71
      %77 = dma.hbm_to_vmem [thread:$0]  %s6, 512, %s72, [#allocation9], 128, 128, 8
    $region29: #{tpu_custom_call.1} parent=1 // pred_fallthru
      _
    // Predicated region
    $region30: #{tpu_custom_call.1} parent=1 // pred_check
      _
    $region31: #{tpu_custom_call.1} parent=1 // pred_check_branch
      %79 = sbr.rel (0) target = $region33
    $region32: #{tpu_custom_call.1} parent=1 // pred_region
      %s81 = ssub.s32 512, 512
      %82 = vsyncadd [#allocation9], %s81
      %s83 = sshll.u32 [#allocation10], 4
      %s84 = int_to_ptr.vmem [resolvable:$true] %s83
      %89 = dma.hbm_to_vmem [thread:$0]  %s7, 512, %s84, [#allocation9], 128, 128, 8
    $region33: #{tpu_custom_call.1} parent=1 // pred_fallthru
      _
    // Predicated region
    $region34: #{tpu_custom_call.1} parent=1 // pred_check
      _
    $region35: #{tpu_custom_call.1} parent=1 // pred_check_branch
      %91 = sbr.rel (0) target = $region37
    $region36: #{tpu_custom_call.1} parent=1 // pred_region
      %s93 = ssub.s32 512, 512
      %94 = vsyncadd [#allocation12], %s93
      %s95 = sshll.u32 [#allocation11], 4
      %s96 = int_to_ptr.vmem [resolvable:$true] %s95
      %101 = dma.hbm_to_vmem [thread:$0]  %s8, 512, %s96, [#allocation12], 128, 128, 8
    $region37: #{tpu_custom_call.1} parent=1 // pred_fallthru
      _
    // Predicated region
    $region38: #{tpu_custom_call.1} parent=1 // pred_check
      _
    $region39: #{tpu_custom_call.1} parent=1 // pred_check_branch
      %103 = sbr.rel (0) target = $region41
    $region40: #{tpu_custom_call.1} parent=1 // pred_region
      %s105 = ssub.s32 512, 512
      %106 = vsyncadd [#allocation12], %s105
      %s107 = sshll.u32 [#allocation13], 4
      %s108 = int_to_ptr.vmem [resolvable:$true] %s107
      %113 = dma.hbm_to_vmem [thread:$0]  %s9, 512, %s108, [#allocation12], 64, 64, 4
    $region41: #{tpu_custom_call.1} parent=1 // pred_fallthru
      _
    // Predicated region
    $region42: #{tpu_custom_call.1} parent=1 // pred_check
      _
    $region43: #{tpu_custom_call.1} parent=1 // pred_check_branch
      %115 = sbr.rel (0) target = $region45
    $region44: #{tpu_custom_call.1} parent=1 // pred_region
      _
    $region45: #{tpu_custom_call.1} parent=1 // pred_fallthru
      _
    // Predicated region
    $region46: #{tpu_custom_call.1} parent=1 // pred_check
      _
    $region47: #{tpu_custom_call.1} parent=1 // pred_check_branch
      %117 = sbr.rel (0) target = $region49
    $region48: #{tpu_custom_call.1} parent=1 // pred_region
      _
    $region49: #{tpu_custom_call.1} parent=1 // pred_fallthru
      _
    // Predicated region
    $region50: #{tpu_custom_call.1} parent=1 // pred_check
      _
    $region51: #{tpu_custom_call.1} parent=1 // pred_check_branch
      %119 = sbr.rel (0) target = $region53
    $region52: #{tpu_custom_call.1} parent=1 // pred_region
      _
    $region53: #{tpu_custom_call.1} parent=1 // pred_fallthru
      _
    // Predicated region
    $region54: #{tpu_custom_call.1} parent=1 // pred_check
      _
    $region55: #{tpu_custom_call.1} parent=1 // pred_check_branch
      %121 = sbr.rel (0) target = $region57
    $region56: #{tpu_custom_call.1} parent=1 // pred_region
      _
    $region57: #{tpu_custom_call.1} parent=1 // pred_fallthru
      _
    // Predicated region
    $region58: #{tpu_custom_call.1} parent=1 // pred_check
      _
    $region59: #{tpu_custom_call.1} parent=1 // pred_check_branch
      %123 = sbr.rel (0) target = $region61
    $region60: #{tpu_custom_call.1} parent=1 // pred_region
      %124 = dma.done [#allocation3], 256
    $region61: #{tpu_custom_call.1} parent=1 // pred_fallthru
      _
    // Predicated region
    $region62: #{tpu_custom_call.1} parent=1 // pred_check
      _
    $region63: #{tpu_custom_call.1} parent=1 // pred_check_branch
      %126 = sbr.rel (0) target = $region65
    $region64: #{tpu_custom_call.1} parent=1 // pred_region
      %127 = dma.done [#allocation6], 512
    $region65: #{tpu_custom_call.1} parent=1 // pred_fallthru
      _
    // Predicated region
    $region66: #{tpu_custom_call.1} parent=1 // pred_check
      _
    $region67: #{tpu_custom_call.1} parent=1 // pred_check_branch
      %129 = sbr.rel (0) target = $region69
    $region68: #{tpu_custom_call.1} parent=1 // pred_region
      %130 = dma.done [#allocation6], 512
    $region69: #{tpu_custom_call.1} parent=1 // pred_fallthru
      _
    // Predicated region
    $region70: #{tpu_custom_call.1} parent=1 // pred_check
      _
    $region71: #{tpu_custom_call.1} parent=1 // pred_check_branch
      %132 = sbr.rel (0) target = $region73
    $region72: #{tpu_custom_call.1} parent=1 // pred_region
      %133 = dma.done [#allocation9], 512
    $region73: #{tpu_custom_call.1} parent=1 // pred_fallthru
      _
    // Predicated region
    $region74: #{tpu_custom_call.1} parent=1 // pred_check
      _
    $region75: #{tpu_custom_call.1} parent=1 // pred_check_branch
      %135 = sbr.rel (0) target = $region77
    $region76: #{tpu_custom_call.1} parent=1 // pred_region
      %136 = dma.done [#allocation9], 512
    $region77: #{tpu_custom_call.1} parent=1 // pred_fallthru
      _
    // Predicated region
    $region78: #{tpu_custom_call.1} parent=1 // pred_check
      _
    $region79: #{tpu_custom_call.1} parent=1 // pred_check_branch
      %138 = sbr.rel (0) target = $region81
    $region80: #{tpu_custom_call.1} parent=1 // pred_region
      %139 = dma.done [#allocation12], 512
    $region81: #{tpu_custom_call.1} parent=1 // pred_fallthru
      _
    // Predicated region
    $region82: #{tpu_custom_call.1} parent=1 // pred_check
      _
    $region83: #{tpu_custom_call.1} parent=1 // pred_check_branch
      %141 = sbr.rel (0) target = $region85
    $region84: #{tpu_custom_call.1} parent=1 // pred_region
      %142 = dma.done [#allocation12], 512
    $region85: #{tpu_custom_call.1} parent=1 // pred_fallthru
      _
    %v143 = vld [vmem:[#allocation2] sm:$0xff]
    %v144 = vld [vmem:[#allocation2 + $0x8] sm:$0xff]
    %v145 = vld [vmem:[#allocation5] sm:$0xff]
    %v146 = vld [vmem:[#allocation5 + $0x8] sm:$0xff]
    %v147 = vld [vmem:[#allocation5 + $0x10] sm:$0xff]
    %v148 = vld [vmem:[#allocation5 + $0x18] sm:$0xff]
    %v149 = vld [vmem:[#allocation7] sm:$0xff]
    %v150 = vld [vmem:[#allocation7 + $0x8] sm:$0xff]
    %v151 = vld [vmem:[#allocation7 + $0x10] sm:$0xff]
    %v152 = vld [vmem:[#allocation7 + $0x18] sm:$0xff]
    %v153 = vld [vmem:[#allocation8] sm:$0xff]
    %v154 = vld [vmem:[#allocation8 + $0x8] sm:$0xff]
    %v155 = vld [vmem:[#allocation8 + $0x10] sm:$0xff]
    %v156 = vld [vmem:[#allocation8 + $0x18] sm:$0xff]
    %v157 = vld [vmem:[%s10] sm:$0x1]
    %v159 = vlaneseq
    %v160 = vshrl.u32 %v159, 7
    %v161 = vsub.s32 0, %v160
    %v162 = vrot.slane %v157, %v161
    %vm164 = vcmask 261120
    %v166 = vsel %vm164, %v143, 0
    %v169 = vsel %vm164, %v144, 0
    %171 = vmatprep.subr.mxu0 0.0
    %172 = vmatpush1.msra.mxu0 0.0
    %173 = vmatprep.subr.mxu0 0.0
    %174 = vmatpush1.msra.mxu0 0.0
    %175 = vmatprep.subr.mxu0 0.0
    %176 = vmatpush1.msra.mxu0 0.0
    %177 = vmatprep.subr.mxu0 0.0
    %178 = vmatpush1.msra.mxu0 0.0
    %179 = vmatprep.subr.mxu0 0.0
    %180 = vmatpush1.msra.mxu0 0.0
    %181 = vmatprep.subr.mxu0 0.0
    %182 = vmatpush1.msra.mxu0 0.0
    %183 = vmatprep.subr.mxu0 0.0
    %184 = vmatpush1.msra.mxu0 0.0
    %185 = vmatprep.subr.mxu0 0.0
    %186 = vmatpush1.msra.mxu0 0.0
    %187 = vmatprep.subr.mxu0 0.0
    %188 = vmatpush1.msra.mxu0 0.0
    %189 = vmatprep.subr.mxu0 0.0
    %190 = vmatpush1.msra.mxu0 0.0
    %191 = vmatprep.subr.mxu0 0.0
    %192 = vmatpush1.msra.mxu0 0.0
    %193 = vmatprep.subr.mxu0 0.0
    %194 = vmatpush1.msra.mxu0 0.0
    %195 = vmatprep.subr.mxu0 0.0
    %196 = vmatpush1.msra.mxu0 %v156
    %197 = vmatprep.subr.mxu0 0.0
    %198 = vmatpush1.msra.mxu0 %v155
    %199 = vmatprep.subr.mxu0 0.0
    %200 = vmatpush1.msra.mxu0 %v154
    %201 = vmatprep.subr.mxu0 0.0
    %202 = vmatpush1.msra.mxu0 %v153
    %203 = vmatprep.subr.mxu0 0.0
    %204 = vmatpush2.msra.mxu0 0.0
    %205 = vmatprep.subr.mxu0 0.0
    %206 = vmatpush2.msra.mxu0 0.0
    %207 = vmatprep.subr.mxu0 0.0
    %208 = vmatpush2.msra.mxu0 0.0
    %209 = vmatprep.subr.mxu0 0.0
    %210 = vmatpush2.msra.mxu0 0.0
    %211 = vmatprep.subr.mxu0 0.0
    %212 = vmatpush2.msra.mxu0 0.0
    %213 = vmatprep.subr.mxu0 0.0
    %214 = vmatpush2.msra.mxu0 0.0
    %215 = vmatprep.subr.mxu0 0.0
    %216 = vmatpush2.msra.mxu0 0.0
    %217 = vmatprep.subr.mxu0 0.0
    %218 = vmatpush2.msra.mxu0 0.0
    %219 = vmatprep.subr.mxu0 0.0
    %220 = vmatpush2.msra.mxu0 0.0
    %221 = vmatprep.subr.mxu0 0.0
    %222 = vmatpush2.msra.mxu0 0.0
    %223 = vmatprep.subr.mxu0 0.0
    %224 = vmatpush2.msra.mxu0 0.0
    %225 = vmatprep.subr.mxu0 0.0
    %226 = vmatpush2.msra.mxu0 0.0
    %227 = vmatprep.subr.mxu0 0.0
    %228 = vmatpush2.msra.mxu0 0.0
    %229 = vmatprep.subr.mxu0 0.0
    %230 = vmatpush2.msra.mxu0 0.0
    %231 = vmatprep.subr.mxu0 0.0
    %232 = vmatpush2.msra.mxu0 0.0
    %233 = vmatprep.subr.mxu0 0.0
    %234 = vmatpush2.msra.mxu0 0.0
    %235 = vmatprep.mubr.f32.mxu0 0.0
    %236 = vmatmul.mubr.f32.gmra.mxu0 %v166
    %v237 = vpop.f32.mrf.mxu0
    %v238 = vadd.f32 %v162, %v237
    %v239 = vpop.f32.mrf.mxu0
    %240 = vmatprep.mubr.f32.mxu0 0.0
    %241 = vmatmul.mubr.f32.gmra.mxu0 %v169
    %v242 = vpop.f32.mrf.mxu0
    %v243 = vadd.f32 %v162, %v242
    %v244 = vpop.f32.mrf.mxu0
    %245 = vdwg.mxu0
    %v246 = vld [vmem:[#allocation10] sm:$0xff]
    %v247 = vld [vmem:[#allocation10 + $0x8] sm:$0xff]
    %v248 = vld [vmem:[#allocation10 + $0x10] sm:$0xff]
    %v249 = vld [vmem:[#allocation10 + $0x18] sm:$0xff]
    %v250 = vld [vmem:[%s11] sm:$0x1]
    %v252 = vlaneseq
    %v253 = vshrl.u32 %v252, 7
    %v254 = vsub.s32 0, %v253
    %v255 = vrot.slane %v250, %v254
    %v258 = vsel %vm164, %v145, 0
    %v261 = vsel %vm164, %v146, 0
    %v264 = vsel %vm164, %v147, 0
    %v267 = vsel %vm164, %v148, 0
    %269 = vmatprep.subr.mxu0 0.0
    %270 = vmatpush1.msra.mxu0 0.0
    %271 = vmatprep.subr.mxu0 0.0
    %272 = vmatpush1.msra.mxu0 0.0
    %273 = vmatprep.subr.mxu0 0.0
    %274 = vmatpush1.msra.mxu0 0.0
    %275 = vmatprep.subr.mxu0 0.0
    %276 = vmatpush1.msra.mxu0 0.0
    %277 = vmatprep.subr.mxu0 0.0
    %278 = vmatpush1.msra.mxu0 0.0
    %279 = vmatprep.subr.mxu0 0.0
    %280 = vmatpush1.msra.mxu0 0.0
    %281 = vmatprep.subr.mxu0 0.0
    %282 = vmatpush1.msra.mxu0 0.0
    %283 = vmatprep.subr.mxu0 0.0
    %284 = vmatpush1.msra.mxu0 0.0
    %285 = vmatprep.subr.mxu0 0.0
    %286 = vmatpush1.msra.mxu0 0.0
    %287 = vmatprep.subr.mxu0 0.0
    %288 = vmatpush1.msra.mxu0 0.0
    %289 = vmatprep.subr.mxu0 0.0
    %290 = vmatpush1.msra.mxu0 0.0
    %291 = vmatprep.subr.mxu0 0.0
    %292 = vmatpush1.msra.mxu0 0.0
    %293 = vmatprep.subr.mxu0 0.0
    %294 = vmatpush1.msra.mxu0 %v249
    %295 = vmatprep.subr.mxu0 0.0
    %296 = vmatpush1.msra.mxu0 %v248
    %297 = vmatprep.subr.mxu0 0.0
    %298 = vmatpush1.msra.mxu0 %v247
    %299 = vmatprep.subr.mxu0 0.0
    %300 = vmatpush1.msra.mxu0 %v246
    %301 = vmatprep.subr.mxu0 0.0
    %302 = vmatpush2.msra.mxu0 0.0
    %303 = vmatprep.subr.mxu0 0.0
    %304 = vmatpush2.msra.mxu0 0.0
    %305 = vmatprep.subr.mxu0 0.0
    %306 = vmatpush2.msra.mxu0 0.0
    %307 = vmatprep.subr.mxu0 0.0
    %308 = vmatpush2.msra.mxu0 0.0
    %309 = vmatprep.subr.mxu0 0.0
    %310 = vmatpush2.msra.mxu0 0.0
    %311 = vmatprep.subr.mxu0 0.0
    %312 = vmatpush2.msra.mxu0 0.0
    %313 = vmatprep.subr.mxu0 0.0
    %314 = vmatpush2.msra.mxu0 0.0
    %315 = vmatprep.subr.mxu0 0.0
    %316 = vmatpush2.msra.mxu0 0.0
    %317 = vmatprep.subr.mxu0 0.0
    %318 = vmatpush2.msra.mxu0 0.0
    %319 = vmatprep.subr.mxu0 0.0
    %320 = vmatpush2.msra.mxu0 0.0
    %321 = vmatprep.subr.mxu0 0.0
    %322 = vmatpush2.msra.mxu0 0.0
    %323 = vmatprep.subr.mxu0 0.0
    %324 = vmatpush2.msra.mxu0 0.0
    %325 = vmatprep.subr.mxu0 0.0
    %326 = vmatpush2.msra.mxu0 0.0
    %327 = vmatprep.subr.mxu0 0.0
    %328 = vmatpush2.msra.mxu0 0.0
    %329 = vmatprep.subr.mxu0 0.0
    %330 = vmatpush2.msra.mxu0 0.0
    %331 = vmatprep.subr.mxu0 0.0
    %332 = vmatpush2.msra.mxu0 0.0
    %333 = vmatprep.mubr.f32.mxu0 0.0
    %334 = vmatmul.mubr.f32.gmra.mxu0 %v258
    %v335 = vpop.f32.mrf.mxu0
    %v336 = vadd.f32 %v255, %v335
    %v337 = vpop.f32.mrf.mxu0
    %338 = vmatprep.mubr.f32.mxu0 0.0
    %339 = vmatmul.mubr.f32.gmra.mxu0 %v261
    %v340 = vpop.f32.mrf.mxu0
    %v341 = vadd.f32 %v255, %v340
    %v342 = vpop.f32.mrf.mxu0
    %343 = vmatprep.mubr.f32.mxu0 0.0
    %344 = vmatmul.mubr.f32.gmra.mxu0 %v264
    %v345 = vpop.f32.mrf.mxu0
    %v346 = vadd.f32 %v255, %v345
    %v347 = vpop.f32.mrf.mxu0
    %348 = vmatprep.mubr.f32.mxu0 0.0
    %349 = vmatmul.mubr.f32.gmra.mxu0 %v267
    %v350 = vpop.f32.mrf.mxu0
    %v351 = vadd.f32 %v255, %v350
    %v352 = vpop.f32.mrf.mxu0
    %353 = vdwg.mxu0
    %v354 = vld [vmem:[#allocation11] sm:$0xff]
    %v355 = vld [vmem:[#allocation11 + $0x8] sm:$0xff]
    %v356 = vld [vmem:[#allocation11 + $0x10] sm:$0xff]
    %v357 = vld [vmem:[#allocation11 + $0x18] sm:$0xff]
    %v358 = vld [vmem:[%s12] sm:$0x1]
    %v360 = vlaneseq
    %v361 = vshrl.u32 %v360, 7
    %v362 = vsub.s32 0, %v361
    %v363 = vrot.slane %v358, %v362
    %v366 = vsel %vm164, %v149, 0
    %v369 = vsel %vm164, %v150, 0
    %v372 = vsel %vm164, %v151, 0
    %v375 = vsel %vm164, %v152, 0
    %377 = vmatprep.subr.mxu0 0.0
    %378 = vmatpush1.msra.mxu0 0.0
    %379 = vmatprep.subr.mxu0 0.0
    %380 = vmatpush1.msra.mxu0 0.0
    %381 = vmatprep.subr.mxu0 0.0
    %382 = vmatpush1.msra.mxu0 0.0
    %383 = vmatprep.subr.mxu0 0.0
    %384 = vmatpush1.msra.mxu0 0.0
    %385 = vmatprep.subr.mxu0 0.0
    %386 = vmatpush1.msra.mxu0 0.0
    %387 = vmatprep.subr.mxu0 0.0
    %388 = vmatpush1.msra.mxu0 0.0
    %389 = vmatprep.subr.mxu0 0.0
    %390 = vmatpush1.msra.mxu0 0.0
    %391 = vmatprep.subr.mxu0 0.0
    %392 = vmatpush1.msra.mxu0 0.0
    %393 = vmatprep.subr.mxu0 0.0
    %394 = vmatpush1.msra.mxu0 0.0
    %395 = vmatprep.subr.mxu0 0.0
    %396 = vmatpush1.msra.mxu0 0.0
    %397 = vmatprep.subr.mxu0 0.0
    %398 = vmatpush1.msra.mxu0 0.0
    %399 = vmatprep.subr.mxu0 0.0
    %400 = vmatpush1.msra.mxu0 0.0
    %401 = vmatprep.subr.mxu0 0.0
    %402 = vmatpush1.msra.mxu0 %v357
    %403 = vmatprep.subr.mxu0 0.0
    %404 = vmatpush1.msra.mxu0 %v356
    %405 = vmatprep.subr.mxu0 0.0
    %406 = vmatpush1.msra.mxu0 %v355
    %407 = vmatprep.subr.mxu0 0.0
    %408 = vmatpush1.msra.mxu0 %v354
    %409 = vmatprep.subr.mxu0 0.0
    %410 = vmatpush2.msra.mxu0 0.0
    %411 = vmatprep.subr.mxu0 0.0
    %412 = vmatpush2.msra.mxu0 0.0
    %413 = vmatprep.subr.mxu0 0.0
    %414 = vmatpush2.msra.mxu0 0.0
    %415 = vmatprep.subr.mxu0 0.0
    %416 = vmatpush2.msra.mxu0 0.0
    %417 = vmatprep.subr.mxu0 0.0
    %418 = vmatpush2.msra.mxu0 0.0
    %419 = vmatprep.subr.mxu0 0.0
    %420 = vmatpush2.msra.mxu0 0.0
    %421 = vmatprep.subr.mxu0 0.0
    %422 = vmatpush2.msra.mxu0 0.0
    %423 = vmatprep.subr.mxu0 0.0
    %424 = vmatpush2.msra.mxu0 0.0
    %425 = vmatprep.subr.mxu0 0.0
    %426 = vmatpush2.msra.mxu0 0.0
    %427 = vmatprep.subr.mxu0 0.0
    %428 = vmatpush2.msra.mxu0 0.0
    %429 = vmatprep.subr.mxu0 0.0
    %430 = vmatpush2.msra.mxu0 0.0
    %431 = vmatprep.subr.mxu0 0.0
    %432 = vmatpush2.msra.mxu0 0.0
    %433 = vmatprep.subr.mxu0 0.0
    %434 = vmatpush2.msra.mxu0 0.0
    %435 = vmatprep.subr.mxu0 0.0
    %436 = vmatpush2.msra.mxu0 0.0
    %437 = vmatprep.subr.mxu0 0.0
    %438 = vmatpush2.msra.mxu0 0.0
    %439 = vmatprep.subr.mxu0 0.0
    %440 = vmatpush2.msra.mxu0 0.0
    %441 = vmatprep.mubr.f32.mxu0 0.0
    %442 = vmatmul.mubr.f32.gmra.mxu0 %v366
    %v443 = vpop.f32.mrf.mxu0
    %v444 = vadd.f32 %v363, %v443
    %v445 = vpop.f32.mrf.mxu0
    %446 = vmatprep.mubr.f32.mxu0 0.0
    %447 = vmatmul.mubr.f32.gmra.mxu0 %v369
    %v448 = vpop.f32.mrf.mxu0
    %v449 = vadd.f32 %v363, %v448
    %v450 = vpop.f32.mrf.mxu0
    %451 = vmatprep.mubr.f32.mxu0 0.0
    %452 = vmatmul.mubr.f32.gmra.mxu0 %v372
    %v453 = vpop.f32.mrf.mxu0
    %v454 = vadd.f32 %v363, %v453
    %v455 = vpop.f32.mrf.mxu0
    %456 = vmatprep.mubr.f32.mxu0 0.0
    %457 = vmatmul.mubr.f32.gmra.mxu0 %v375
    %v458 = vpop.f32.mrf.mxu0
    %v459 = vadd.f32 %v363, %v458
    %v460 = vpop.f32.mrf.mxu0
    %461 = vdwg.mxu0
    %464 = vrot.lane.b32.xlu0 %v238, 124
    %v465 = vpop.permute.xlu0 %464
    %466 = vrot.lane.b32.xlu0 %v243, 124
    %v467 = vpop.permute.xlu0 %466
    %468 = vrot.lane.b32.xlu0 %v238, 120
    %v469 = vpop.permute.xlu0 %468
    %470 = vrot.lane.b32.xlu0 %v243, 120
    %v471 = vpop.permute.xlu0 %470
    %472 = vrot.lane.b32.xlu0 %v238, 116
    %v473 = vpop.permute.xlu0 %472
    %474 = vrot.lane.b32.xlu0 %v243, 116
    %v475 = vpop.permute.xlu0 %474
    %476 = vrot.lane.b32.xlu0 %v238, 112
    %v477 = vpop.permute.xlu0 %476
    %478 = vrot.lane.b32.xlu0 %v243, 112
    %v479 = vpop.permute.xlu0 %478
    %480 = vrot.lane.b32.xlu0 %v238, 108
    %v481 = vpop.permute.xlu0 %480
    %482 = vrot.lane.b32.xlu0 %v243, 108
    %v483 = vpop.permute.xlu0 %482
    %484 = vrot.lane.b32.xlu0 %v238, 104
    %v485 = vpop.permute.xlu0 %484
    %486 = vrot.lane.b32.xlu0 %v243, 104
    %v487 = vpop.permute.xlu0 %486
    %488 = vrot.lane.b32.xlu0 %v238, 100
    %v489 = vpop.permute.xlu0 %488
    %490 = vrot.lane.b32.xlu0 %v243, 100
    %v491 = vpop.permute.xlu0 %490
    %496 = vrot.lane.b32.xlu0 %v336, 124
    %v497 = vpop.permute.xlu0 %496
    %498 = vrot.lane.b32.xlu0 %v341, 124
    %v499 = vpop.permute.xlu0 %498
    %500 = vrot.lane.b32.xlu0 %v346, 124
    %v501 = vpop.permute.xlu0 %500
    %502 = vrot.lane.b32.xlu0 %v351, 124
    %v503 = vpop.permute.xlu0 %502
    %504 = vrot.lane.b32.xlu0 %v336, 120
    %v505 = vpop.permute.xlu0 %504
    %506 = vrot.lane.b32.xlu0 %v341, 120
    %v507 = vpop.permute.xlu0 %506
    %508 = vrot.lane.b32.xlu0 %v346, 120
    %v509 = vpop.permute.xlu0 %508
    %510 = vrot.lane.b32.xlu0 %v351, 120
    %v511 = vpop.permute.xlu0 %510
    %512 = vrot.lane.b32.xlu0 %v336, 116
    %v513 = vpop.permute.xlu0 %512
    %514 = vrot.lane.b32.xlu0 %v341, 116
    %v515 = vpop.permute.xlu0 %514
    %516 = vrot.lane.b32.xlu0 %v346, 116
    %v517 = vpop.permute.xlu0 %516
    %518 = vrot.lane.b32.xlu0 %v351, 116
    %v519 = vpop.permute.xlu0 %518
    %520 = vrot.lane.b32.xlu0 %v336, 112
    %v521 = vpop.permute.xlu0 %520
    %522 = vrot.lane.b32.xlu0 %v341, 112
    %v523 = vpop.permute.xlu0 %522
    %524 = vrot.lane.b32.xlu0 %v346, 112
    %v525 = vpop.permute.xlu0 %524
    %526 = vrot.lane.b32.xlu0 %v351, 112
    %v527 = vpop.permute.xlu0 %526
    %528 = vrot.lane.b32.xlu0 %v336, 108
    %v529 = vpop.permute.xlu0 %528
    %530 = vrot.lane.b32.xlu0 %v341, 108
    %v531 = vpop.permute.xlu0 %530
    %532 = vrot.lane.b32.xlu0 %v346, 108
    %v533 = vpop.permute.xlu0 %532
    %534 = vrot.lane.b32.xlu0 %v351, 108
    %v535 = vpop.permute.xlu0 %534
    %536 = vrot.lane.b32.xlu0 %v336, 104
    %v537 = vpop.permute.xlu0 %536
    %538 = vrot.lane.b32.xlu0 %v341, 104
    %v539 = vpop.permute.xlu0 %538
    %540 = vrot.lane.b32.xlu0 %v346, 104
    %v541 = vpop.permute.xlu0 %540
    %542 = vrot.lane.b32.xlu0 %v351, 104
    %v543 = vpop.permute.xlu0 %542
    %544 = vrot.lane.b32.xlu0 %v336, 100
    %v545 = vpop.permute.xlu0 %544
    %546 = vrot.lane.b32.xlu0 %v341, 100
    %v547 = vpop.permute.xlu0 %546
    %548 = vrot.lane.b32.xlu0 %v346, 100
    %v549 = vpop.permute.xlu0 %548
    %550 = vrot.lane.b32.xlu0 %v351, 100
    %v551 = vpop.permute.xlu0 %550
    %556 = vrot.lane.b32.xlu0 %v444, 124
    %v557 = vpop.permute.xlu0 %556
    %558 = vrot.lane.b32.xlu0 %v449, 124
    %v559 = vpop.permute.xlu0 %558
    %560 = vrot.lane.b32.xlu0 %v454, 124
    %v561 = vpop.permute.xlu0 %560
    %562 = vrot.lane.b32.xlu0 %v459, 124
    %v563 = vpop.permute.xlu0 %562
    %568 = vrot.lane.b32.xlu0 %v444, 120
    %v569 = vpop.permute.xlu0 %568
    %570 = vrot.lane.b32.xlu0 %v449, 120
    %v571 = vpop.permute.xlu0 %570
    %572 = vrot.lane.b32.xlu0 %v454, 120
    %v573 = vpop.permute.xlu0 %572
    %574 = vrot.lane.b32.xlu0 %v459, 120
    %v575 = vpop.permute.xlu0 %574
    %580 = vrot.lane.b32.xlu0 %v444, 116
    %v581 = vpop.permute.xlu0 %580
    %582 = vrot.lane.b32.xlu0 %v449, 116
    %v583 = vpop.permute.xlu0 %582
    %584 = vrot.lane.b32.xlu0 %v454, 116
    %v585 = vpop.permute.xlu0 %584
    %586 = vrot.lane.b32.xlu0 %v459, 116
    %v587 = vpop.permute.xlu0 %586
    %592 = vrot.lane.b32.xlu0 %v444, 112
    %v593 = vpop.permute.xlu0 %592
    %594 = vrot.lane.b32.xlu0 %v449, 112
    %v595 = vpop.permute.xlu0 %594
    %596 = vrot.lane.b32.xlu0 %v454, 112
    %v597 = vpop.permute.xlu0 %596
    %598 = vrot.lane.b32.xlu0 %v459, 112
    %v599 = vpop.permute.xlu0 %598
    %604 = vrot.lane.b32.xlu0 %v444, 108
    %v605 = vpop.permute.xlu0 %604
    %606 = vrot.lane.b32.xlu0 %v449, 108
    %v607 = vpop.permute.xlu0 %606
    %608 = vrot.lane.b32.xlu0 %v454, 108
    %v609 = vpop.permute.xlu0 %608
    %610 = vrot.lane.b32.xlu0 %v459, 108
    %v611 = vpop.permute.xlu0 %610
    %616 = vrot.lane.b32.xlu0 %v444, 104
    %v617 = vpop.permute.xlu0 %616
    %618 = vrot.lane.b32.xlu0 %v449, 104
    %v619 = vpop.permute.xlu0 %618
    %620 = vrot.lane.b32.xlu0 %v454, 104
    %v621 = vpop.permute.xlu0 %620
    %622 = vrot.lane.b32.xlu0 %v459, 104
    %v623 = vpop.permute.xlu0 %622
    %628 = vrot.lane.b32.xlu0 %v444, 100
    %v629 = vpop.permute.xlu0 %628
    %630 = vrot.lane.b32.xlu0 %v449, 100
    %v631 = vpop.permute.xlu0 %630
    %632 = vrot.lane.b32.xlu0 %v454, 100
    %v633 = vpop.permute.xlu0 %632
    %634 = vrot.lane.b32.xlu0 %v459, 100
    %v635 = vpop.permute.xlu0 %634
    %v640 = vld [vmem:[%s4] sm:$0xff]
    %v641 = vld [vmem:[%s4 + $0x8] sm:$0xff]
    %v642 = vld [vmem:[%s0] sm:$0x1]
    %v643 = vld [vmem:[%s0 + $0x1] sm:$0x1]
    %v644 = vld [vmem:[%s0 + $0x2] sm:$0x1]
    %v645 = vld [vmem:[%s0 + $0x3] sm:$0x1]
    %v646 = vld [vmem:[%s0 + $0x4] sm:$0x1]
    %v647 = vld [vmem:[%s0 + $0x5] sm:$0x1]
    %v648 = vld [vmem:[%s0 + $0x6] sm:$0x1]
    %v649 = vld [vmem:[%s0 + $0x7] sm:$0x1]
    %v650 = vld [vmem:[#allocation13] sm:$0xf]
    %v651 = vld [vmem:[#allocation13 + $0x4] sm:$0xf]
    %v652 = vld [vmem:[#allocation13 + $0x8] sm:$0xf]
    %v653 = vld [vmem:[#allocation13 + $0xc] sm:$0xf]
    %v654 = vld [vmem:[#allocation13 + $0x10] sm:$0xf]
    %v655 = vld [vmem:[#allocation13 + $0x14] sm:$0xf]
    %v656 = vld [vmem:[#allocation13 + $0x18] sm:$0xf]
    %v657 = vld [vmem:[#allocation13 + $0x1c] sm:$0xf]
    %v658 = vld [vmem:[%s13] sm:$0x1]
    %v659 = vld [vmem:[%s5] sm:$0x1]
    %v660 = vld [vmem:[%s5 + $0x1] sm:$0x1]
    %vm661 = vcmp.ne.s32.totalorder %v659, 0
    %vm662 = vcmp.ne.s32.totalorder %v660, 0
    %v663 = vsel %vm661, -1e+30, 0.0
    %v664 = vsel %vm662, -1e+30, 0.0
    %v673 = vlaneseq
    %v674 = vshrl.u32 %v673, 7
    %v675 = vsub.s32 0, %v674
    %v676 = vrot.slane %v642, %v675
    %v677 = vlaneseq
    %v678 = vshrl.u32 %v677, 7
    %v679 = vsub.s32 0, %v678
    %v680 = vrot.slane %v643, %v679
    %v681 = vlaneseq
    %v682 = vshrl.u32 %v681, 7
    %v683 = vsub.s32 0, %v682
    %v684 = vrot.slane %v644, %v683
    %v685 = vlaneseq
    %v686 = vshrl.u32 %v685, 7
    %v687 = vsub.s32 0, %v686
    %v688 = vrot.slane %v645, %v687
    %v689 = vlaneseq
    %v690 = vshrl.u32 %v689, 7
    %v691 = vsub.s32 0, %v690
    %v692 = vrot.slane %v646, %v691
    %v693 = vlaneseq
    %v694 = vshrl.u32 %v693, 7
    %v695 = vsub.s32 0, %v694
    %v696 = vrot.slane %v647, %v695
    %v697 = vlaneseq
    %v698 = vshrl.u32 %v697, 7
    %v699 = vsub.s32 0, %v698
    %v700 = vrot.slane %v648, %v699
    %v701 = vlaneseq
    %v702 = vshrl.u32 %v701, 7
    %v703 = vsub.s32 0, %v702
    %v704 = vrot.slane %v649, %v703
    %705 = vset.pattern.permute.xlu0 0
    %706 = vperm.xlu0 %705, %v676
    %v707 = vpop.permute.xlu0 %706
    %709 = vset.pattern.permute.xlu0 0
    %710 = vperm.xlu0 %709, %v680
    %v711 = vpop.permute.xlu0 %710
    %713 = vset.pattern.permute.xlu0 0
    %714 = vperm.xlu0 %713, %v684
    %v715 = vpop.permute.xlu0 %714
    %717 = vset.pattern.permute.xlu0 0
    %718 = vperm.xlu0 %717, %v688
    %v719 = vpop.permute.xlu0 %718
    %721 = vset.pattern.permute.xlu0 0
    %722 = vperm.xlu0 %721, %v692
    %v723 = vpop.permute.xlu0 %722
    %725 = vset.pattern.permute.xlu0 0
    %726 = vperm.xlu0 %725, %v696
    %v727 = vpop.permute.xlu0 %726
    %729 = vset.pattern.permute.xlu0 0
    %730 = vperm.xlu0 %729, %v700
    %v731 = vpop.permute.xlu0 %730
    %733 = vset.pattern.permute.xlu0 0
    %734 = vperm.xlu0 %733, %v704
    %v735 = vpop.permute.xlu0 %734
    %v737 = vmul.f32 %v640, %v707
    %v738 = vmul.f32 %v640, %v711
    %v739 = vmul.f32 %v640, %v715
    %v740 = vmul.f32 %v640, %v719
    %v741 = vmul.f32 %v640, %v723
    %v742 = vmul.f32 %v640, %v727
    %v743 = vmul.f32 %v640, %v731
    %v744 = vmul.f32 %v640, %v735
    %v746 = vlaneseq
    %v747 = vshrl.u32 %v746, 7
    %v748 = vsub.s32 0, %v747
    %v749 = vrot.slane %v663, %v748
    %v751 = vadd.f32 %v737, %v749
    %v752 = vadd.f32 %v738, %v749
    %v753 = vadd.f32 %v739, %v749
    %v754 = vadd.f32 %v740, %v749
    %v755 = vadd.f32 %v741, %v749
    %v756 = vadd.f32 %v742, %v749
    %v757 = vadd.f32 %v743, %v749
    %v758 = vadd.f32 %v744, %v749
    %vm759 = vcmask 31744
    %v760 = vsel %vm759, %v238, 0
    %v762 = vsel %vm759, %v336, 0
    %v764 = vsel %vm759, %v341, 0
    %766 = vmatprep.subr.mxu0 0.0
    %767 = vmatpush1.xpose.msra.mxu0 0.0
    %768 = vmatprep.subr.mxu0 0.0
    %769 = vmatpush1.xpose.msra.mxu0 0.0
    %770 = vmatprep.subr.mxu0 0.0
    %771 = vmatpush1.xpose.msra.mxu0 0.0
    %772 = vmatprep.subr.mxu0 0.0
    %773 = vmatpush1.xpose.msra.mxu0 0.0
    %774 = vmatprep.subr.mxu0 0.0
    %775 = vmatpush1.xpose.msra.mxu0 0.0
    %776 = vmatprep.subr.mxu0 0.0
    %777 = vmatpush1.xpose.msra.mxu0 0.0
    %778 = vmatprep.subr.mxu0 0.0
    %779 = vmatpush1.xpose.msra.mxu0 0.0
    %780 = vmatprep.subr.mxu0 0.0
    %781 = vmatpush1.xpose.msra.mxu0 0.0
    %782 = vmatprep.subr.mxu0 0.0
    %783 = vmatpush1.xpose.msra.mxu0 0.0
    %784 = vmatprep.subr.mxu0 0.0
    %785 = vmatpush1.xpose.msra.mxu0 0.0
    %786 = vmatprep.subr.mxu0 0.0
    %787 = vmatpush1.xpose.msra.mxu0 0.0
    %788 = vmatprep.subr.mxu0 0.0
    %789 = vmatpush1.xpose.msra.mxu0 0.0
    %790 = vmatprep.subr.mxu0 0.0
    %791 = vmatpush1.xpose.msra.mxu0 0.0
    %792 = vmatprep.subr.mxu0 0.0
    %793 = vmatpush1.xpose.msra.mxu0 0.0
    %794 = vmatprep.subr.mxu0 0.0
    %795 = vmatpush1.xpose.msra.mxu0 %v764
    %796 = vmatprep.subr.mxu0 0.0
    %797 = vmatpush1.xpose.msra.mxu0 %v762
    %798 = vmatprep.subr.mxu0 0.0
    %799 = vmatpush2.xpose.msra.mxu0 0.0
    %800 = vmatprep.subr.mxu0 0.0
    %801 = vmatpush2.xpose.msra.mxu0 0.0
    %802 = vmatprep.subr.mxu0 0.0
    %803 = vmatpush2.xpose.msra.mxu0 0.0
    %804 = vmatprep.subr.mxu0 0.0
    %805 = vmatpush2.xpose.msra.mxu0 0.0
    %806 = vmatprep.subr.mxu0 0.0
    %807 = vmatpush2.xpose.msra.mxu0 0.0
    %808 = vmatprep.subr.mxu0 0.0
    %809 = vmatpush2.xpose.msra.mxu0 0.0
    %810 = vmatprep.subr.mxu0 0.0
    %811 = vmatpush2.xpose.msra.mxu0 0.0
    %812 = vmatprep.subr.mxu0 0.0
    %813 = vmatpush2.xpose.msra.mxu0 0.0
    %814 = vmatprep.subr.mxu0 0.0
    %815 = vmatpush2.xpose.msra.mxu0 0.0
    %816 = vmatprep.subr.mxu0 0.0
    %817 = vmatpush2.xpose.msra.mxu0 0.0
    %818 = vmatprep.subr.mxu0 0.0
    %819 = vmatpush2.xpose.msra.mxu0 0.0
    %820 = vmatprep.subr.mxu0 0.0
    %821 = vmatpush2.xpose.msra.mxu0 0.0
    %822 = vmatprep.subr.mxu0 0.0
    %823 = vmatpush2.xpose.msra.mxu0 0.0
    %824 = vmatprep.subr.mxu0 0.0
    %825 = vmatpush2.xpose.msra.mxu0 0.0
    %826 = vmatprep.subr.mxu0 0.0
    %827 = vmatpush2.xpose.msra.mxu0 0.0
    %828 = vmatprep.subr.mxu0 0.0
    %829 = vmatpush2.xpose.msra.mxu0 0.0
    %830 = vmatprep.mubr.f32.mxu0 0.0
    %831 = vmatmul.mubr.f32.gmra.mxu0 %v760
    %v832 = vpop.f32.mrf.mxu0
    %v833 = vadd.f32 %v751, %v832
    %v834 = vpop.f32.mrf.mxu0
    %835 = vdwg.mxu0
    %v836 = vsel %vm759, %v465, 0
    %v838 = vsel %vm759, %v497, 0
    %v840 = vsel %vm759, %v499, 0
    %842 = vmatprep.subr.mxu0 0.0
    %843 = vmatpush1.xpose.msra.mxu0 0.0
    %844 = vmatprep.subr.mxu0 0.0
    %845 = vmatpush1.xpose.msra.mxu0 0.0
    %846 = vmatprep.subr.mxu0 0.0
    %847 = vmatpush1.xpose.msra.mxu0 0.0
    %848 = vmatprep.subr.mxu0 0.0
    %849 = vmatpush1.xpose.msra.mxu0 0.0
    %850 = vmatprep.subr.mxu0 0.0
    %851 = vmatpush1.xpose.msra.mxu0 0.0
    %852 = vmatprep.subr.mxu0 0.0
    %853 = vmatpush1.xpose.msra.mxu0 0.0
    %854 = vmatprep.subr.mxu0 0.0
    %855 = vmatpush1.xpose.msra.mxu0 0.0
    %856 = vmatprep.subr.mxu0 0.0
    %857 = vmatpush1.xpose.msra.mxu0 0.0
    %858 = vmatprep.subr.mxu0 0.0
    %859 = vmatpush1.xpose.msra.mxu0 0.0
    %860 = vmatprep.subr.mxu0 0.0
    %861 = vmatpush1.xpose.msra.mxu0 0.0
    %862 = vmatprep.subr.mxu0 0.0
    %863 = vmatpush1.xpose.msra.mxu0 0.0
    %864 = vmatprep.subr.mxu0 0.0
    %865 = vmatpush1.xpose.msra.mxu0 0.0
    %866 = vmatprep.subr.mxu0 0.0
    %867 = vmatpush1.xpose.msra.mxu0 0.0
    %868 = vmatprep.subr.mxu0 0.0
    %869 = vmatpush1.xpose.msra.mxu0 0.0
    %870 = vmatprep.subr.mxu0 0.0
    %871 = vmatpush1.xpose.msra.mxu0 %v840
    %872 = vmatprep.subr.mxu0 0.0
    %873 = vmatpush1.xpose.msra.mxu0 %v838
    %874 = vmatprep.subr.mxu0 0.0
    %875 = vmatpush2.xpose.msra.mxu0 0.0
    %876 = vmatprep.subr.mxu0 0.0
    %877 = vmatpush2.xpose.msra.mxu0 0.0
    %878 = vmatprep.subr.mxu0 0.0
    %879 = vmatpush2.xpose.msra.mxu0 0.0
    %880 = vmatprep.subr.mxu0 0.0
    %881 = vmatpush2.xpose.msra.mxu0 0.0
    %882 = vmatprep.subr.mxu0 0.0
    %883 = vmatpush2.xpose.msra.mxu0 0.0
    %884 = vmatprep.subr.mxu0 0.0
    %885 = vmatpush2.xpose.msra.mxu0 0.0
    %886 = vmatprep.subr.mxu0 0.0
    %887 = vmatpush2.xpose.msra.mxu0 0.0
    %888 = vmatprep.subr.mxu0 0.0
    %889 = vmatpush2.xpose.msra.mxu0 0.0
    %890 = vmatprep.subr.mxu0 0.0
    %891 = vmatpush2.xpose.msra.mxu0 0.0
    %892 = vmatprep.subr.mxu0 0.0
    %893 = vmatpush2.xpose.msra.mxu0 0.0
    %894 = vmatprep.subr.mxu0 0.0
    %895 = vmatpush2.xpose.msra.mxu0 0.0
    %896 = vmatprep.subr.mxu0 0.0
    %897 = vmatpush2.xpose.msra.mxu0 0.0
    %898 = vmatprep.subr.mxu0 0.0
    %899 = vmatpush2.xpose.msra.mxu0 0.0
    %900 = vmatprep.subr.mxu0 0.0
    %901 = vmatpush2.xpose.msra.mxu0 0.0
    %902 = vmatprep.subr.mxu0 0.0
    %903 = vmatpush2.xpose.msra.mxu0 0.0
    %904 = vmatprep.subr.mxu0 0.0
    %905 = vmatpush2.xpose.msra.mxu0 0.0
    %906 = vmatprep.mubr.f32.mxu0 0.0
    %907 = vmatmul.mubr.f32.gmra.mxu0 %v836
    %v908 = vpop.f32.mrf.mxu0
    %v909 = vadd.f32 %v752, %v908
    %v910 = vpop.f32.mrf.mxu0
    %911 = vdwg.mxu0
    %v912 = vsel %vm759, %v469, 0
    %v914 = vsel %vm759, %v505, 0
    %v916 = vsel %vm759, %v507, 0
    %918 = vmatprep.subr.mxu0 0.0
    %919 = vmatpush1.xpose.msra.mxu0 0.0
    %920 = vmatprep.subr.mxu0 0.0
    %921 = vmatpush1.xpose.msra.mxu0 0.0
    %922 = vmatprep.subr.mxu0 0.0
    %923 = vmatpush1.xpose.msra.mxu0 0.0
    %924 = vmatprep.subr.mxu0 0.0
    %925 = vmatpush1.xpose.msra.mxu0 0.0
    %926 = vmatprep.subr.mxu0 0.0
    %927 = vmatpush1.xpose.msra.mxu0 0.0
    %928 = vmatprep.subr.mxu0 0.0
    %929 = vmatpush1.xpose.msra.mxu0 0.0
    %930 = vmatprep.subr.mxu0 0.0
    %931 = vmatpush1.xpose.msra.mxu0 0.0
    %932 = vmatprep.subr.mxu0 0.0
    %933 = vmatpush1.xpose.msra.mxu0 0.0
    %934 = vmatprep.subr.mxu0 0.0
    %935 = vmatpush1.xpose.msra.mxu0 0.0
    %936 = vmatprep.subr.mxu0 0.0
    %937 = vmatpush1.xpose.msra.mxu0 0.0
    %938 = vmatprep.subr.mxu0 0.0
    %939 = vmatpush1.xpose.msra.mxu0 0.0
    %940 = vmatprep.subr.mxu0 0.0
    %941 = vmatpush1.xpose.msra.mxu0 0.0
    %942 = vmatprep.subr.mxu0 0.0
    %943 = vmatpush1.xpose.msra.mxu0 0.0
    %944 = vmatprep.subr.mxu0 0.0
    %945 = vmatpush1.xpose.msra.mxu0 0.0
    %946 = vmatprep.subr.mxu0 0.0
    %947 = vmatpush1.xpose.msra.mxu0 %v916
    %948 = vmatprep.subr.mxu0 0.0
    %949 = vmatpush1.xpose.msra.mxu0 %v914
    %950 = vmatprep.subr.mxu0 0.0
    %951 = vmatpush2.xpose.msra.mxu0 0.0
    %952 = vmatprep.subr.mxu0 0.0
    %953 = vmatpush2.xpose.msra.mxu0 0.0
    %954 = vmatprep.subr.mxu0 0.0
    %955 = vmatpush2.xpose.msra.mxu0 0.0
    %956 = vmatprep.subr.mxu0 0.0
    %957 = vmatpush2.xpose.msra.mxu0 0.0
    %958 = vmatprep.subr.mxu0 0.0
    %959 = vmatpush2.xpose.msra.mxu0 0.0
    %960 = vmatprep.subr.mxu0 0.0
    %961 = vmatpush2.xpose.msra.mxu0 0.0
    %962 = vmatprep.subr.mxu0 0.0
    %963 = vmatpush2.xpose.msra.mxu0 0.0
    %964 = vmatprep.subr.mxu0 0.0
    %965 = vmatpush2.xpose.msra.mxu0 0.0
    %966 = vmatprep.subr.mxu0 0.0
    %967 = vmatpush2.xpose.msra.mxu0 0.0
    %968 = vmatprep.subr.mxu0 0.0
    %969 = vmatpush2.xpose.msra.mxu0 0.0
    %970 = vmatprep.subr.mxu0 0.0
    %971 = vmatpush2.xpose.msra.mxu0 0.0
    %972 = vmatprep.subr.mxu0 0.0
    %973 = vmatpush2.xpose.msra.mxu0 0.0
    %974 = vmatprep.subr.mxu0 0.0
    %975 = vmatpush2.xpose.msra.mxu0 0.0
    %976 = vmatprep.subr.mxu0 0.0
    %977 = vmatpush2.xpose.msra.mxu0 0.0
    %978 = vmatprep.subr.mxu0 0.0
    %979 = vmatpush2.xpose.msra.mxu0 0.0
    %980 = vmatprep.subr.mxu0 0.0
    %981 = vmatpush2.xpose.msra.mxu0 0.0
    %982 = vmatprep.mubr.f32.mxu0 0.0
    %983 = vmatmul.mubr.f32.gmra.mxu0 %v912
    %v984 = vpop.f32.mrf.mxu0
    %v985 = vadd.f32 %v753, %v984
    %v986 = vpop.f32.mrf.mxu0
    %987 = vdwg.mxu0
    %v988 = vsel %vm759, %v473, 0
    %v990 = vsel %vm759, %v513, 0
    %v992 = vsel %vm759, %v515, 0
    %994 = vmatprep.subr.mxu0 0.0
    %995 = vmatpush1.xpose.msra.mxu0 0.0
    %996 = vmatprep.subr.mxu0 0.0
    %997 = vmatpush1.xpose.msra.mxu0 0.0
    %998 = vmatprep.subr.mxu0 0.0
    %999 = vmatpush1.xpose.msra.mxu0 0.0
    %1000 = vmatprep.subr.mxu0 0.0
    %1001 = vmatpush1.xpose.msra.mxu0 0.0
    %1002 = vmatprep.subr.mxu0 0.0
    %1003 = vmatpush1.xpose.msra.mxu0 0.0
    %1004 = vmatprep.subr.mxu0 0.0
    %1005 = vmatpush1.xpose.msra.mxu0 0.0
    %1006 = vmatprep.subr.mxu0 0.0
    %1007 = vmatpush1.xpose.msra.mxu0 0.0
    %1008 = vmatprep.subr.mxu0 0.0
    %1009 = vmatpush1.xpose.msra.mxu0 0.0
    %1010 = vmatprep.subr.mxu0 0.0
    %1011 = vmatpush1.xpose.msra.mxu0 0.0
    %1012 = vmatprep.subr.mxu0 0.0
    %1013 = vmatpush1.xpose.msra.mxu0 0.0
    %1014 = vmatprep.subr.mxu0 0.0
    %1015 = vmatpush1.xpose.msra.mxu0 0.0
    %1016 = vmatprep.subr.mxu0 0.0
    %1017 = vmatpush1.xpose.msra.mxu0 0.0
    %1018 = vmatprep.subr.mxu0 0.0
    %1019 = vmatpush1.xpose.msra.mxu0 0.0
    %1020 = vmatprep.subr.mxu0 0.0
    %1021 = vmatpush1.xpose.msra.mxu0 0.0
    %1022 = vmatprep.subr.mxu0 0.0
    %1023 = vmatpush1.xpose.msra.mxu0 %v992
    %1024 = vmatprep.subr.mxu0 0.0
    %1025 = vmatpush1.xpose.msra.mxu0 %v990
    %1026 = vmatprep.subr.mxu0 0.0
    %1027 = vmatpush2.xpose.msra.mxu0 0.0
    %1028 = vmatprep.subr.mxu0 0.0
    %1029 = vmatpush2.xpose.msra.mxu0 0.0
    %1030 = vmatprep.subr.mxu0 0.0
    %1031 = vmatpush2.xpose.msra.mxu0 0.0
    %1032 = vmatprep.subr.mxu0 0.0
    %1033 = vmatpush2.xpose.msra.mxu0 0.0
    %1034 = vmatprep.subr.mxu0 0.0
    %1035 = vmatpush2.xpose.msra.mxu0 0.0
    %1036 = vmatprep.subr.mxu0 0.0
    %1037 = vmatpush2.xpose.msra.mxu0 0.0
    %1038 = vmatprep.subr.mxu0 0.0
    %1039 = vmatpush2.xpose.msra.mxu0 0.0
    %1040 = vmatprep.subr.mxu0 0.0
    %1041 = vmatpush2.xpose.msra.mxu0 0.0
    %1042 = vmatprep.subr.mxu0 0.0
    %1043 = vmatpush2.xpose.msra.mxu0 0.0
    %1044 = vmatprep.subr.mxu0 0.0
    %1045 = vmatpush2.xpose.msra.mxu0 0.0
    %1046 = vmatprep.subr.mxu0 0.0
    %1047 = vmatpush2.xpose.msra.mxu0 0.0
    %1048 = vmatprep.subr.mxu0 0.0
    %1049 = vmatpush2.xpose.msra.mxu0 0.0
    %1050 = vmatprep.subr.mxu0 0.0
    %1051 = vmatpush2.xpose.msra.mxu0 0.0
    %1052 = vmatprep.subr.mxu0 0.0
    %1053 = vmatpush2.xpose.msra.mxu0 0.0
    %1054 = vmatprep.subr.mxu0 0.0
    %1055 = vmatpush2.xpose.msra.mxu0 0.0
    %1056 = vmatprep.subr.mxu0 0.0
    %1057 = vmatpush2.xpose.msra.mxu0 0.0
    %1058 = vmatprep.mubr.f32.mxu0 0.0
    %1059 = vmatmul.mubr.f32.gmra.mxu0 %v988
    %v1060 = vpop.f32.mrf.mxu0
    %v1061 = vadd.f32 %v754, %v1060
    %v1062 = vpop.f32.mrf.mxu0
    %1063 = vdwg.mxu0
    %v1064 = vsel %vm759, %v477, 0
    %v1066 = vsel %vm759, %v521, 0
    %v1068 = vsel %vm759, %v523, 0
    %1070 = vmatprep.subr.mxu0 0.0
    %1071 = vmatpush1.xpose.msra.mxu0 0.0
    %1072 = vmatprep.subr.mxu0 0.0
    %1073 = vmatpush1.xpose.msra.mxu0 0.0
    %1074 = vmatprep.subr.mxu0 0.0
    %1075 = vmatpush1.xpose.msra.mxu0 0.0
    %1076 = vmatprep.subr.mxu0 0.0
    %1077 = vmatpush1.xpose.msra.mxu0 0.0
    %1078 = vmatprep.subr.mxu0 0.0
    %1079 = vmatpush1.xpose.msra.mxu0 0.0
    %1080 = vmatprep.subr.mxu0 0.0
    %1081 = vmatpush1.xpose.msra.mxu0 0.0
    %1082 = vmatprep.subr.mxu0 0.0
    %1083 = vmatpush1.xpose.msra.mxu0 0.0
    %1084 = vmatprep.subr.mxu0 0.0
    %1085 = vmatpush1.xpose.msra.mxu0 0.0
    %1086 = vmatprep.subr.mxu0 0.0
    %1087 = vmatpush1.xpose.msra.mxu0 0.0
    %1088 = vmatprep.subr.mxu0 0.0
    %1089 = vmatpush1.xpose.msra.mxu0 0.0
    %1090 = vmatprep.subr.mxu0 0.0
    %1091 = vmatpush1.xpose.msra.mxu0 0.0
    %1092 = vmatprep.subr.mxu0 0.0
    %1093 = vmatpush1.xpose.msra.mxu0 0.0
    %1094 = vmatprep.subr.mxu0 0.0
    %1095 = vmatpush1.xpose.msra.mxu0 0.0
    %1096 = vmatprep.subr.mxu0 0.0
    %1097 = vmatpush1.xpose.msra.mxu0 0.0
    %1098 = vmatprep.subr.mxu0 0.0
    %1099 = vmatpush1.xpose.msra.mxu0 %v1068
    %1100 = vmatprep.subr.mxu0 0.0
    %1101 = vmatpush1.xpose.msra.mxu0 %v1066
    %1102 = vmatprep.subr.mxu0 0.0
    %1103 = vmatpush2.xpose.msra.mxu0 0.0
    %1104 = vmatprep.subr.mxu0 0.0
    %1105 = vmatpush2.xpose.msra.mxu0 0.0
    %1106 = vmatprep.subr.mxu0 0.0
    %1107 = vmatpush2.xpose.msra.mxu0 0.0
    %1108 = vmatprep.subr.mxu0 0.0
    %1109 = vmatpush2.xpose.msra.mxu0 0.0
    %1110 = vmatprep.subr.mxu0 0.0
    %1111 = vmatpush2.xpose.msra.mxu0 0.0
    %1112 = vmatprep.subr.mxu0 0.0
    %1113 = vmatpush2.xpose.msra.mxu0 0.0
    %1114 = vmatprep.subr.mxu0 0.0
    %1115 = vmatpush2.xpose.msra.mxu0 0.0
    %1116 = vmatprep.subr.mxu0 0.0
    %1117 = vmatpush2.xpose.msra.mxu0 0.0
    %1118 = vmatprep.subr.mxu0 0.0
    %1119 = vmatpush2.xpose.msra.mxu0 0.0
    %1120 = vmatprep.subr.mxu0 0.0
    %1121 = vmatpush2.xpose.msra.mxu0 0.0
    %1122 = vmatprep.subr.mxu0 0.0
    %1123 = vmatpush2.xpose.msra.mxu0 0.0
    %1124 = vmatprep.subr.mxu0 0.0
    %1125 = vmatpush2.xpose.msra.mxu0 0.0
    %1126 = vmatprep.subr.mxu0 0.0
    %1127 = vmatpush2.xpose.msra.mxu0 0.0
    %1128 = vmatprep.subr.mxu0 0.0
    %1129 = vmatpush2.xpose.msra.mxu0 0.0
    %1130 = vmatprep.subr.mxu0 0.0
    %1131 = vmatpush2.xpose.msra.mxu0 0.0
    %1132 = vmatprep.subr.mxu0 0.0
    %1133 = vmatpush2.xpose.msra.mxu0 0.0
    %1134 = vmatprep.mubr.f32.mxu0 0.0
    %1135 = vmatmul.mubr.f32.gmra.mxu0 %v1064
    %v1136 = vpop.f32.mrf.mxu0
    %v1137 = vadd.f32 %v755, %v1136
    %v1138 = vpop.f32.mrf.mxu0
    %1139 = vdwg.mxu0
    %v1140 = vsel %vm759, %v481, 0
    %v1142 = vsel %vm759, %v529, 0
    %v1144 = vsel %vm759, %v531, 0
    %1146 = vmatprep.subr.mxu0 0.0
    %1147 = vmatpush1.xpose.msra.mxu0 0.0
    %1148 = vmatprep.subr.mxu0 0.0
    %1149 = vmatpush1.xpose.msra.mxu0 0.0
    %1150 = vmatprep.subr.mxu0 0.0
    %1151 = vmatpush1.xpose.msra.mxu0 0.0
    %1152 = vmatprep.subr.mxu0 0.0
    %1153 = vmatpush1.xpose.msra.mxu0 0.0
    %1154 = vmatprep.subr.mxu0 0.0
    %1155 = vmatpush1.xpose.msra.mxu0 0.0
    %1156 = vmatprep.subr.mxu0 0.0
    %1157 = vmatpush1.xpose.msra.mxu0 0.0
    %1158 = vmatprep.subr.mxu0 0.0
    %1159 = vmatpush1.xpose.msra.mxu0 0.0
    %1160 = vmatprep.subr.mxu0 0.0
    %1161 = vmatpush1.xpose.msra.mxu0 0.0
    %1162 = vmatprep.subr.mxu0 0.0
    %1163 = vmatpush1.xpose.msra.mxu0 0.0
    %1164 = vmatprep.subr.mxu0 0.0
    %1165 = vmatpush1.xpose.msra.mxu0 0.0
    %1166 = vmatprep.subr.mxu0 0.0
    %1167 = vmatpush1.xpose.msra.mxu0 0.0
    %1168 = vmatprep.subr.mxu0 0.0
    %1169 = vmatpush1.xpose.msra.mxu0 0.0
    %1170 = vmatprep.subr.mxu0 0.0
    %1171 = vmatpush1.xpose.msra.mxu0 0.0
    %1172 = vmatprep.subr.mxu0 0.0
    %1173 = vmatpush1.xpose.msra.mxu0 0.0
    %1174 = vmatprep.subr.mxu0 0.0
    %1175 = vmatpush1.xpose.msra.mxu0 %v1144
    %1176 = vmatprep.subr.mxu0 0.0
    %1177 = vmatpush1.xpose.msra.mxu0 %v1142
    %1178 = vmatprep.subr.mxu0 0.0
    %1179 = vmatpush2.xpose.msra.mxu0 0.0
    %1180 = vmatprep.subr.mxu0 0.0
    %1181 = vmatpush2.xpose.msra.mxu0 0.0
    %1182 = vmatprep.subr.mxu0 0.0
    %1183 = vmatpush2.xpose.msra.mxu0 0.0
    %1184 = vmatprep.subr.mxu0 0.0
    %1185 = vmatpush2.xpose.msra.mxu0 0.0
    %1186 = vmatprep.subr.mxu0 0.0
    %1187 = vmatpush2.xpose.msra.mxu0 0.0
    %1188 = vmatprep.subr.mxu0 0.0
    %1189 = vmatpush2.xpose.msra.mxu0 0.0
    %1190 = vmatprep.subr.mxu0 0.0
    %1191 = vmatpush2.xpose.msra.mxu0 0.0
    %1192 = vmatprep.subr.mxu0 0.0
    %1193 = vmatpush2.xpose.msra.mxu0 0.0
    %1194 = vmatprep.subr.mxu0 0.0
    %1195 = vmatpush2.xpose.msra.mxu0 0.0
    %1196 = vmatprep.subr.mxu0 0.0
    %1197 = vmatpush2.xpose.msra.mxu0 0.0
    %1198 = vmatprep.subr.mxu0 0.0
    %1199 = vmatpush2.xpose.msra.mxu0 0.0
    %1200 = vmatprep.subr.mxu0 0.0
    %1201 = vmatpush2.xpose.msra.mxu0 0.0
    %1202 = vmatprep.subr.mxu0 0.0
    %1203 = vmatpush2.xpose.msra.mxu0 0.0
    %1204 = vmatprep.subr.mxu0 0.0
    %1205 = vmatpush2.xpose.msra.mxu0 0.0
    %1206 = vmatprep.subr.mxu0 0.0
    %1207 = vmatpush2.xpose.msra.mxu0 0.0
    %1208 = vmatprep.subr.mxu0 0.0
    %1209 = vmatpush2.xpose.msra.mxu0 0.0
    %1210 = vmatprep.mubr.f32.mxu0 0.0
    %1211 = vmatmul.mubr.f32.gmra.mxu0 %v1140
    %v1212 = vpop.f32.mrf.mxu0
    %v1213 = vadd.f32 %v756, %v1212
    %v1214 = vpop.f32.mrf.mxu0
    %1215 = vdwg.mxu0
    %v1216 = vsel %vm759, %v485, 0
    %v1218 = vsel %vm759, %v537, 0
    %v1220 = vsel %vm759, %v539, 0
    %1222 = vmatprep.subr.mxu0 0.0
    %1223 = vmatpush1.xpose.msra.mxu0 0.0
    %1224 = vmatprep.subr.mxu0 0.0
    %1225 = vmatpush1.xpose.msra.mxu0 0.0
    %1226 = vmatprep.subr.mxu0 0.0
    %1227 = vmatpush1.xpose.msra.mxu0 0.0
    %1228 = vmatprep.subr.mxu0 0.0
    %1229 = vmatpush1.xpose.msra.mxu0 0.0
    %1230 = vmatprep.subr.mxu0 0.0
    %1231 = vmatpush1.xpose.msra.mxu0 0.0
    %1232 = vmatprep.subr.mxu0 0.0
    %1233 = vmatpush1.xpose.msra.mxu0 0.0
    %1234 = vmatprep.subr.mxu0 0.0
    %1235 = vmatpush1.xpose.msra.mxu0 0.0
    %1236 = vmatprep.subr.mxu0 0.0
    %1237 = vmatpush1.xpose.msra.mxu0 0.0
    %1238 = vmatprep.subr.mxu0 0.0
    %1239 = vmatpush1.xpose.msra.mxu0 0.0
    %1240 = vmatprep.subr.mxu0 0.0
    %1241 = vmatpush1.xpose.msra.mxu0 0.0
    %1242 = vmatprep.subr.mxu0 0.0
    %1243 = vmatpush1.xpose.msra.mxu0 0.0
    %1244 = vmatprep.subr.mxu0 0.0
    %1245 = vmatpush1.xpose.msra.mxu0 0.0
    %1246 = vmatprep.subr.mxu0 0.0
    %1247 = vmatpush1.xpose.msra.mxu0 0.0
    %1248 = vmatprep.subr.mxu0 0.0
    %1249 = vmatpush1.xpose.msra.mxu0 0.0
    %1250 = vmatprep.subr.mxu0 0.0
    %1251 = vmatpush1.xpose.msra.mxu0 %v1220
    %1252 = vmatprep.subr.mxu0 0.0
    %1253 = vmatpush1.xpose.msra.mxu0 %v1218
    %1254 = vmatprep.subr.mxu0 0.0
    %1255 = vmatpush2.xpose.msra.mxu0 0.0
    %1256 = vmatprep.subr.mxu0 0.0
    %1257 = vmatpush2.xpose.msra.mxu0 0.0
    %1258 = vmatprep.subr.mxu0 0.0
    %1259 = vmatpush2.xpose.msra.mxu0 0.0
    %1260 = vmatprep.subr.mxu0 0.0
    %1261 = vmatpush2.xpose.msra.mxu0 0.0
    %1262 = vmatprep.subr.mxu0 0.0
    %1263 = vmatpush2.xpose.msra.mxu0 0.0
    %1264 = vmatprep.subr.mxu0 0.0
    %1265 = vmatpush2.xpose.msra.mxu0 0.0
    %1266 = vmatprep.subr.mxu0 0.0
    %1267 = vmatpush2.xpose.msra.mxu0 0.0
    %1268 = vmatprep.subr.mxu0 0.0
    %1269 = vmatpush2.xpose.msra.mxu0 0.0
    %1270 = vmatprep.subr.mxu0 0.0
    %1271 = vmatpush2.xpose.msra.mxu0 0.0
    %1272 = vmatprep.subr.mxu0 0.0
    %1273 = vmatpush2.xpose.msra.mxu0 0.0
    %1274 = vmatprep.subr.mxu0 0.0
    %1275 = vmatpush2.xpose.msra.mxu0 0.0
    %1276 = vmatprep.subr.mxu0 0.0
    %1277 = vmatpush2.xpose.msra.mxu0 0.0
    %1278 = vmatprep.subr.mxu0 0.0
    %1279 = vmatpush2.xpose.msra.mxu0 0.0
    %1280 = vmatprep.subr.mxu0 0.0
    %1281 = vmatpush2.xpose.msra.mxu0 0.0
    %1282 = vmatprep.subr.mxu0 0.0
    %1283 = vmatpush2.xpose.msra.mxu0 0.0
    %1284 = vmatprep.subr.mxu0 0.0
    %1285 = vmatpush2.xpose.msra.mxu0 0.0
    %1286 = vmatprep.mubr.f32.mxu0 0.0
    %1287 = vmatmul.mubr.f32.gmra.mxu0 %v1216
    %v1288 = vpop.f32.mrf.mxu0
    %v1289 = vadd.f32 %v757, %v1288
    %v1290 = vpop.f32.mrf.mxu0
    %1291 = vdwg.mxu0
    %v1292 = vsel %vm759, %v489, 0
    %v1294 = vsel %vm759, %v545, 0
    %v1296 = vsel %vm759, %v547, 0
    %1298 = vmatprep.subr.mxu0 0.0
    %1299 = vmatpush1.xpose.msra.mxu0 0.0
    %1300 = vmatprep.subr.mxu0 0.0
    %1301 = vmatpush1.xpose.msra.mxu0 0.0
    %1302 = vmatprep.subr.mxu0 0.0
    %1303 = vmatpush1.xpose.msra.mxu0 0.0
    %1304 = vmatprep.subr.mxu0 0.0
    %1305 = vmatpush1.xpose.msra.mxu0 0.0
    %1306 = vmatprep.subr.mxu0 0.0
    %1307 = vmatpush1.xpose.msra.mxu0 0.0
    %1308 = vmatprep.subr.mxu0 0.0
    %1309 = vmatpush1.xpose.msra.mxu0 0.0
    %1310 = vmatprep.subr.mxu0 0.0
    %1311 = vmatpush1.xpose.msra.mxu0 0.0
    %1312 = vmatprep.subr.mxu0 0.0
    %1313 = vmatpush1.xpose.msra.mxu0 0.0
    %1314 = vmatprep.subr.mxu0 0.0
    %1315 = vmatpush1.xpose.msra.mxu0 0.0
    %1316 = vmatprep.subr.mxu0 0.0
    %1317 = vmatpush1.xpose.msra.mxu0 0.0
    %1318 = vmatprep.subr.mxu0 0.0
    %1319 = vmatpush1.xpose.msra.mxu0 0.0
    %1320 = vmatprep.subr.mxu0 0.0
    %1321 = vmatpush1.xpose.msra.mxu0 0.0
    %1322 = vmatprep.subr.mxu0 0.0
    %1323 = vmatpush1.xpose.msra.mxu0 0.0
    %1324 = vmatprep.subr.mxu0 0.0
    %1325 = vmatpush1.xpose.msra.mxu0 0.0
    %1326 = vmatprep.subr.mxu0 0.0
    %1327 = vmatpush1.xpose.msra.mxu0 %v1296
    %1328 = vmatprep.subr.mxu0 0.0
    %1329 = vmatpush1.xpose.msra.mxu0 %v1294
    %1330 = vmatprep.subr.mxu0 0.0
    %1331 = vmatpush2.xpose.msra.mxu0 0.0
    %1332 = vmatprep.subr.mxu0 0.0
    %1333 = vmatpush2.xpose.msra.mxu0 0.0
    %1334 = vmatprep.subr.mxu0 0.0
    %1335 = vmatpush2.xpose.msra.mxu0 0.0
    %1336 = vmatprep.subr.mxu0 0.0
    %1337 = vmatpush2.xpose.msra.mxu0 0.0
    %1338 = vmatprep.subr.mxu0 0.0
    %1339 = vmatpush2.xpose.msra.mxu0 0.0
    %1340 = vmatprep.subr.mxu0 0.0
    %1341 = vmatpush2.xpose.msra.mxu0 0.0
    %1342 = vmatprep.subr.mxu0 0.0
    %1343 = vmatpush2.xpose.msra.mxu0 0.0
    %1344 = vmatprep.subr.mxu0 0.0
    %1345 = vmatpush2.xpose.msra.mxu0 0.0
    %1346 = vmatprep.subr.mxu0 0.0
    %1347 = vmatpush2.xpose.msra.mxu0 0.0
    %1348 = vmatprep.subr.mxu0 0.0
    %1349 = vmatpush2.xpose.msra.mxu0 0.0
    %1350 = vmatprep.subr.mxu0 0.0
    %1351 = vmatpush2.xpose.msra.mxu0 0.0
    %1352 = vmatprep.subr.mxu0 0.0
    %1353 = vmatpush2.xpose.msra.mxu0 0.0
    %1354 = vmatprep.subr.mxu0 0.0
    %1355 = vmatpush2.xpose.msra.mxu0 0.0
    %1356 = vmatprep.subr.mxu0 0.0
    %1357 = vmatpush2.xpose.msra.mxu0 0.0
    %1358 = vmatprep.subr.mxu0 0.0
    %1359 = vmatpush2.xpose.msra.mxu0 0.0
    %1360 = vmatprep.subr.mxu0 0.0
    %1361 = vmatpush2.xpose.msra.mxu0 0.0
    %1362 = vmatprep.mubr.f32.mxu0 0.0
    %1363 = vmatmul.mubr.f32.gmra.mxu0 %v1292
    %v1364 = vpop.f32.mrf.mxu0
    %v1365 = vadd.f32 %v758, %v1364
    %v1366 = vpop.f32.mrf.mxu0
    %1367 = vdwg.mxu0
    %vm1368 = vcmask 130048
    %v1369 = vsel %vm1368, %v833, -inf
    %1370 = vmax.xlane.f32.xlu0 %v1369
    %v1371 = vpop.xlane.xlu0 %1370
    %v1372 = vsel %vm1368, %v909, -inf
    %1373 = vmax.xlane.f32.xlu0 %v1372
    %v1374 = vpop.xlane.xlu0 %1373
    %v1375 = vsel %vm1368, %v985, -inf
    %1376 = vmax.xlane.f32.xlu0 %v1375
    %v1377 = vpop.xlane.xlu0 %1376
    %v1378 = vsel %vm1368, %v1061, -inf
    %1379 = vmax.xlane.f32.xlu0 %v1378
    %v1380 = vpop.xlane.xlu0 %1379
    %v1381 = vsel %vm1368, %v1137, -inf
    %1382 = vmax.xlane.f32.xlu0 %v1381
    %v1383 = vpop.xlane.xlu0 %1382
    %v1384 = vsel %vm1368, %v1213, -inf
    %1385 = vmax.xlane.f32.xlu0 %v1384
    %v1386 = vpop.xlane.xlu0 %1385
    %v1387 = vsel %vm1368, %v1289, -inf
    %1388 = vmax.xlane.f32.xlu0 %v1387
    %v1389 = vpop.xlane.xlu0 %1388
    %v1390 = vsel %vm1368, %v1365, -inf
    %1391 = vmax.xlane.f32.xlu0 %v1390
    %v1392 = vpop.xlane.xlu0 %1391
    %v1393 = vsub.f32 %v833, %v1371
    %v1394 = vsub.f32 %v909, %v1374
    %v1395 = vsub.f32 %v985, %v1377
    %v1396 = vsub.f32 %v1061, %v1380
    %v1397 = vsub.f32 %v1137, %v1383
    %v1398 = vsub.f32 %v1213, %v1386
    %v1399 = vsub.f32 %v1289, %v1389
    %v1400 = vsub.f32 %v1365, %v1392
    %v1401 = vmul.f32 %v1393, 1.442695
    %v1402 = vpow.pop %v1401
    %v1403 = vmul.f32 %v1394, 1.442695
    %v1404 = vpow.pop %v1403
    %v1405 = vmul.f32 %v1395, 1.442695
    %v1406 = vpow.pop %v1405
    %v1407 = vmul.f32 %v1396, 1.442695
    %v1408 = vpow.pop %v1407
    %v1409 = vmul.f32 %v1397, 1.442695
    %v1410 = vpow.pop %v1409
    %v1411 = vmul.f32 %v1398, 1.442695
    %v1412 = vpow.pop %v1411
    %v1413 = vmul.f32 %v1399, 1.442695
    %v1414 = vpow.pop %v1413
    %v1415 = vmul.f32 %v1400, 1.442695
    %v1416 = vpow.pop %v1415
    %v1417 = vsel %vm1368, %v1402, 0.0
    %1418 = vadd.xlane.f32.xlu0 %v1417
    %v1419 = vpop.xlane.xlu0 %1418
    %v1420 = vsel %vm1368, %v1404, 0.0
    %1421 = vadd.xlane.f32.xlu0 %v1420
    %v1422 = vpop.xlane.xlu0 %1421
    %v1423 = vsel %vm1368, %v1406, 0.0
    %1424 = vadd.xlane.f32.xlu0 %v1423
    %v1425 = vpop.xlane.xlu0 %1424
    %v1426 = vsel %vm1368, %v1408, 0.0
    %1427 = vadd.xlane.f32.xlu0 %v1426
    %v1428 = vpop.xlane.xlu0 %1427
    %v1429 = vsel %vm1368, %v1410, 0.0
    %1430 = vadd.xlane.f32.xlu0 %v1429
    %v1431 = vpop.xlane.xlu0 %1430
    %v1432 = vsel %vm1368, %v1412, 0.0
    %1433 = vadd.xlane.f32.xlu0 %v1432
    %v1434 = vpop.xlane.xlu0 %1433
    %v1435 = vsel %vm1368, %v1414, 0.0
    %1436 = vadd.xlane.f32.xlu0 %v1435
    %v1437 = vpop.xlane.xlu0 %1436
    %v1438 = vsel %vm1368, %v1416, 0.0
    %1439 = vadd.xlane.f32.xlu0 %v1438
    %v1440 = vpop.xlane.xlu0 %1439
    %v1441 = vrcp.pop %v1419
    %v1442 = vrcp.pop %v1422
    %v1443 = vrcp.pop %v1425
    %v1444 = vrcp.pop %v1428
    %v1445 = vrcp.pop %v1431
    %v1446 = vrcp.pop %v1434
    %v1447 = vrcp.pop %v1437
    %v1448 = vrcp.pop %v1440
    %v1449 = vmul.f32 %v1402, %v1441
    %v1450 = vmul.f32 %v1404, %v1442
    %v1451 = vmul.f32 %v1406, %v1443
    %v1452 = vmul.f32 %v1408, %v1444
    %v1453 = vmul.f32 %v1410, %v1445
    %v1454 = vmul.f32 %v1412, %v1446
    %v1455 = vmul.f32 %v1414, %v1447
    %v1456 = vmul.f32 %v1416, %v1448
    %v1458 = vsel %vm1368, %v1449, 0
    %1460 = vmatprep.subr.mxu0 0.0
    %1461 = vmatpush1.msra.mxu0 0.0
    %1462 = vmatprep.subr.mxu0 0.0
    %1463 = vmatpush1.msra.mxu0 0.0
    %1464 = vmatprep.subr.mxu0 0.0
    %1465 = vmatpush1.msra.mxu0 0.0
    %1466 = vmatprep.subr.mxu0 0.0
    %1467 = vmatpush1.msra.mxu0 0.0
    %1468 = vmatprep.subr.mxu0 0.0
    %1469 = vmatpush1.msra.mxu0 0.0
    %1470 = vmatprep.subr.mxu0 0.0
    %1471 = vmatpush1.msra.mxu0 0.0
    %1472 = vmatprep.subr.mxu0 0.0
    %1473 = vmatpush1.msra.mxu0 0.0
    %1474 = vmatprep.subr.mxu0 0.0
    %1475 = vmatpush1.msra.mxu0 0.0
    %1476 = vmatprep.subr.mxu0 0.0
    %1477 = vmatpush1.msra.mxu0 0.0
    %1478 = vmatprep.subr.mxu0 0.0
    %1479 = vmatpush1.msra.mxu0 0.0
    %1480 = vmatprep.subr.mxu0 0.0
    %1481 = vmatpush1.msra.mxu0 0.0
    %1482 = vmatprep.subr.mxu0 0.0
    %1483 = vmatpush1.msra.mxu0 0.0
    %1484 = vmatprep.subr.mxu0 0.0
    %1485 = vmatpush1.msra.mxu0 0.0
    %1486 = vmatprep.subr.mxu0 0.0
    %1487 = vmatpush1.msra.mxu0 0.0
    %1488 = vmatprep.subr.mxu0 0.0
    %1489 = vmatpush1.msra.mxu0 %v449
    %1490 = vmatprep.subr.mxu0 0.0
    %1491 = vmatpush1.msra.mxu0 %v444
    %1492 = vmatprep.subr.mxu0 0.0
    %1493 = vmatpush2.msra.mxu0 0.0
    %1494 = vmatprep.subr.mxu0 0.0
    %1495 = vmatpush2.msra.mxu0 0.0
    %1496 = vmatprep.subr.mxu0 0.0
    %1497 = vmatpush2.msra.mxu0 0.0
    %1498 = vmatprep.subr.mxu0 0.0
    %1499 = vmatpush2.msra.mxu0 0.0
    %1500 = vmatprep.subr.mxu0 0.0
    %1501 = vmatpush2.msra.mxu0 0.0
    %1502 = vmatprep.subr.mxu0 0.0
    %1503 = vmatpush2.msra.mxu0 0.0
    %1504 = vmatprep.subr.mxu0 0.0
    %1505 = vmatpush2.msra.mxu0 0.0
    %1506 = vmatprep.subr.mxu0 0.0
    %1507 = vmatpush2.msra.mxu0 0.0
    %1508 = vmatprep.subr.mxu0 0.0
    %1509 = vmatpush2.msra.mxu0 0.0
    %1510 = vmatprep.subr.mxu0 0.0
    %1511 = vmatpush2.msra.mxu0 0.0
    %1512 = vmatprep.subr.mxu0 0.0
    %1513 = vmatpush2.msra.mxu0 0.0
    %1514 = vmatprep.subr.mxu0 0.0
    %1515 = vmatpush2.msra.mxu0 0.0
    %1516 = vmatprep.subr.mxu0 0.0
    %1517 = vmatpush2.msra.mxu0 0.0
    %1518 = vmatprep.subr.mxu0 0.0
    %1519 = vmatpush2.msra.mxu0 0.0
    %1520 = vmatprep.subr.mxu0 0.0
    %1521 = vmatpush2.msra.mxu0 0.0
    %1522 = vmatprep.subr.mxu0 0.0
    %1523 = vmatpush2.msra.mxu0 0.0
    %1524 = vmatprep.mubr.f32.mxu0 0.0
    %1525 = vmatmul.mubr.f32.gmra.mxu0 %v1458
    %v1526 = vpop.f32.mrf.mxu0
    %v1527 = vadd.f32 0.0, %v1526
    %v1528 = vpop.f32.mrf.mxu0
    %1529 = vdwg.mxu0
    %v1531 = vsel %vm1368, %v1450, 0
    %1533 = vmatprep.subr.mxu0 0.0
    %1534 = vmatpush1.msra.mxu0 0.0
    %1535 = vmatprep.subr.mxu0 0.0
    %1536 = vmatpush1.msra.mxu0 0.0
    %1537 = vmatprep.subr.mxu0 0.0
    %1538 = vmatpush1.msra.mxu0 0.0
    %1539 = vmatprep.subr.mxu0 0.0
    %1540 = vmatpush1.msra.mxu0 0.0
    %1541 = vmatprep.subr.mxu0 0.0
    %1542 = vmatpush1.msra.mxu0 0.0
    %1543 = vmatprep.subr.mxu0 0.0
    %1544 = vmatpush1.msra.mxu0 0.0
    %1545 = vmatprep.subr.mxu0 0.0
    %1546 = vmatpush1.msra.mxu0 0.0
    %1547 = vmatprep.subr.mxu0 0.0
    %1548 = vmatpush1.msra.mxu0 0.0
    %1549 = vmatprep.subr.mxu0 0.0
    %1550 = vmatpush1.msra.mxu0 0.0
    %1551 = vmatprep.subr.mxu0 0.0
    %1552 = vmatpush1.msra.mxu0 0.0
    %1553 = vmatprep.subr.mxu0 0.0
    %1554 = vmatpush1.msra.mxu0 0.0
    %1555 = vmatprep.subr.mxu0 0.0
    %1556 = vmatpush1.msra.mxu0 0.0
    %1557 = vmatprep.subr.mxu0 0.0
    %1558 = vmatpush1.msra.mxu0 0.0
    %1559 = vmatprep.subr.mxu0 0.0
    %1560 = vmatpush1.msra.mxu0 0.0
    %1561 = vmatprep.subr.mxu0 0.0
    %1562 = vmatpush1.msra.mxu0 %v559
    %1563 = vmatprep.subr.mxu0 0.0
    %1564 = vmatpush1.msra.mxu0 %v557
    %1565 = vmatprep.subr.mxu0 0.0
    %1566 = vmatpush2.msra.mxu0 0.0
    %1567 = vmatprep.subr.mxu0 0.0
    %1568 = vmatpush2.msra.mxu0 0.0
    %1569 = vmatprep.subr.mxu0 0.0
    %1570 = vmatpush2.msra.mxu0 0.0
    %1571 = vmatprep.subr.mxu0 0.0
    %1572 = vmatpush2.msra.mxu0 0.0
    %1573 = vmatprep.subr.mxu0 0.0
    %1574 = vmatpush2.msra.mxu0 0.0
    %1575 = vmatprep.subr.mxu0 0.0
    %1576 = vmatpush2.msra.mxu0 0.0
    %1577 = vmatprep.subr.mxu0 0.0
    %1578 = vmatpush2.msra.mxu0 0.0
    %1579 = vmatprep.subr.mxu0 0.0
    %1580 = vmatpush2.msra.mxu0 0.0
    %1581 = vmatprep.subr.mxu0 0.0
    %1582 = vmatpush2.msra.mxu0 0.0
    %1583 = vmatprep.subr.mxu0 0.0
    %1584 = vmatpush2.msra.mxu0 0.0
    %1585 = vmatprep.subr.mxu0 0.0
    %1586 = vmatpush2.msra.mxu0 0.0
    %1587 = vmatprep.subr.mxu0 0.0
    %1588 = vmatpush2.msra.mxu0 0.0
    %1589 = vmatprep.subr.mxu0 0.0
    %1590 = vmatpush2.msra.mxu0 0.0
    %1591 = vmatprep.subr.mxu0 0.0
    %1592 = vmatpush2.msra.mxu0 0.0
    %1593 = vmatprep.subr.mxu0 0.0
    %1594 = vmatpush2.msra.mxu0 0.0
    %1595 = vmatprep.subr.mxu0 0.0
    %1596 = vmatpush2.msra.mxu0 0.0
    %1597 = vmatprep.mubr.f32.mxu0 0.0
    %1598 = vmatmul.mubr.f32.gmra.mxu0 %v1531
    %v1599 = vpop.f32.mrf.mxu0
    %v1600 = vadd.f32 0.0, %v1599
    %v1601 = vpop.f32.mrf.mxu0
    %1602 = vdwg.mxu0
    %v1604 = vsel %vm1368, %v1451, 0
    %1606 = vmatprep.subr.mxu0 0.0
    %1607 = vmatpush1.msra.mxu0 0.0
    %1608 = vmatprep.subr.mxu0 0.0
    %1609 = vmatpush1.msra.mxu0 0.0
    %1610 = vmatprep.subr.mxu0 0.0
    %1611 = vmatpush1.msra.mxu0 0.0
    %1612 = vmatprep.subr.mxu0 0.0
    %1613 = vmatpush1.msra.mxu0 0.0
    %1614 = vmatprep.subr.mxu0 0.0
    %1615 = vmatpush1.msra.mxu0 0.0
    %1616 = vmatprep.subr.mxu0 0.0
    %1617 = vmatpush1.msra.mxu0 0.0
    %1618 = vmatprep.subr.mxu0 0.0
    %1619 = vmatpush1.msra.mxu0 0.0
    %1620 = vmatprep.subr.mxu0 0.0
    %1621 = vmatpush1.msra.mxu0 0.0
    %1622 = vmatprep.subr.mxu0 0.0
    %1623 = vmatpush1.msra.mxu0 0.0
    %1624 = vmatprep.subr.mxu0 0.0
    %1625 = vmatpush1.msra.mxu0 0.0
    %1626 = vmatprep.subr.mxu0 0.0
    %1627 = vmatpush1.msra.mxu0 0.0
    %1628 = vmatprep.subr.mxu0 0.0
    %1629 = vmatpush1.msra.mxu0 0.0
    %1630 = vmatprep.subr.mxu0 0.0
    %1631 = vmatpush1.msra.mxu0 0.0
    %1632 = vmatprep.subr.mxu0 0.0
    %1633 = vmatpush1.msra.mxu0 0.0
    %1634 = vmatprep.subr.mxu0 0.0
    %1635 = vmatpush1.msra.mxu0 %v571
    %1636 = vmatprep.subr.mxu0 0.0
    %1637 = vmatpush1.msra.mxu0 %v569
    %1638 = vmatprep.subr.mxu0 0.0
    %1639 = vmatpush2.msra.mxu0 0.0
    %1640 = vmatprep.subr.mxu0 0.0
    %1641 = vmatpush2.msra.mxu0 0.0
    %1642 = vmatprep.subr.mxu0 0.0
    %1643 = vmatpush2.msra.mxu0 0.0
    %1644 = vmatprep.subr.mxu0 0.0
    %1645 = vmatpush2.msra.mxu0 0.0
    %1646 = vmatprep.subr.mxu0 0.0
    %1647 = vmatpush2.msra.mxu0 0.0
    %1648 = vmatprep.subr.mxu0 0.0
    %1649 = vmatpush2.msra.mxu0 0.0
    %1650 = vmatprep.subr.mxu0 0.0
    %1651 = vmatpush2.msra.mxu0 0.0
    %1652 = vmatprep.subr.mxu0 0.0
    %1653 = vmatpush2.msra.mxu0 0.0
    %1654 = vmatprep.subr.mxu0 0.0
    %1655 = vmatpush2.msra.mxu0 0.0
    %1656 = vmatprep.subr.mxu0 0.0
    %1657 = vmatpush2.msra.mxu0 0.0
    %1658 = vmatprep.subr.mxu0 0.0
    %1659 = vmatpush2.msra.mxu0 0.0
    %1660 = vmatprep.subr.mxu0 0.0
    %1661 = vmatpush2.msra.mxu0 0.0
    %1662 = vmatprep.subr.mxu0 0.0
    %1663 = vmatpush2.msra.mxu0 0.0
    %1664 = vmatprep.subr.mxu0 0.0
    %1665 = vmatpush2.msra.mxu0 0.0
    %1666 = vmatprep.subr.mxu0 0.0
    %1667 = vmatpush2.msra.mxu0 0.0
    %1668 = vmatprep.subr.mxu0 0.0
    %1669 = vmatpush2.msra.mxu0 0.0
    %1670 = vmatprep.mubr.f32.mxu0 0.0
    %1671 = vmatmul.mubr.f32.gmra.mxu0 %v1604
    %v1672 = vpop.f32.mrf.mxu0
    %v1673 = vadd.f32 0.0, %v1672
    %v1674 = vpop.f32.mrf.mxu0
    %1675 = vdwg.mxu0
    %v1677 = vsel %vm1368, %v1452, 0
    %1679 = vmatprep.subr.mxu0 0.0
    %1680 = vmatpush1.msra.mxu0 0.0
    %1681 = vmatprep.subr.mxu0 0.0
    %1682 = vmatpush1.msra.mxu0 0.0
    %1683 = vmatprep.subr.mxu0 0.0
    %1684 = vmatpush1.msra.mxu0 0.0
    %1685 = vmatprep.subr.mxu0 0.0
    %1686 = vmatpush1.msra.mxu0 0.0
    %1687 = vmatprep.subr.mxu0 0.0
    %1688 = vmatpush1.msra.mxu0 0.0
    %1689 = vmatprep.subr.mxu0 0.0
    %1690 = vmatpush1.msra.mxu0 0.0
    %1691 = vmatprep.subr.mxu0 0.0
    %1692 = vmatpush1.msra.mxu0 0.0
    %1693 = vmatprep.subr.mxu0 0.0
    %1694 = vmatpush1.msra.mxu0 0.0
    %1695 = vmatprep.subr.mxu0 0.0
    %1696 = vmatpush1.msra.mxu0 0.0
    %1697 = vmatprep.subr.mxu0 0.0
    %1698 = vmatpush1.msra.mxu0 0.0
    %1699 = vmatprep.subr.mxu0 0.0
    %1700 = vmatpush1.msra.mxu0 0.0
    %1701 = vmatprep.subr.mxu0 0.0
    %1702 = vmatpush1.msra.mxu0 0.0
    %1703 = vmatprep.subr.mxu0 0.0
    %1704 = vmatpush1.msra.mxu0 0.0
    %1705 = vmatprep.subr.mxu0 0.0
    %1706 = vmatpush1.msra.mxu0 0.0
    %1707 = vmatprep.subr.mxu0 0.0
    %1708 = vmatpush1.msra.mxu0 %v583
    %1709 = vmatprep.subr.mxu0 0.0
    %1710 = vmatpush1.msra.mxu0 %v581
    %1711 = vmatprep.subr.mxu0 0.0
    %1712 = vmatpush2.msra.mxu0 0.0
    %1713 = vmatprep.subr.mxu0 0.0
    %1714 = vmatpush2.msra.mxu0 0.0
    %1715 = vmatprep.subr.mxu0 0.0
    %1716 = vmatpush2.msra.mxu0 0.0
    %1717 = vmatprep.subr.mxu0 0.0
    %1718 = vmatpush2.msra.mxu0 0.0
    %1719 = vmatprep.subr.mxu0 0.0
    %1720 = vmatpush2.msra.mxu0 0.0
    %1721 = vmatprep.subr.mxu0 0.0
    %1722 = vmatpush2.msra.mxu0 0.0
    %1723 = vmatprep.subr.mxu0 0.0
    %1724 = vmatpush2.msra.mxu0 0.0
    %1725 = vmatprep.subr.mxu0 0.0
    %1726 = vmatpush2.msra.mxu0 0.0
    %1727 = vmatprep.subr.mxu0 0.0
    %1728 = vmatpush2.msra.mxu0 0.0
    %1729 = vmatprep.subr.mxu0 0.0
    %1730 = vmatpush2.msra.mxu0 0.0
    %1731 = vmatprep.subr.mxu0 0.0
    %1732 = vmatpush2.msra.mxu0 0.0
    %1733 = vmatprep.subr.mxu0 0.0
    %1734 = vmatpush2.msra.mxu0 0.0
    %1735 = vmatprep.subr.mxu0 0.0
    %1736 = vmatpush2.msra.mxu0 0.0
    %1737 = vmatprep.subr.mxu0 0.0
    %1738 = vmatpush2.msra.mxu0 0.0
    %1739 = vmatprep.subr.mxu0 0.0
    %1740 = vmatpush2.msra.mxu0 0.0
    %1741 = vmatprep.subr.mxu0 0.0
    %1742 = vmatpush2.msra.mxu0 0.0
    %1743 = vmatprep.mubr.f32.mxu0 0.0
    %1744 = vmatmul.mubr.f32.gmra.mxu0 %v1677
    %v1745 = vpop.f32.mrf.mxu0
    %v1746 = vadd.f32 0.0, %v1745
    %v1747 = vpop.f32.mrf.mxu0
    %1748 = vdwg.mxu0
    %v1750 = vsel %vm1368, %v1453, 0
    %1752 = vmatprep.subr.mxu0 0.0
    %1753 = vmatpush1.msra.mxu0 0.0
    %1754 = vmatprep.subr.mxu0 0.0
    %1755 = vmatpush1.msra.mxu0 0.0
    %1756 = vmatprep.subr.mxu0 0.0
    %1757 = vmatpush1.msra.mxu0 0.0
    %1758 = vmatprep.subr.mxu0 0.0
    %1759 = vmatpush1.msra.mxu0 0.0
    %1760 = vmatprep.subr.mxu0 0.0
    %1761 = vmatpush1.msra.mxu0 0.0
    %1762 = vmatprep.subr.mxu0 0.0
    %1763 = vmatpush1.msra.mxu0 0.0
    %1764 = vmatprep.subr.mxu0 0.0
    %1765 = vmatpush1.msra.mxu0 0.0
    %1766 = vmatprep.subr.mxu0 0.0
    %1767 = vmatpush1.msra.mxu0 0.0
    %1768 = vmatprep.subr.mxu0 0.0
    %1769 = vmatpush1.msra.mxu0 0.0
    %1770 = vmatprep.subr.mxu0 0.0
    %1771 = vmatpush1.msra.mxu0 0.0
    %1772 = vmatprep.subr.mxu0 0.0
    %1773 = vmatpush1.msra.mxu0 0.0
    %1774 = vmatprep.subr.mxu0 0.0
    %1775 = vmatpush1.msra.mxu0 0.0
    %1776 = vmatprep.subr.mxu0 0.0
    %1777 = vmatpush1.msra.mxu0 0.0
    %1778 = vmatprep.subr.mxu0 0.0
    %1779 = vmatpush1.msra.mxu0 0.0
    %1780 = vmatprep.subr.mxu0 0.0
    %1781 = vmatpush1.msra.mxu0 %v595
    %1782 = vmatprep.subr.mxu0 0.0
    %1783 = vmatpush1.msra.mxu0 %v593
    %1784 = vmatprep.subr.mxu0 0.0
    %1785 = vmatpush2.msra.mxu0 0.0
    %1786 = vmatprep.subr.mxu0 0.0
    %1787 = vmatpush2.msra.mxu0 0.0
    %1788 = vmatprep.subr.mxu0 0.0
    %1789 = vmatpush2.msra.mxu0 0.0
    %1790 = vmatprep.subr.mxu0 0.0
    %1791 = vmatpush2.msra.mxu0 0.0
    %1792 = vmatprep.subr.mxu0 0.0
    %1793 = vmatpush2.msra.mxu0 0.0
    %1794 = vmatprep.subr.mxu0 0.0
    %1795 = vmatpush2.msra.mxu0 0.0
    %1796 = vmatprep.subr.mxu0 0.0
    %1797 = vmatpush2.msra.mxu0 0.0
    %1798 = vmatprep.subr.mxu0 0.0
    %1799 = vmatpush2.msra.mxu0 0.0
    %1800 = vmatprep.subr.mxu0 0.0
    %1801 = vmatpush2.msra.mxu0 0.0
    %1802 = vmatprep.subr.mxu0 0.0
    %1803 = vmatpush2.msra.mxu0 0.0
    %1804 = vmatprep.subr.mxu0 0.0
    %1805 = vmatpush2.msra.mxu0 0.0
    %1806 = vmatprep.subr.mxu0 0.0
    %1807 = vmatpush2.msra.mxu0 0.0
    %1808 = vmatprep.subr.mxu0 0.0
    %1809 = vmatpush2.msra.mxu0 0.0
    %1810 = vmatprep.subr.mxu0 0.0
    %1811 = vmatpush2.msra.mxu0 0.0
    %1812 = vmatprep.subr.mxu0 0.0
    %1813 = vmatpush2.msra.mxu0 0.0
    %1814 = vmatprep.subr.mxu0 0.0
    %1815 = vmatpush2.msra.mxu0 0.0
    %1816 = vmatprep.mubr.f32.mxu0 0.0
    %1817 = vmatmul.mubr.f32.gmra.mxu0 %v1750
    %v1818 = vpop.f32.mrf.mxu0
    %v1819 = vadd.f32 0.0, %v1818
    %v1820 = vpop.f32.mrf.mxu0
    %1821 = vdwg.mxu0
    %v1823 = vsel %vm1368, %v1454, 0
    %1825 = vmatprep.subr.mxu0 0.0
    %1826 = vmatpush1.msra.mxu0 0.0
    %1827 = vmatprep.subr.mxu0 0.0
    %1828 = vmatpush1.msra.mxu0 0.0
    %1829 = vmatprep.subr.mxu0 0.0
    %1830 = vmatpush1.msra.mxu0 0.0
    %1831 = vmatprep.subr.mxu0 0.0
    %1832 = vmatpush1.msra.mxu0 0.0
    %1833 = vmatprep.subr.mxu0 0.0
    %1834 = vmatpush1.msra.mxu0 0.0
    %1835 = vmatprep.subr.mxu0 0.0
    %1836 = vmatpush1.msra.mxu0 0.0
    %1837 = vmatprep.subr.mxu0 0.0
    %1838 = vmatpush1.msra.mxu0 0.0
    %1839 = vmatprep.subr.mxu0 0.0
    %1840 = vmatpush1.msra.mxu0 0.0
    %1841 = vmatprep.subr.mxu0 0.0
    %1842 = vmatpush1.msra.mxu0 0.0
    %1843 = vmatprep.subr.mxu0 0.0
    %1844 = vmatpush1.msra.mxu0 0.0
    %1845 = vmatprep.subr.mxu0 0.0
    %1846 = vmatpush1.msra.mxu0 0.0
    %1847 = vmatprep.subr.mxu0 0.0
    %1848 = vmatpush1.msra.mxu0 0.0
    %1849 = vmatprep.subr.mxu0 0.0
    %1850 = vmatpush1.msra.mxu0 0.0
    %1851 = vmatprep.subr.mxu0 0.0
    %1852 = vmatpush1.msra.mxu0 0.0
    %1853 = vmatprep.subr.mxu0 0.0
    %1854 = vmatpush1.msra.mxu0 %v607
    %1855 = vmatprep.subr.mxu0 0.0
    %1856 = vmatpush1.msra.mxu0 %v605
    %1857 = vmatprep.subr.mxu0 0.0
    %1858 = vmatpush2.msra.mxu0 0.0
    %1859 = vmatprep.subr.mxu0 0.0
    %1860 = vmatpush2.msra.mxu0 0.0
    %1861 = vmatprep.subr.mxu0 0.0
    %1862 = vmatpush2.msra.mxu0 0.0
    %1863 = vmatprep.subr.mxu0 0.0
    %1864 = vmatpush2.msra.mxu0 0.0
    %1865 = vmatprep.subr.mxu0 0.0
    %1866 = vmatpush2.msra.mxu0 0.0
    %1867 = vmatprep.subr.mxu0 0.0
    %1868 = vmatpush2.msra.mxu0 0.0
    %1869 = vmatprep.subr.mxu0 0.0
    %1870 = vmatpush2.msra.mxu0 0.0
    %1871 = vmatprep.subr.mxu0 0.0
    %1872 = vmatpush2.msra.mxu0 0.0
    %1873 = vmatprep.subr.mxu0 0.0
    %1874 = vmatpush2.msra.mxu0 0.0
    %1875 = vmatprep.subr.mxu0 0.0
    %1876 = vmatpush2.msra.mxu0 0.0
    %1877 = vmatprep.subr.mxu0 0.0
    %1878 = vmatpush2.msra.mxu0 0.0
    %1879 = vmatprep.subr.mxu0 0.0
    %1880 = vmatpush2.msra.mxu0 0.0
    %1881 = vmatprep.subr.mxu0 0.0
    %1882 = vmatpush2.msra.mxu0 0.0
    %1883 = vmatprep.subr.mxu0 0.0
    %1884 = vmatpush2.msra.mxu0 0.0
    %1885 = vmatprep.subr.mxu0 0.0
    %1886 = vmatpush2.msra.mxu0 0.0
    %1887 = vmatprep.subr.mxu0 0.0
    %1888 = vmatpush2.msra.mxu0 0.0
    %1889 = vmatprep.mubr.f32.mxu0 0.0
    %1890 = vmatmul.mubr.f32.gmra.mxu0 %v1823
    %v1891 = vpop.f32.mrf.mxu0
    %v1892 = vadd.f32 0.0, %v1891
    %v1893 = vpop.f32.mrf.mxu0
    %1894 = vdwg.mxu0
    %v1896 = vsel %vm1368, %v1455, 0
    %1898 = vmatprep.subr.mxu0 0.0
    %1899 = vmatpush1.msra.mxu0 0.0
    %1900 = vmatprep.subr.mxu0 0.0
    %1901 = vmatpush1.msra.mxu0 0.0
    %1902 = vmatprep.subr.mxu0 0.0
    %1903 = vmatpush1.msra.mxu0 0.0
    %1904 = vmatprep.subr.mxu0 0.0
    %1905 = vmatpush1.msra.mxu0 0.0
    %1906 = vmatprep.subr.mxu0 0.0
    %1907 = vmatpush1.msra.mxu0 0.0
    %1908 = vmatprep.subr.mxu0 0.0
    %1909 = vmatpush1.msra.mxu0 0.0
    %1910 = vmatprep.subr.mxu0 0.0
    %1911 = vmatpush1.msra.mxu0 0.0
    %1912 = vmatprep.subr.mxu0 0.0
    %1913 = vmatpush1.msra.mxu0 0.0
    %1914 = vmatprep.subr.mxu0 0.0
    %1915 = vmatpush1.msra.mxu0 0.0
    %1916 = vmatprep.subr.mxu0 0.0
    %1917 = vmatpush1.msra.mxu0 0.0
    %1918 = vmatprep.subr.mxu0 0.0
    %1919 = vmatpush1.msra.mxu0 0.0
    %1920 = vmatprep.subr.mxu0 0.0
    %1921 = vmatpush1.msra.mxu0 0.0
    %1922 = vmatprep.subr.mxu0 0.0
    %1923 = vmatpush1.msra.mxu0 0.0
    %1924 = vmatprep.subr.mxu0 0.0
    %1925 = vmatpush1.msra.mxu0 0.0
    %1926 = vmatprep.subr.mxu0 0.0
    %1927 = vmatpush1.msra.mxu0 %v619
    %1928 = vmatprep.subr.mxu0 0.0
    %1929 = vmatpush1.msra.mxu0 %v617
    %1930 = vmatprep.subr.mxu0 0.0
    %1931 = vmatpush2.msra.mxu0 0.0
    %1932 = vmatprep.subr.mxu0 0.0
    %1933 = vmatpush2.msra.mxu0 0.0
    %1934 = vmatprep.subr.mxu0 0.0
    %1935 = vmatpush2.msra.mxu0 0.0
    %1936 = vmatprep.subr.mxu0 0.0
    %1937 = vmatpush2.msra.mxu0 0.0
    %1938 = vmatprep.subr.mxu0 0.0
    %1939 = vmatpush2.msra.mxu0 0.0
    %1940 = vmatprep.subr.mxu0 0.0
    %1941 = vmatpush2.msra.mxu0 0.0
    %1942 = vmatprep.subr.mxu0 0.0
    %1943 = vmatpush2.msra.mxu0 0.0
    %1944 = vmatprep.subr.mxu0 0.0
    %1945 = vmatpush2.msra.mxu0 0.0
    %1946 = vmatprep.subr.mxu0 0.0
    %1947 = vmatpush2.msra.mxu0 0.0
    %1948 = vmatprep.subr.mxu0 0.0
    %1949 = vmatpush2.msra.mxu0 0.0
    %1950 = vmatprep.subr.mxu0 0.0
    %1951 = vmatpush2.msra.mxu0 0.0
    %1952 = vmatprep.subr.mxu0 0.0
    %1953 = vmatpush2.msra.mxu0 0.0
    %1954 = vmatprep.subr.mxu0 0.0
    %1955 = vmatpush2.msra.mxu0 0.0
    %1956 = vmatprep.subr.mxu0 0.0
    %1957 = vmatpush2.msra.mxu0 0.0
    %1958 = vmatprep.subr.mxu0 0.0
    %1959 = vmatpush2.msra.mxu0 0.0
    %1960 = vmatprep.subr.mxu0 0.0
    %1961 = vmatpush2.msra.mxu0 0.0
    %1962 = vmatprep.mubr.f32.mxu0 0.0
    %1963 = vmatmul.mubr.f32.gmra.mxu0 %v1896
    %v1964 = vpop.f32.mrf.mxu0
    %v1965 = vadd.f32 0.0, %v1964
    %v1966 = vpop.f32.mrf.mxu0
    %1967 = vdwg.mxu0
    %v1969 = vsel %vm1368, %v1456, 0
    %1971 = vmatprep.subr.mxu0 0.0
    %1972 = vmatpush1.msra.mxu0 0.0
    %1973 = vmatprep.subr.mxu0 0.0
    %1974 = vmatpush1.msra.mxu0 0.0
    %1975 = vmatprep.subr.mxu0 0.0
    %1976 = vmatpush1.msra.mxu0 0.0
    %1977 = vmatprep.subr.mxu0 0.0
    %1978 = vmatpush1.msra.mxu0 0.0
    %1979 = vmatprep.subr.mxu0 0.0
    %1980 = vmatpush1.msra.mxu0 0.0
    %1981 = vmatprep.subr.mxu0 0.0
    %1982 = vmatpush1.msra.mxu0 0.0
    %1983 = vmatprep.subr.mxu0 0.0
    %1984 = vmatpush1.msra.mxu0 0.0
    %1985 = vmatprep.subr.mxu0 0.0
    %1986 = vmatpush1.msra.mxu0 0.0
    %1987 = vmatprep.subr.mxu0 0.0
    %1988 = vmatpush1.msra.mxu0 0.0
    %1989 = vmatprep.subr.mxu0 0.0
    %1990 = vmatpush1.msra.mxu0 0.0
    %1991 = vmatprep.subr.mxu0 0.0
    %1992 = vmatpush1.msra.mxu0 0.0
    %1993 = vmatprep.subr.mxu0 0.0
    %1994 = vmatpush1.msra.mxu0 0.0
    %1995 = vmatprep.subr.mxu0 0.0
    %1996 = vmatpush1.msra.mxu0 0.0
    %1997 = vmatprep.subr.mxu0 0.0
    %1998 = vmatpush1.msra.mxu0 0.0
    %1999 = vmatprep.subr.mxu0 0.0
    %2000 = vmatpush1.msra.mxu0 %v631
    %2001 = vmatprep.subr.mxu0 0.0
    %2002 = vmatpush1.msra.mxu0 %v629
    %2003 = vmatprep.subr.mxu0 0.0
    %2004 = vmatpush2.msra.mxu0 0.0
    %2005 = vmatprep.subr.mxu0 0.0
    %2006 = vmatpush2.msra.mxu0 0.0
    %2007 = vmatprep.subr.mxu0 0.0
    %2008 = vmatpush2.msra.mxu0 0.0
    %2009 = vmatprep.subr.mxu0 0.0
    %2010 = vmatpush2.msra.mxu0 0.0
    %2011 = vmatprep.subr.mxu0 0.0
    %2012 = vmatpush2.msra.mxu0 0.0
    %2013 = vmatprep.subr.mxu0 0.0
    %2014 = vmatpush2.msra.mxu0 0.0
    %2015 = vmatprep.subr.mxu0 0.0
    %2016 = vmatpush2.msra.mxu0 0.0
    %2017 = vmatprep.subr.mxu0 0.0
    %2018 = vmatpush2.msra.mxu0 0.0
    %2019 = vmatprep.subr.mxu0 0.0
    %2020 = vmatpush2.msra.mxu0 0.0
    %2021 = vmatprep.subr.mxu0 0.0
    %2022 = vmatpush2.msra.mxu0 0.0
    %2023 = vmatprep.subr.mxu0 0.0
    %2024 = vmatpush2.msra.mxu0 0.0
    %2025 = vmatprep.subr.mxu0 0.0
    %2026 = vmatpush2.msra.mxu0 0.0
    %2027 = vmatprep.subr.mxu0 0.0
    %2028 = vmatpush2.msra.mxu0 0.0
    %2029 = vmatprep.subr.mxu0 0.0
    %2030 = vmatpush2.msra.mxu0 0.0
    %2031 = vmatprep.subr.mxu0 0.0
    %2032 = vmatpush2.msra.mxu0 0.0
    %2033 = vmatprep.subr.mxu0 0.0
    %2034 = vmatpush2.msra.mxu0 0.0
    %2035 = vmatprep.mubr.f32.mxu0 0.0
    %2036 = vmatmul.mubr.f32.gmra.mxu0 %v1969
    %v2037 = vpop.f32.mrf.mxu0
    %v2038 = vadd.f32 0.0, %v2037
    %v2039 = vpop.f32.mrf.mxu0
    %2040 = vdwg.mxu0
    %v2042 = vsel %vm759, %v1527, 0
    %vm2044 = vcmask 1043456
    %v2046 = vsel %vm2044, %v650, 0
    %2048 = vmatprep.subr.mxu0 0.0
    %2049 = vmatpush1.msra.mxu0 0.0
    %2050 = vmatprep.subr.mxu0 0.0
    %2051 = vmatpush1.msra.mxu0 0.0
    %2052 = vmatprep.subr.mxu0 0.0
    %2053 = vmatpush1.msra.mxu0 0.0
    %2054 = vmatprep.subr.mxu0 0.0
    %2055 = vmatpush1.msra.mxu0 0.0
    %2056 = vmatprep.subr.mxu0 0.0
    %2057 = vmatpush1.msra.mxu0 0.0
    %2058 = vmatprep.subr.mxu0 0.0
    %2059 = vmatpush1.msra.mxu0 0.0
    %2060 = vmatprep.subr.mxu0 0.0
    %2061 = vmatpush1.msra.mxu0 0.0
    %2062 = vmatprep.subr.mxu0 0.0
    %2063 = vmatpush1.msra.mxu0 0.0
    %2064 = vmatprep.subr.mxu0 0.0
    %2065 = vmatpush1.msra.mxu0 0.0
    %2066 = vmatprep.subr.mxu0 0.0
    %2067 = vmatpush1.msra.mxu0 0.0
    %2068 = vmatprep.subr.mxu0 0.0
    %2069 = vmatpush1.msra.mxu0 0.0
    %2070 = vmatprep.subr.mxu0 0.0
    %2071 = vmatpush1.msra.mxu0 0.0
    %2072 = vmatprep.subr.mxu0 0.0
    %2073 = vmatpush1.msra.mxu0 0.0
    %2074 = vmatprep.subr.mxu0 0.0
    %2075 = vmatpush1.msra.mxu0 0.0
    %2076 = vmatprep.subr.mxu0 0.0
    %2077 = vmatpush1.msra.mxu0 0.0
    %2078 = vmatprep.subr.mxu0 0.0
    %2079 = vmatpush1.msra.mxu0 %v2046
    %2080 = vmatprep.subr.mxu0 0.0
    %2081 = vmatpush2.msra.mxu0 0.0
    %2082 = vmatprep.subr.mxu0 0.0
    %2083 = vmatpush2.msra.mxu0 0.0
    %2084 = vmatprep.subr.mxu0 0.0
    %2085 = vmatpush2.msra.mxu0 0.0
    %2086 = vmatprep.subr.mxu0 0.0
    %2087 = vmatpush2.msra.mxu0 0.0
    %2088 = vmatprep.subr.mxu0 0.0
    %2089 = vmatpush2.msra.mxu0 0.0
    %2090 = vmatprep.subr.mxu0 0.0
    %2091 = vmatpush2.msra.mxu0 0.0
    %2092 = vmatprep.subr.mxu0 0.0
    %2093 = vmatpush2.msra.mxu0 0.0
    %2094 = vmatprep.subr.mxu0 0.0
    %2095 = vmatpush2.msra.mxu0 0.0
    %2096 = vmatprep.subr.mxu0 0.0
    %2097 = vmatpush2.msra.mxu0 0.0
    %2098 = vmatprep.subr.mxu0 0.0
    %2099 = vmatpush2.msra.mxu0 0.0
    %2100 = vmatprep.subr.mxu0 0.0
    %2101 = vmatpush2.msra.mxu0 0.0
    %2102 = vmatprep.subr.mxu0 0.0
    %2103 = vmatpush2.msra.mxu0 0.0
    %2104 = vmatprep.subr.mxu0 0.0
    %2105 = vmatpush2.msra.mxu0 0.0
    %2106 = vmatprep.subr.mxu0 0.0
    %2107 = vmatpush2.msra.mxu0 0.0
    %2108 = vmatprep.subr.mxu0 0.0
    %2109 = vmatpush2.msra.mxu0 0.0
    %2110 = vmatprep.subr.mxu0 0.0
    %2111 = vmatpush2.msra.mxu0 0.0
    %2112 = vmatprep.mubr.f32.mxu0 0.0
    %2113 = vmatmul.mubr.f32.gmra.mxu0 %v2042
    %v2114 = vpop.f32.mrf.mxu0
    %v2115 = vadd.f32 0.0, %v2114
    %v2116 = vpop.f32.mrf.mxu0
    %2117 = vdwg.mxu0
    %v2119 = vsel %vm759, %v1600, 0
    %v2122 = vsel %vm2044, %v651, 0
    %2124 = vmatprep.subr.mxu0 0.0
    %2125 = vmatpush1.msra.mxu0 0.0
    %2126 = vmatprep.subr.mxu0 0.0
    %2127 = vmatpush1.msra.mxu0 0.0
    %2128 = vmatprep.subr.mxu0 0.0
    %2129 = vmatpush1.msra.mxu0 0.0
    %2130 = vmatprep.subr.mxu0 0.0
    %2131 = vmatpush1.msra.mxu0 0.0
    %2132 = vmatprep.subr.mxu0 0.0
    %2133 = vmatpush1.msra.mxu0 0.0
    %2134 = vmatprep.subr.mxu0 0.0
    %2135 = vmatpush1.msra.mxu0 0.0
    %2136 = vmatprep.subr.mxu0 0.0
    %2137 = vmatpush1.msra.mxu0 0.0
    %2138 = vmatprep.subr.mxu0 0.0
    %2139 = vmatpush1.msra.mxu0 0.0
    %2140 = vmatprep.subr.mxu0 0.0
    %2141 = vmatpush1.msra.mxu0 0.0
    %2142 = vmatprep.subr.mxu0 0.0
    %2143 = vmatpush1.msra.mxu0 0.0
    %2144 = vmatprep.subr.mxu0 0.0
    %2145 = vmatpush1.msra.mxu0 0.0
    %2146 = vmatprep.subr.mxu0 0.0
    %2147 = vmatpush1.msra.mxu0 0.0
    %2148 = vmatprep.subr.mxu0 0.0
    %2149 = vmatpush1.msra.mxu0 0.0
    %2150 = vmatprep.subr.mxu0 0.0
    %2151 = vmatpush1.msra.mxu0 0.0
    %2152 = vmatprep.subr.mxu0 0.0
    %2153 = vmatpush1.msra.mxu0 0.0
    %2154 = vmatprep.subr.mxu0 0.0
    %2155 = vmatpush1.msra.mxu0 %v2122
    %2156 = vmatprep.subr.mxu0 0.0
    %2157 = vmatpush2.msra.mxu0 0.0
    %2158 = vmatprep.subr.mxu0 0.0
    %2159 = vmatpush2.msra.mxu0 0.0
    %2160 = vmatprep.subr.mxu0 0.0
    %2161 = vmatpush2.msra.mxu0 0.0
    %2162 = vmatprep.subr.mxu0 0.0
    %2163 = vmatpush2.msra.mxu0 0.0
    %2164 = vmatprep.subr.mxu0 0.0
    %2165 = vmatpush2.msra.mxu0 0.0
    %2166 = vmatprep.subr.mxu0 0.0
    %2167 = vmatpush2.msra.mxu0 0.0
    %2168 = vmatprep.subr.mxu0 0.0
    %2169 = vmatpush2.msra.mxu0 0.0
    %2170 = vmatprep.subr.mxu0 0.0
    %2171 = vmatpush2.msra.mxu0 0.0
    %2172 = vmatprep.subr.mxu0 0.0
    %2173 = vmatpush2.msra.mxu0 0.0
    %2174 = vmatprep.subr.mxu0 0.0
    %2175 = vmatpush2.msra.mxu0 0.0
    %2176 = vmatprep.subr.mxu0 0.0
    %2177 = vmatpush2.msra.mxu0 0.0
    %2178 = vmatprep.subr.mxu0 0.0
    %2179 = vmatpush2.msra.mxu0 0.0
    %2180 = vmatprep.subr.mxu0 0.0
    %2181 = vmatpush2.msra.mxu0 0.0
    %2182 = vmatprep.subr.mxu0 0.0
    %2183 = vmatpush2.msra.mxu0 0.0
    %2184 = vmatprep.subr.mxu0 0.0
    %2185 = vmatpush2.msra.mxu0 0.0
    %2186 = vmatprep.subr.mxu0 0.0
    %2187 = vmatpush2.msra.mxu0 0.0
    %2188 = vmatprep.mubr.f32.mxu0 0.0
    %2189 = vmatmul.mubr.f32.gmra.mxu0 %v2119
    %v2190 = vpop.f32.mrf.mxu0
    %v2191 = vadd.f32 0.0, %v2190
    %v2192 = vpop.f32.mrf.mxu0
    %2193 = vdwg.mxu0
    %v2195 = vsel %vm759, %v1673, 0
    %v2198 = vsel %vm2044, %v652, 0
    %2200 = vmatprep.subr.mxu0 0.0
    %2201 = vmatpush1.msra.mxu0 0.0
    %2202 = vmatprep.subr.mxu0 0.0
    %2203 = vmatpush1.msra.mxu0 0.0
    %2204 = vmatprep.subr.mxu0 0.0
    %2205 = vmatpush1.msra.mxu0 0.0
    %2206 = vmatprep.subr.mxu0 0.0
    %2207 = vmatpush1.msra.mxu0 0.0
    %2208 = vmatprep.subr.mxu0 0.0
    %2209 = vmatpush1.msra.mxu0 0.0
    %2210 = vmatprep.subr.mxu0 0.0
    %2211 = vmatpush1.msra.mxu0 0.0
    %2212 = vmatprep.subr.mxu0 0.0
    %2213 = vmatpush1.msra.mxu0 0.0
    %2214 = vmatprep.subr.mxu0 0.0
    %2215 = vmatpush1.msra.mxu0 0.0
    %2216 = vmatprep.subr.mxu0 0.0
    %2217 = vmatpush1.msra.mxu0 0.0
    %2218 = vmatprep.subr.mxu0 0.0
    %2219 = vmatpush1.msra.mxu0 0.0
    %2220 = vmatprep.subr.mxu0 0.0
    %2221 = vmatpush1.msra.mxu0 0.0
    %2222 = vmatprep.subr.mxu0 0.0
    %2223 = vmatpush1.msra.mxu0 0.0
    %2224 = vmatprep.subr.mxu0 0.0
    %2225 = vmatpush1.msra.mxu0 0.0
    %2226 = vmatprep.subr.mxu0 0.0
    %2227 = vmatpush1.msra.mxu0 0.0
    %2228 = vmatprep.subr.mxu0 0.0
    %2229 = vmatpush1.msra.mxu0 0.0
    %2230 = vmatprep.subr.mxu0 0.0
    %2231 = vmatpush1.msra.mxu0 %v2198
    %2232 = vmatprep.subr.mxu0 0.0
    %2233 = vmatpush2.msra.mxu0 0.0
    %2234 = vmatprep.subr.mxu0 0.0
    %2235 = vmatpush2.msra.mxu0 0.0
    %2236 = vmatprep.subr.mxu0 0.0
    %2237 = vmatpush2.msra.mxu0 0.0
    %2238 = vmatprep.subr.mxu0 0.0
    %2239 = vmatpush2.msra.mxu0 0.0
    %2240 = vmatprep.subr.mxu0 0.0
    %2241 = vmatpush2.msra.mxu0 0.0
    %2242 = vmatprep.subr.mxu0 0.0
    %2243 = vmatpush2.msra.mxu0 0.0
    %2244 = vmatprep.subr.mxu0 0.0
    %2245 = vmatpush2.msra.mxu0 0.0
    %2246 = vmatprep.subr.mxu0 0.0
    %2247 = vmatpush2.msra.mxu0 0.0
    %2248 = vmatprep.subr.mxu0 0.0
    %2249 = vmatpush2.msra.mxu0 0.0
    %2250 = vmatprep.subr.mxu0 0.0
    %2251 = vmatpush2.msra.mxu0 0.0
    %2252 = vmatprep.subr.mxu0 0.0
    %2253 = vmatpush2.msra.mxu0 0.0
    %2254 = vmatprep.subr.mxu0 0.0
    %2255 = vmatpush2.msra.mxu0 0.0
    %2256 = vmatprep.subr.mxu0 0.0
    %2257 = vmatpush2.msra.mxu0 0.0
    %2258 = vmatprep.subr.mxu0 0.0
    %2259 = vmatpush2.msra.mxu0 0.0
    %2260 = vmatprep.subr.mxu0 0.0
    %2261 = vmatpush2.msra.mxu0 0.0
    %2262 = vmatprep.subr.mxu0 0.0
    %2263 = vmatpush2.msra.mxu0 0.0
    %2264 = vmatprep.mubr.f32.mxu0 0.0
    %2265 = vmatmul.mubr.f32.gmra.mxu0 %v2195
    %v2266 = vpop.f32.mrf.mxu0
    %v2267 = vadd.f32 0.0, %v2266
    %v2268 = vpop.f32.mrf.mxu0
    %2269 = vdwg.mxu0
    %v2271 = vsel %vm759, %v1746, 0
    %v2274 = vsel %vm2044, %v653, 0
    %2276 = vmatprep.subr.mxu0 0.0
    %2277 = vmatpush1.msra.mxu0 0.0
    %2278 = vmatprep.subr.mxu0 0.0
    %2279 = vmatpush1.msra.mxu0 0.0
    %2280 = vmatprep.subr.mxu0 0.0
    %2281 = vmatpush1.msra.mxu0 0.0
    %2282 = vmatprep.subr.mxu0 0.0
    %2283 = vmatpush1.msra.mxu0 0.0
    %2284 = vmatprep.subr.mxu0 0.0
    %2285 = vmatpush1.msra.mxu0 0.0
    %2286 = vmatprep.subr.mxu0 0.0
    %2287 = vmatpush1.msra.mxu0 0.0
    %2288 = vmatprep.subr.mxu0 0.0
    %2289 = vmatpush1.msra.mxu0 0.0
    %2290 = vmatprep.subr.mxu0 0.0
    %2291 = vmatpush1.msra.mxu0 0.0
    %2292 = vmatprep.subr.mxu0 0.0
    %2293 = vmatpush1.msra.mxu0 0.0
    %2294 = vmatprep.subr.mxu0 0.0
    %2295 = vmatpush1.msra.mxu0 0.0
    %2296 = vmatprep.subr.mxu0 0.0
    %2297 = vmatpush1.msra.mxu0 0.0
    %2298 = vmatprep.subr.mxu0 0.0
    %2299 = vmatpush1.msra.mxu0 0.0
    %2300 = vmatprep.subr.mxu0 0.0
    %2301 = vmatpush1.msra.mxu0 0.0
    %2302 = vmatprep.subr.mxu0 0.0
    %2303 = vmatpush1.msra.mxu0 0.0
    %2304 = vmatprep.subr.mxu0 0.0
    %2305 = vmatpush1.msra.mxu0 0.0
    %2306 = vmatprep.subr.mxu0 0.0
    %2307 = vmatpush1.msra.mxu0 %v2274
    %2308 = vmatprep.subr.mxu0 0.0
    %2309 = vmatpush2.msra.mxu0 0.0
    %2310 = vmatprep.subr.mxu0 0.0
    %2311 = vmatpush2.msra.mxu0 0.0
    %2312 = vmatprep.subr.mxu0 0.0
    %2313 = vmatpush2.msra.mxu0 0.0
    %2314 = vmatprep.subr.mxu0 0.0
    %2315 = vmatpush2.msra.mxu0 0.0
    %2316 = vmatprep.subr.mxu0 0.0
    %2317 = vmatpush2.msra.mxu0 0.0
    %2318 = vmatprep.subr.mxu0 0.0
    %2319 = vmatpush2.msra.mxu0 0.0
    %2320 = vmatprep.subr.mxu0 0.0
    %2321 = vmatpush2.msra.mxu0 0.0
    %2322 = vmatprep.subr.mxu0 0.0
    %2323 = vmatpush2.msra.mxu0 0.0
    %2324 = vmatprep.subr.mxu0 0.0
    %2325 = vmatpush2.msra.mxu0 0.0
    %2326 = vmatprep.subr.mxu0 0.0
    %2327 = vmatpush2.msra.mxu0 0.0
    %2328 = vmatprep.subr.mxu0 0.0
    %2329 = vmatpush2.msra.mxu0 0.0
    %2330 = vmatprep.subr.mxu0 0.0
    %2331 = vmatpush2.msra.mxu0 0.0
    %2332 = vmatprep.subr.mxu0 0.0
    %2333 = vmatpush2.msra.mxu0 0.0
    %2334 = vmatprep.subr.mxu0 0.0
    %2335 = vmatpush2.msra.mxu0 0.0
    %2336 = vmatprep.subr.mxu0 0.0
    %2337 = vmatpush2.msra.mxu0 0.0
    %2338 = vmatprep.subr.mxu0 0.0
    %2339 = vmatpush2.msra.mxu0 0.0
    %2340 = vmatprep.mubr.f32.mxu0 0.0
    %2341 = vmatmul.mubr.f32.gmra.mxu0 %v2271
    %v2342 = vpop.f32.mrf.mxu0
    %v2343 = vadd.f32 0.0, %v2342
    %v2344 = vpop.f32.mrf.mxu0
    %2345 = vdwg.mxu0
    %v2347 = vsel %vm759, %v1819, 0
    %v2350 = vsel %vm2044, %v654, 0
    %2352 = vmatprep.subr.mxu0 0.0
    %2353 = vmatpush1.msra.mxu0 0.0
    %2354 = vmatprep.subr.mxu0 0.0
    %2355 = vmatpush1.msra.mxu0 0.0
    %2356 = vmatprep.subr.mxu0 0.0
    %2357 = vmatpush1.msra.mxu0 0.0
    %2358 = vmatprep.subr.mxu0 0.0
    %2359 = vmatpush1.msra.mxu0 0.0
    %2360 = vmatprep.subr.mxu0 0.0
    %2361 = vmatpush1.msra.mxu0 0.0
    %2362 = vmatprep.subr.mxu0 0.0
    %2363 = vmatpush1.msra.mxu0 0.0
    %2364 = vmatprep.subr.mxu0 0.0
    %2365 = vmatpush1.msra.mxu0 0.0
    %2366 = vmatprep.subr.mxu0 0.0
    %2367 = vmatpush1.msra.mxu0 0.0
    %2368 = vmatprep.subr.mxu0 0.0
    %2369 = vmatpush1.msra.mxu0 0.0
    %2370 = vmatprep.subr.mxu0 0.0
    %2371 = vmatpush1.msra.mxu0 0.0
    %2372 = vmatprep.subr.mxu0 0.0
    %2373 = vmatpush1.msra.mxu0 0.0
    %2374 = vmatprep.subr.mxu0 0.0
    %2375 = vmatpush1.msra.mxu0 0.0
    %2376 = vmatprep.subr.mxu0 0.0
    %2377 = vmatpush1.msra.mxu0 0.0
    %2378 = vmatprep.subr.mxu0 0.0
    %2379 = vmatpush1.msra.mxu0 0.0
    %2380 = vmatprep.subr.mxu0 0.0
    %2381 = vmatpush1.msra.mxu0 0.0
    %2382 = vmatprep.subr.mxu0 0.0
    %2383 = vmatpush1.msra.mxu0 %v2350
    %2384 = vmatprep.subr.mxu0 0.0
    %2385 = vmatpush2.msra.mxu0 0.0
    %2386 = vmatprep.subr.mxu0 0.0
    %2387 = vmatpush2.msra.mxu0 0.0
    %2388 = vmatprep.subr.mxu0 0.0
    %2389 = vmatpush2.msra.mxu0 0.0
    %2390 = vmatprep.subr.mxu0 0.0
    %2391 = vmatpush2.msra.mxu0 0.0
    %2392 = vmatprep.subr.mxu0 0.0
    %2393 = vmatpush2.msra.mxu0 0.0
    %2394 = vmatprep.subr.mxu0 0.0
    %2395 = vmatpush2.msra.mxu0 0.0
    %2396 = vmatprep.subr.mxu0 0.0
    %2397 = vmatpush2.msra.mxu0 0.0
    %2398 = vmatprep.subr.mxu0 0.0
    %2399 = vmatpush2.msra.mxu0 0.0
    %2400 = vmatprep.subr.mxu0 0.0
    %2401 = vmatpush2.msra.mxu0 0.0
    %2402 = vmatprep.subr.mxu0 0.0
    %2403 = vmatpush2.msra.mxu0 0.0
    %2404 = vmatprep.subr.mxu0 0.0
    %2405 = vmatpush2.msra.mxu0 0.0
    %2406 = vmatprep.subr.mxu0 0.0
    %2407 = vmatpush2.msra.mxu0 0.0
    %2408 = vmatprep.subr.mxu0 0.0
    %2409 = vmatpush2.msra.mxu0 0.0
    %2410 = vmatprep.subr.mxu0 0.0
    %2411 = vmatpush2.msra.mxu0 0.0
    %2412 = vmatprep.subr.mxu0 0.0
    %2413 = vmatpush2.msra.mxu0 0.0
    %2414 = vmatprep.subr.mxu0 0.0
    %2415 = vmatpush2.msra.mxu0 0.0
    %2416 = vmatprep.mubr.f32.mxu0 0.0
    %2417 = vmatmul.mubr.f32.gmra.mxu0 %v2347
    %v2418 = vpop.f32.mrf.mxu0
    %v2419 = vadd.f32 0.0, %v2418
    %v2420 = vpop.f32.mrf.mxu0
    %2421 = vdwg.mxu0
    %v2423 = vsel %vm759, %v1892, 0
    %v2426 = vsel %vm2044, %v655, 0
    %2428 = vmatprep.subr.mxu0 0.0
    %2429 = vmatpush1.msra.mxu0 0.0
    %2430 = vmatprep.subr.mxu0 0.0
    %2431 = vmatpush1.msra.mxu0 0.0
    %2432 = vmatprep.subr.mxu0 0.0
    %2433 = vmatpush1.msra.mxu0 0.0
    %2434 = vmatprep.subr.mxu0 0.0
    %2435 = vmatpush1.msra.mxu0 0.0
    %2436 = vmatprep.subr.mxu0 0.0
    %2437 = vmatpush1.msra.mxu0 0.0
    %2438 = vmatprep.subr.mxu0 0.0
    %2439 = vmatpush1.msra.mxu0 0.0
    %2440 = vmatprep.subr.mxu0 0.0
    %2441 = vmatpush1.msra.mxu0 0.0
    %2442 = vmatprep.subr.mxu0 0.0
    %2443 = vmatpush1.msra.mxu0 0.0
    %2444 = vmatprep.subr.mxu0 0.0
    %2445 = vmatpush1.msra.mxu0 0.0
    %2446 = vmatprep.subr.mxu0 0.0
    %2447 = vmatpush1.msra.mxu0 0.0
    %2448 = vmatprep.subr.mxu0 0.0
    %2449 = vmatpush1.msra.mxu0 0.0
    %2450 = vmatprep.subr.mxu0 0.0
    %2451 = vmatpush1.msra.mxu0 0.0
    %2452 = vmatprep.subr.mxu0 0.0
    %2453 = vmatpush1.msra.mxu0 0.0
    %2454 = vmatprep.subr.mxu0 0.0
    %2455 = vmatpush1.msra.mxu0 0.0
    %2456 = vmatprep.subr.mxu0 0.0
    %2457 = vmatpush1.msra.mxu0 0.0
    %2458 = vmatprep.subr.mxu0 0.0
    %2459 = vmatpush1.msra.mxu0 %v2426
    %2460 = vmatprep.subr.mxu0 0.0
    %2461 = vmatpush2.msra.mxu0 0.0
    %2462 = vmatprep.subr.mxu0 0.0
    %2463 = vmatpush2.msra.mxu0 0.0
    %2464 = vmatprep.subr.mxu0 0.0
    %2465 = vmatpush2.msra.mxu0 0.0
    %2466 = vmatprep.subr.mxu0 0.0
    %2467 = vmatpush2.msra.mxu0 0.0
    %2468 = vmatprep.subr.mxu0 0.0
    %2469 = vmatpush2.msra.mxu0 0.0
    %2470 = vmatprep.subr.mxu0 0.0
    %2471 = vmatpush2.msra.mxu0 0.0
    %2472 = vmatprep.subr.mxu0 0.0
    %2473 = vmatpush2.msra.mxu0 0.0
    %2474 = vmatprep.subr.mxu0 0.0
    %2475 = vmatpush2.msra.mxu0 0.0
    %2476 = vmatprep.subr.mxu0 0.0
    %2477 = vmatpush2.msra.mxu0 0.0
    %2478 = vmatprep.subr.mxu0 0.0
    %2479 = vmatpush2.msra.mxu0 0.0
    %2480 = vmatprep.subr.mxu0 0.0
    %2481 = vmatpush2.msra.mxu0 0.0
    %2482 = vmatprep.subr.mxu0 0.0
    %2483 = vmatpush2.msra.mxu0 0.0
    %2484 = vmatprep.subr.mxu0 0.0
    %2485 = vmatpush2.msra.mxu0 0.0
    %2486 = vmatprep.subr.mxu0 0.0
    %2487 = vmatpush2.msra.mxu0 0.0
    %2488 = vmatprep.subr.mxu0 0.0
    %2489 = vmatpush2.msra.mxu0 0.0
    %2490 = vmatprep.subr.mxu0 0.0
    %2491 = vmatpush2.msra.mxu0 0.0
    %2492 = vmatprep.mubr.f32.mxu0 0.0
    %2493 = vmatmul.mubr.f32.gmra.mxu0 %v2423
    %v2494 = vpop.f32.mrf.mxu0
    %v2495 = vadd.f32 0.0, %v2494
    %v2496 = vpop.f32.mrf.mxu0
    %2497 = vdwg.mxu0
    %v2499 = vsel %vm759, %v1965, 0
    %v2502 = vsel %vm2044, %v656, 0
    %2504 = vmatprep.subr.mxu0 0.0
    %2505 = vmatpush1.msra.mxu0 0.0
    %2506 = vmatprep.subr.mxu0 0.0
    %2507 = vmatpush1.msra.mxu0 0.0
    %2508 = vmatprep.subr.mxu0 0.0
    %2509 = vmatpush1.msra.mxu0 0.0
    %2510 = vmatprep.subr.mxu0 0.0
    %2511 = vmatpush1.msra.mxu0 0.0
    %2512 = vmatprep.subr.mxu0 0.0
    %2513 = vmatpush1.msra.mxu0 0.0
    %2514 = vmatprep.subr.mxu0 0.0
    %2515 = vmatpush1.msra.mxu0 0.0
    %2516 = vmatprep.subr.mxu0 0.0
    %2517 = vmatpush1.msra.mxu0 0.0
    %2518 = vmatprep.subr.mxu0 0.0
    %2519 = vmatpush1.msra.mxu0 0.0
    %2520 = vmatprep.subr.mxu0 0.0
    %2521 = vmatpush1.msra.mxu0 0.0
    %2522 = vmatprep.subr.mxu0 0.0
    %2523 = vmatpush1.msra.mxu0 0.0
    %2524 = vmatprep.subr.mxu0 0.0
    %2525 = vmatpush1.msra.mxu0 0.0
    %2526 = vmatprep.subr.mxu0 0.0
    %2527 = vmatpush1.msra.mxu0 0.0
    %2528 = vmatprep.subr.mxu0 0.0
    %2529 = vmatpush1.msra.mxu0 0.0
    %2530 = vmatprep.subr.mxu0 0.0
    %2531 = vmatpush1.msra.mxu0 0.0
    %2532 = vmatprep.subr.mxu0 0.0
    %2533 = vmatpush1.msra.mxu0 0.0
    %2534 = vmatprep.subr.mxu0 0.0
    %2535 = vmatpush1.msra.mxu0 %v2502
    %2536 = vmatprep.subr.mxu0 0.0
    %2537 = vmatpush2.msra.mxu0 0.0
    %2538 = vmatprep.subr.mxu0 0.0
    %2539 = vmatpush2.msra.mxu0 0.0
    %2540 = vmatprep.subr.mxu0 0.0
    %2541 = vmatpush2.msra.mxu0 0.0
    %2542 = vmatprep.subr.mxu0 0.0
    %2543 = vmatpush2.msra.mxu0 0.0
    %2544 = vmatprep.subr.mxu0 0.0
    %2545 = vmatpush2.msra.mxu0 0.0
    %2546 = vmatprep.subr.mxu0 0.0
    %2547 = vmatpush2.msra.mxu0 0.0
    %2548 = vmatprep.subr.mxu0 0.0
    %2549 = vmatpush2.msra.mxu0 0.0
    %2550 = vmatprep.subr.mxu0 0.0
    %2551 = vmatpush2.msra.mxu0 0.0
    %2552 = vmatprep.subr.mxu0 0.0
    %2553 = vmatpush2.msra.mxu0 0.0
    %2554 = vmatprep.subr.mxu0 0.0
    %2555 = vmatpush2.msra.mxu0 0.0
    %2556 = vmatprep.subr.mxu0 0.0
    %2557 = vmatpush2.msra.mxu0 0.0
    %2558 = vmatprep.subr.mxu0 0.0
    %2559 = vmatpush2.msra.mxu0 0.0
    %2560 = vmatprep.subr.mxu0 0.0
    %2561 = vmatpush2.msra.mxu0 0.0
    %2562 = vmatprep.subr.mxu0 0.0
    %2563 = vmatpush2.msra.mxu0 0.0
    %2564 = vmatprep.subr.mxu0 0.0
    %2565 = vmatpush2.msra.mxu0 0.0
    %2566 = vmatprep.subr.mxu0 0.0
    %2567 = vmatpush2.msra.mxu0 0.0
    %2568 = vmatprep.mubr.f32.mxu0 0.0
    %2569 = vmatmul.mubr.f32.gmra.mxu0 %v2499
    %v2570 = vpop.f32.mrf.mxu0
    %v2571 = vadd.f32 0.0, %v2570
    %v2572 = vpop.f32.mrf.mxu0
    %2573 = vdwg.mxu0
    %v2575 = vsel %vm759, %v2038, 0
    %v2578 = vsel %vm2044, %v657, 0
    %2580 = vmatprep.subr.mxu0 0.0
    %2581 = vmatpush1.msra.mxu0 0.0
    %2582 = vmatprep.subr.mxu0 0.0
    %2583 = vmatpush1.msra.mxu0 0.0
    %2584 = vmatprep.subr.mxu0 0.0
    %2585 = vmatpush1.msra.mxu0 0.0
    %2586 = vmatprep.subr.mxu0 0.0
    %2587 = vmatpush1.msra.mxu0 0.0
    %2588 = vmatprep.subr.mxu0 0.0
    %2589 = vmatpush1.msra.mxu0 0.0
    %2590 = vmatprep.subr.mxu0 0.0
    %2591 = vmatpush1.msra.mxu0 0.0
    %2592 = vmatprep.subr.mxu0 0.0
    %2593 = vmatpush1.msra.mxu0 0.0
    %2594 = vmatprep.subr.mxu0 0.0
    %2595 = vmatpush1.msra.mxu0 0.0
    %2596 = vmatprep.subr.mxu0 0.0
    %2597 = vmatpush1.msra.mxu0 0.0
    %2598 = vmatprep.subr.mxu0 0.0
    %2599 = vmatpush1.msra.mxu0 0.0
    %2600 = vmatprep.subr.mxu0 0.0
    %2601 = vmatpush1.msra.mxu0 0.0
    %2602 = vmatprep.subr.mxu0 0.0
    %2603 = vmatpush1.msra.mxu0 0.0
    %2604 = vmatprep.subr.mxu0 0.0
    %2605 = vmatpush1.msra.mxu0 0.0
    %2606 = vmatprep.subr.mxu0 0.0
    %2607 = vmatpush1.msra.mxu0 0.0
    %2608 = vmatprep.subr.mxu0 0.0
    %2609 = vmatpush1.msra.mxu0 0.0
    %2610 = vmatprep.subr.mxu0 0.0
    %2611 = vmatpush1.msra.mxu0 %v2578
    %2612 = vmatprep.subr.mxu0 0.0
    %2613 = vmatpush2.msra.mxu0 0.0
    %2614 = vmatprep.subr.mxu0 0.0
    %2615 = vmatpush2.msra.mxu0 0.0
    %2616 = vmatprep.subr.mxu0 0.0
    %2617 = vmatpush2.msra.mxu0 0.0
    %2618 = vmatprep.subr.mxu0 0.0
    %2619 = vmatpush2.msra.mxu0 0.0
    %2620 = vmatprep.subr.mxu0 0.0
    %2621 = vmatpush2.msra.mxu0 0.0
    %2622 = vmatprep.subr.mxu0 0.0
    %2623 = vmatpush2.msra.mxu0 0.0
    %2624 = vmatprep.subr.mxu0 0.0
    %2625 = vmatpush2.msra.mxu0 0.0
    %2626 = vmatprep.subr.mxu0 0.0
    %2627 = vmatpush2.msra.mxu0 0.0
    %2628 = vmatprep.subr.mxu0 0.0
    %2629 = vmatpush2.msra.mxu0 0.0
    %2630 = vmatprep.subr.mxu0 0.0
    %2631 = vmatpush2.msra.mxu0 0.0
    %2632 = vmatprep.subr.mxu0 0.0
    %2633 = vmatpush2.msra.mxu0 0.0
    %2634 = vmatprep.subr.mxu0 0.0
    %2635 = vmatpush2.msra.mxu0 0.0
    %2636 = vmatprep.subr.mxu0 0.0
    %2637 = vmatpush2.msra.mxu0 0.0
    %2638 = vmatprep.subr.mxu0 0.0
    %2639 = vmatpush2.msra.mxu0 0.0
    %2640 = vmatprep.subr.mxu0 0.0
    %2641 = vmatpush2.msra.mxu0 0.0
    %2642 = vmatprep.subr.mxu0 0.0
    %2643 = vmatpush2.msra.mxu0 0.0
    %2644 = vmatprep.mubr.f32.mxu0 0.0
    %2645 = vmatmul.mubr.f32.gmra.mxu0 %v2575
    %v2646 = vpop.f32.mrf.mxu0
    %v2647 = vadd.f32 0.0, %v2646
    %v2648 = vpop.f32.mrf.mxu0
    %2649 = vdwg.mxu0
    %v2650 = vsel %vm164, %v2115, 0.0
    %v2651 = vsel %vm164, %v2191, 0.0
    %v2652 = vadd.f32 %v2650, %v2651
    %v2653 = vsel %vm164, %v2267, 0.0
    %v2654 = vadd.f32 %v2652, %v2653
    %v2655 = vsel %vm164, %v2343, 0.0
    %v2656 = vadd.f32 %v2654, %v2655
    %v2657 = vsel %vm164, %v2419, 0.0
    %v2658 = vadd.f32 %v2656, %v2657
    %v2659 = vsel %vm164, %v2495, 0.0
    %v2660 = vadd.f32 %v2658, %v2659
    %v2661 = vsel %vm164, %v2571, 0.0
    %v2662 = vadd.f32 %v2660, %v2661
    %v2663 = vsel %vm164, %v2647, 0.0
    %v2664 = vadd.f32 %v2662, %v2663
    %v2666 = vlaneseq
    %v2667 = vshrl.u32 %v2666, 7
    %v2668 = vsub.s32 0, %v2667
    %v2669 = vrot.slane %v658, %v2668
    %v2671 = vadd.f32 %v2664, %v2669
    %v2672 = vmul.f32 %v641, %v707
    %v2673 = vmul.f32 %v641, %v711
    %v2674 = vmul.f32 %v641, %v715
    %v2675 = vmul.f32 %v641, %v719
    %v2676 = vmul.f32 %v641, %v723
    %v2677 = vmul.f32 %v641, %v727
    %v2678 = vmul.f32 %v641, %v731
    %v2679 = vmul.f32 %v641, %v735
    %v2681 = vlaneseq
    %v2682 = vshrl.u32 %v2681, 7
    %v2683 = vsub.s32 0, %v2682
    %v2684 = vrot.slane %v664, %v2683
    %v2686 = vadd.f32 %v2672, %v2684
    %v2687 = vadd.f32 %v2673, %v2684
    %v2688 = vadd.f32 %v2674, %v2684
    %v2689 = vadd.f32 %v2675, %v2684
    %v2690 = vadd.f32 %v2676, %v2684
    %v2691 = vadd.f32 %v2677, %v2684
    %v2692 = vadd.f32 %v2678, %v2684
    %v2693 = vadd.f32 %v2679, %v2684
    %v2694 = vsel %vm759, %v243, 0
    %v2696 = vsel %vm759, %v346, 0
    %v2698 = vsel %vm759, %v351, 0
    %2700 = vmatprep.subr.mxu0 0.0
    %2701 = vmatpush1.xpose.msra.mxu0 0.0
    %2702 = vmatprep.subr.mxu0 0.0
    %2703 = vmatpush1.xpose.msra.mxu0 0.0
    %2704 = vmatprep.subr.mxu0 0.0
    %2705 = vmatpush1.xpose.msra.mxu0 0.0
    %2706 = vmatprep.subr.mxu0 0.0
    %2707 = vmatpush1.xpose.msra.mxu0 0.0
    %2708 = vmatprep.subr.mxu0 0.0
    %2709 = vmatpush1.xpose.msra.mxu0 0.0
    %2710 = vmatprep.subr.mxu0 0.0
    %2711 = vmatpush1.xpose.msra.mxu0 0.0
    %2712 = vmatprep.subr.mxu0 0.0
    %2713 = vmatpush1.xpose.msra.mxu0 0.0
    %2714 = vmatprep.subr.mxu0 0.0
    %2715 = vmatpush1.xpose.msra.mxu0 0.0
    %2716 = vmatprep.subr.mxu0 0.0
    %2717 = vmatpush1.xpose.msra.mxu0 0.0
    %2718 = vmatprep.subr.mxu0 0.0
    %2719 = vmatpush1.xpose.msra.mxu0 0.0
    %2720 = vmatprep.subr.mxu0 0.0
    %2721 = vmatpush1.xpose.msra.mxu0 0.0
    %2722 = vmatprep.subr.mxu0 0.0
    %2723 = vmatpush1.xpose.msra.mxu0 0.0
    %2724 = vmatprep.subr.mxu0 0.0
    %2725 = vmatpush1.xpose.msra.mxu0 0.0
    %2726 = vmatprep.subr.mxu0 0.0
    %2727 = vmatpush1.xpose.msra.mxu0 0.0
    %2728 = vmatprep.subr.mxu0 0.0
    %2729 = vmatpush1.xpose.msra.mxu0 %v2698
    %2730 = vmatprep.subr.mxu0 0.0
    %2731 = vmatpush1.xpose.msra.mxu0 %v2696
    %2732 = vmatprep.subr.mxu0 0.0
    %2733 = vmatpush2.xpose.msra.mxu0 0.0
    %2734 = vmatprep.subr.mxu0 0.0
    %2735 = vmatpush2.xpose.msra.mxu0 0.0
    %2736 = vmatprep.subr.mxu0 0.0
    %2737 = vmatpush2.xpose.msra.mxu0 0.0
    %2738 = vmatprep.subr.mxu0 0.0
    %2739 = vmatpush2.xpose.msra.mxu0 0.0
    %2740 = vmatprep.subr.mxu0 0.0
    %2741 = vmatpush2.xpose.msra.mxu0 0.0
    %2742 = vmatprep.subr.mxu0 0.0
    %2743 = vmatpush2.xpose.msra.mxu0 0.0
    %2744 = vmatprep.subr.mxu0 0.0
    %2745 = vmatpush2.xpose.msra.mxu0 0.0
    %2746 = vmatprep.subr.mxu0 0.0
    %2747 = vmatpush2.xpose.msra.mxu0 0.0
    %2748 = vmatprep.subr.mxu0 0.0
    %2749 = vmatpush2.xpose.msra.mxu0 0.0
    %2750 = vmatprep.subr.mxu0 0.0
    %2751 = vmatpush2.xpose.msra.mxu0 0.0
    %2752 = vmatprep.subr.mxu0 0.0
    %2753 = vmatpush2.xpose.msra.mxu0 0.0
    %2754 = vmatprep.subr.mxu0 0.0
    %2755 = vmatpush2.xpose.msra.mxu0 0.0
    %2756 = vmatprep.subr.mxu0 0.0
    %2757 = vmatpush2.xpose.msra.mxu0 0.0
    %2758 = vmatprep.subr.mxu0 0.0
    %2759 = vmatpush2.xpose.msra.mxu0 0.0
    %2760 = vmatprep.subr.mxu0 0.0
    %2761 = vmatpush2.xpose.msra.mxu0 0.0
    %2762 = vmatprep.subr.mxu0 0.0
    %2763 = vmatpush2.xpose.msra.mxu0 0.0
    %2764 = vmatprep.mubr.f32.mxu0 0.0
    %2765 = vmatmul.mubr.f32.gmra.mxu0 %v2694
    %v2766 = vpop.f32.mrf.mxu0
    %v2767 = vadd.f32 %v2686, %v2766
    %v2768 = vpop.f32.mrf.mxu0
    %2769 = vdwg.mxu0
    %v2770 = vsel %vm759, %v467, 0
    %v2772 = vsel %vm759, %v501, 0
    %v2774 = vsel %vm759, %v503, 0
    %2776 = vmatprep.subr.mxu0 0.0
    %2777 = vmatpush1.xpose.msra.mxu0 0.0
    %2778 = vmatprep.subr.mxu0 0.0
    %2779 = vmatpush1.xpose.msra.mxu0 0.0
    %2780 = vmatprep.subr.mxu0 0.0
    %2781 = vmatpush1.xpose.msra.mxu0 0.0
    %2782 = vmatprep.subr.mxu0 0.0
    %2783 = vmatpush1.xpose.msra.mxu0 0.0
    %2784 = vmatprep.subr.mxu0 0.0
    %2785 = vmatpush1.xpose.msra.mxu0 0.0
    %2786 = vmatprep.subr.mxu0 0.0
    %2787 = vmatpush1.xpose.msra.mxu0 0.0
    %2788 = vmatprep.subr.mxu0 0.0
    %2789 = vmatpush1.xpose.msra.mxu0 0.0
    %2790 = vmatprep.subr.mxu0 0.0
    %2791 = vmatpush1.xpose.msra.mxu0 0.0
    %2792 = vmatprep.subr.mxu0 0.0
    %2793 = vmatpush1.xpose.msra.mxu0 0.0
    %2794 = vmatprep.subr.mxu0 0.0
    %2795 = vmatpush1.xpose.msra.mxu0 0.0
    %2796 = vmatprep.subr.mxu0 0.0
    %2797 = vmatpush1.xpose.msra.mxu0 0.0
    %2798 = vmatprep.subr.mxu0 0.0
    %2799 = vmatpush1.xpose.msra.mxu0 0.0
    %2800 = vmatprep.subr.mxu0 0.0
    %2801 = vmatpush1.xpose.msra.mxu0 0.0
    %2802 = vmatprep.subr.mxu0 0.0
    %2803 = vmatpush1.xpose.msra.mxu0 0.0
    %2804 = vmatprep.subr.mxu0 0.0
    %2805 = vmatpush1.xpose.msra.mxu0 %v2774
    %2806 = vmatprep.subr.mxu0 0.0
    %2807 = vmatpush1.xpose.msra.mxu0 %v2772
    %2808 = vmatprep.subr.mxu0 0.0
    %2809 = vmatpush2.xpose.msra.mxu0 0.0
    %2810 = vmatprep.subr.mxu0 0.0
    %2811 = vmatpush2.xpose.msra.mxu0 0.0
    %2812 = vmatprep.subr.mxu0 0.0
    %2813 = vmatpush2.xpose.msra.mxu0 0.0
    %2814 = vmatprep.subr.mxu0 0.0
    %2815 = vmatpush2.xpose.msra.mxu0 0.0
    %2816 = vmatprep.subr.mxu0 0.0
    %2817 = vmatpush2.xpose.msra.mxu0 0.0
    %2818 = vmatprep.subr.mxu0 0.0
    %2819 = vmatpush2.xpose.msra.mxu0 0.0
    %2820 = vmatprep.subr.mxu0 0.0
    %2821 = vmatpush2.xpose.msra.mxu0 0.0
    %2822 = vmatprep.subr.mxu0 0.0
    %2823 = vmatpush2.xpose.msra.mxu0 0.0
    %2824 = vmatprep.subr.mxu0 0.0
    %2825 = vmatpush2.xpose.msra.mxu0 0.0
    %2826 = vmatprep.subr.mxu0 0.0
    %2827 = vmatpush2.xpose.msra.mxu0 0.0
    %2828 = vmatprep.subr.mxu0 0.0
    %2829 = vmatpush2.xpose.msra.mxu0 0.0
    %2830 = vmatprep.subr.mxu0 0.0
    %2831 = vmatpush2.xpose.msra.mxu0 0.0
    %2832 = vmatprep.subr.mxu0 0.0
    %2833 = vmatpush2.xpose.msra.mxu0 0.0
    %2834 = vmatprep.subr.mxu0 0.0
    %2835 = vmatpush2.xpose.msra.mxu0 0.0
    %2836 = vmatprep.subr.mxu0 0.0
    %2837 = vmatpush2.xpose.msra.mxu0 0.0
    %2838 = vmatprep.subr.mxu0 0.0
    %2839 = vmatpush2.xpose.msra.mxu0 0.0
    %2840 = vmatprep.mubr.f32.mxu0 0.0
    %2841 = vmatmul.mubr.f32.gmra.mxu0 %v2770
    %v2842 = vpop.f32.mrf.mxu0
    %v2843 = vadd.f32 %v2687, %v2842
    %v2844 = vpop.f32.mrf.mxu0
    %2845 = vdwg.mxu0
    %v2846 = vsel %vm759, %v471, 0
    %v2848 = vsel %vm759, %v509, 0
    %v2850 = vsel %vm759, %v511, 0
    %2852 = vmatprep.subr.mxu0 0.0
    %2853 = vmatpush1.xpose.msra.mxu0 0.0
    %2854 = vmatprep.subr.mxu0 0.0
    %2855 = vmatpush1.xpose.msra.mxu0 0.0
    %2856 = vmatprep.subr.mxu0 0.0
    %2857 = vmatpush1.xpose.msra.mxu0 0.0
    %2858 = vmatprep.subr.mxu0 0.0
    %2859 = vmatpush1.xpose.msra.mxu0 0.0
    %2860 = vmatprep.subr.mxu0 0.0
    %2861 = vmatpush1.xpose.msra.mxu0 0.0
    %2862 = vmatprep.subr.mxu0 0.0
    %2863 = vmatpush1.xpose.msra.mxu0 0.0
    %2864 = vmatprep.subr.mxu0 0.0
    %2865 = vmatpush1.xpose.msra.mxu0 0.0
    %2866 = vmatprep.subr.mxu0 0.0
    %2867 = vmatpush1.xpose.msra.mxu0 0.0
    %2868 = vmatprep.subr.mxu0 0.0
    %2869 = vmatpush1.xpose.msra.mxu0 0.0
    %2870 = vmatprep.subr.mxu0 0.0
    %2871 = vmatpush1.xpose.msra.mxu0 0.0
    %2872 = vmatprep.subr.mxu0 0.0
    %2873 = vmatpush1.xpose.msra.mxu0 0.0
    %2874 = vmatprep.subr.mxu0 0.0
    %2875 = vmatpush1.xpose.msra.mxu0 0.0
    %2876 = vmatprep.subr.mxu0 0.0
    %2877 = vmatpush1.xpose.msra.mxu0 0.0
    %2878 = vmatprep.subr.mxu0 0.0
    %2879 = vmatpush1.xpose.msra.mxu0 0.0
    %2880 = vmatprep.subr.mxu0 0.0
    %2881 = vmatpush1.xpose.msra.mxu0 %v2850
    %2882 = vmatprep.subr.mxu0 0.0
    %2883 = vmatpush1.xpose.msra.mxu0 %v2848
    %2884 = vmatprep.subr.mxu0 0.0
    %2885 = vmatpush2.xpose.msra.mxu0 0.0
    %2886 = vmatprep.subr.mxu0 0.0
    %2887 = vmatpush2.xpose.msra.mxu0 0.0
    %2888 = vmatprep.subr.mxu0 0.0
    %2889 = vmatpush2.xpose.msra.mxu0 0.0
    %2890 = vmatprep.subr.mxu0 0.0
    %2891 = vmatpush2.xpose.msra.mxu0 0.0
    %2892 = vmatprep.subr.mxu0 0.0
    %2893 = vmatpush2.xpose.msra.mxu0 0.0
    %2894 = vmatprep.subr.mxu0 0.0
    %2895 = vmatpush2.xpose.msra.mxu0 0.0
    %2896 = vmatprep.subr.mxu0 0.0
    %2897 = vmatpush2.xpose.msra.mxu0 0.0
    %2898 = vmatprep.subr.mxu0 0.0
    %2899 = vmatpush2.xpose.msra.mxu0 0.0
    %2900 = vmatprep.subr.mxu0 0.0
    %2901 = vmatpush2.xpose.msra.mxu0 0.0
    %2902 = vmatprep.subr.mxu0 0.0
    %2903 = vmatpush2.xpose.msra.mxu0 0.0
    %2904 = vmatprep.subr.mxu0 0.0
    %2905 = vmatpush2.xpose.msra.mxu0 0.0
    %2906 = vmatprep.subr.mxu0 0.0
    %2907 = vmatpush2.xpose.msra.mxu0 0.0
    %2908 = vmatprep.subr.mxu0 0.0
    %2909 = vmatpush2.xpose.msra.mxu0 0.0
    %2910 = vmatprep.subr.mxu0 0.0
    %2911 = vmatpush2.xpose.msra.mxu0 0.0
    %2912 = vmatprep.subr.mxu0 0.0
    %2913 = vmatpush2.xpose.msra.mxu0 0.0
    %2914 = vmatprep.subr.mxu0 0.0
    %2915 = vmatpush2.xpose.msra.mxu0 0.0
    %2916 = vmatprep.mubr.f32.mxu0 0.0
    %2917 = vmatmul.mubr.f32.gmra.mxu0 %v2846
    %v2918 = vpop.f32.mrf.mxu0
    %v2919 = vadd.f32 %v2688, %v2918
    %v2920 = vpop.f32.mrf.mxu0
    %2921 = vdwg.mxu0
    %v2922 = vsel %vm759, %v475, 0
    %v2924 = vsel %vm759, %v517, 0
    %v2926 = vsel %vm759, %v519, 0
    %2928 = vmatprep.subr.mxu0 0.0
    %2929 = vmatpush1.xpose.msra.mxu0 0.0
    %2930 = vmatprep.subr.mxu0 0.0
    %2931 = vmatpush1.xpose.msra.mxu0 0.0
    %2932 = vmatprep.subr.mxu0 0.0
    %2933 = vmatpush1.xpose.msra.mxu0 0.0
    %2934 = vmatprep.subr.mxu0 0.0
    %2935 = vmatpush1.xpose.msra.mxu0 0.0
    %2936 = vmatprep.subr.mxu0 0.0
    %2937 = vmatpush1.xpose.msra.mxu0 0.0
    %2938 = vmatprep.subr.mxu0 0.0
    %2939 = vmatpush1.xpose.msra.mxu0 0.0
    %2940 = vmatprep.subr.mxu0 0.0
    %2941 = vmatpush1.xpose.msra.mxu0 0.0
    %2942 = vmatprep.subr.mxu0 0.0
    %2943 = vmatpush1.xpose.msra.mxu0 0.0
    %2944 = vmatprep.subr.mxu0 0.0
    %2945 = vmatpush1.xpose.msra.mxu0 0.0
    %2946 = vmatprep.subr.mxu0 0.0
    %2947 = vmatpush1.xpose.msra.mxu0 0.0
    %2948 = vmatprep.subr.mxu0 0.0
    %2949 = vmatpush1.xpose.msra.mxu0 0.0
    %2950 = vmatprep.subr.mxu0 0.0
    %2951 = vmatpush1.xpose.msra.mxu0 0.0
    %2952 = vmatprep.subr.mxu0 0.0
    %2953 = vmatpush1.xpose.msra.mxu0 0.0
    %2954 = vmatprep.subr.mxu0 0.0
    %2955 = vmatpush1.xpose.msra.mxu0 0.0
    %2956 = vmatprep.subr.mxu0 0.0
    %2957 = vmatpush1.xpose.msra.mxu0 %v2926
    %2958 = vmatprep.subr.mxu0 0.0
    %2959 = vmatpush1.xpose.msra.mxu0 %v2924
    %2960 = vmatprep.subr.mxu0 0.0
    %2961 = vmatpush2.xpose.msra.mxu0 0.0
    %2962 = vmatprep.subr.mxu0 0.0
    %2963 = vmatpush2.xpose.msra.mxu0 0.0
    %2964 = vmatprep.subr.mxu0 0.0
    %2965 = vmatpush2.xpose.msra.mxu0 0.0
    %2966 = vmatprep.subr.mxu0 0.0
    %2967 = vmatpush2.xpose.msra.mxu0 0.0
    %2968 = vmatprep.subr.mxu0 0.0
    %2969 = vmatpush2.xpose.msra.mxu0 0.0
    %2970 = vmatprep.subr.mxu0 0.0
    %2971 = vmatpush2.xpose.msra.mxu0 0.0
    %2972 = vmatprep.subr.mxu0 0.0
    %2973 = vmatpush2.xpose.msra.mxu0 0.0
    %2974 = vmatprep.subr.mxu0 0.0
    %2975 = vmatpush2.xpose.msra.mxu0 0.0
    %2976 = vmatprep.subr.mxu0 0.0
    %2977 = vmatpush2.xpose.msra.mxu0 0.0
    %2978 = vmatprep.subr.mxu0 0.0
    %2979 = vmatpush2.xpose.msra.mxu0 0.0
    %2980 = vmatprep.subr.mxu0 0.0
    %2981 = vmatpush2.xpose.msra.mxu0 0.0
    %2982 = vmatprep.subr.mxu0 0.0
    %2983 = vmatpush2.xpose.msra.mxu0 0.0
    %2984 = vmatprep.subr.mxu0 0.0
    %2985 = vmatpush2.xpose.msra.mxu0 0.0
    %2986 = vmatprep.subr.mxu0 0.0
    %2987 = vmatpush2.xpose.msra.mxu0 0.0
    %2988 = vmatprep.subr.mxu0 0.0
    %2989 = vmatpush2.xpose.msra.mxu0 0.0
    %2990 = vmatprep.subr.mxu0 0.0
    %2991 = vmatpush2.xpose.msra.mxu0 0.0
    %2992 = vmatprep.mubr.f32.mxu0 0.0
    %2993 = vmatmul.mubr.f32.gmra.mxu0 %v2922
    %v2994 = vpop.f32.mrf.mxu0
    %v2995 = vadd.f32 %v2689, %v2994
    %v2996 = vpop.f32.mrf.mxu0
    %2997 = vdwg.mxu0
    %v2998 = vsel %vm759, %v479, 0
    %v3000 = vsel %vm759, %v525, 0
    %v3002 = vsel %vm759, %v527, 0
    %3004 = vmatprep.subr.mxu0 0.0
    %3005 = vmatpush1.xpose.msra.mxu0 0.0
    %3006 = vmatprep.subr.mxu0 0.0
    %3007 = vmatpush1.xpose.msra.mxu0 0.0
    %3008 = vmatprep.subr.mxu0 0.0
    %3009 = vmatpush1.xpose.msra.mxu0 0.0
    %3010 = vmatprep.subr.mxu0 0.0
    %3011 = vmatpush1.xpose.msra.mxu0 0.0
    %3012 = vmatprep.subr.mxu0 0.0
    %3013 = vmatpush1.xpose.msra.mxu0 0.0
    %3014 = vmatprep.subr.mxu0 0.0
    %3015 = vmatpush1.xpose.msra.mxu0 0.0
    %3016 = vmatprep.subr.mxu0 0.0
    %3017 = vmatpush1.xpose.msra.mxu0 0.0
    %3018 = vmatprep.subr.mxu0 0.0
    %3019 = vmatpush1.xpose.msra.mxu0 0.0
    %3020 = vmatprep.subr.mxu0 0.0
    %3021 = vmatpush1.xpose.msra.mxu0 0.0
    %3022 = vmatprep.subr.mxu0 0.0
    %3023 = vmatpush1.xpose.msra.mxu0 0.0
    %3024 = vmatprep.subr.mxu0 0.0
    %3025 = vmatpush1.xpose.msra.mxu0 0.0
    %3026 = vmatprep.subr.mxu0 0.0
    %3027 = vmatpush1.xpose.msra.mxu0 0.0
    %3028 = vmatprep.subr.mxu0 0.0
    %3029 = vmatpush1.xpose.msra.mxu0 0.0
    %3030 = vmatprep.subr.mxu0 0.0
    %3031 = vmatpush1.xpose.msra.mxu0 0.0
    %3032 = vmatprep.subr.mxu0 0.0
    %3033 = vmatpush1.xpose.msra.mxu0 %v3002
    %3034 = vmatprep.subr.mxu0 0.0
    %3035 = vmatpush1.xpose.msra.mxu0 %v3000
    %3036 = vmatprep.subr.mxu0 0.0
    %3037 = vmatpush2.xpose.msra.mxu0 0.0
    %3038 = vmatprep.subr.mxu0 0.0
    %3039 = vmatpush2.xpose.msra.mxu0 0.0
    %3040 = vmatprep.subr.mxu0 0.0
    %3041 = vmatpush2.xpose.msra.mxu0 0.0
    %3042 = vmatprep.subr.mxu0 0.0
    %3043 = vmatpush2.xpose.msra.mxu0 0.0
    %3044 = vmatprep.subr.mxu0 0.0
    %3045 = vmatpush2.xpose.msra.mxu0 0.0
    %3046 = vmatprep.subr.mxu0 0.0
    %3047 = vmatpush2.xpose.msra.mxu0 0.0
    %3048 = vmatprep.subr.mxu0 0.0
    %3049 = vmatpush2.xpose.msra.mxu0 0.0
    %3050 = vmatprep.subr.mxu0 0.0
    %3051 = vmatpush2.xpose.msra.mxu0 0.0
    %3052 = vmatprep.subr.mxu0 0.0
    %3053 = vmatpush2.xpose.msra.mxu0 0.0
    %3054 = vmatprep.subr.mxu0 0.0
    %3055 = vmatpush2.xpose.msra.mxu0 0.0
    %3056 = vmatprep.subr.mxu0 0.0
    %3057 = vmatpush2.xpose.msra.mxu0 0.0
    %3058 = vmatprep.subr.mxu0 0.0
    %3059 = vmatpush2.xpose.msra.mxu0 0.0
    %3060 = vmatprep.subr.mxu0 0.0
    %3061 = vmatpush2.xpose.msra.mxu0 0.0
    %3062 = vmatprep.subr.mxu0 0.0
    %3063 = vmatpush2.xpose.msra.mxu0 0.0
    %3064 = vmatprep.subr.mxu0 0.0
    %3065 = vmatpush2.xpose.msra.mxu0 0.0
    %3066 = vmatprep.subr.mxu0 0.0
    %3067 = vmatpush2.xpose.msra.mxu0 0.0
    %3068 = vmatprep.mubr.f32.mxu0 0.0
    %3069 = vmatmul.mubr.f32.gmra.mxu0 %v2998
    %v3070 = vpop.f32.mrf.mxu0
    %v3071 = vadd.f32 %v2690, %v3070
    %v3072 = vpop.f32.mrf.mxu0
    %3073 = vdwg.mxu0
    %v3074 = vsel %vm759, %v483, 0
    %v3076 = vsel %vm759, %v533, 0
    %v3078 = vsel %vm759, %v535, 0
    %3080 = vmatprep.subr.mxu0 0.0
    %3081 = vmatpush1.xpose.msra.mxu0 0.0
    %3082 = vmatprep.subr.mxu0 0.0
    %3083 = vmatpush1.xpose.msra.mxu0 0.0
    %3084 = vmatprep.subr.mxu0 0.0
    %3085 = vmatpush1.xpose.msra.mxu0 0.0
    %3086 = vmatprep.subr.mxu0 0.0
    %3087 = vmatpush1.xpose.msra.mxu0 0.0
    %3088 = vmatprep.subr.mxu0 0.0
    %3089 = vmatpush1.xpose.msra.mxu0 0.0
    %3090 = vmatprep.subr.mxu0 0.0
    %3091 = vmatpush1.xpose.msra.mxu0 0.0
    %3092 = vmatprep.subr.mxu0 0.0
    %3093 = vmatpush1.xpose.msra.mxu0 0.0
    %3094 = vmatprep.subr.mxu0 0.0
    %3095 = vmatpush1.xpose.msra.mxu0 0.0
    %3096 = vmatprep.subr.mxu0 0.0
    %3097 = vmatpush1.xpose.msra.mxu0 0.0
    %3098 = vmatprep.subr.mxu0 0.0
    %3099 = vmatpush1.xpose.msra.mxu0 0.0
    %3100 = vmatprep.subr.mxu0 0.0
    %3101 = vmatpush1.xpose.msra.mxu0 0.0
    %3102 = vmatprep.subr.mxu0 0.0
    %3103 = vmatpush1.xpose.msra.mxu0 0.0
    %3104 = vmatprep.subr.mxu0 0.0
    %3105 = vmatpush1.xpose.msra.mxu0 0.0
    %3106 = vmatprep.subr.mxu0 0.0
    %3107 = vmatpush1.xpose.msra.mxu0 0.0
    %3108 = vmatprep.subr.mxu0 0.0
    %3109 = vmatpush1.xpose.msra.mxu0 %v3078
    %3110 = vmatprep.subr.mxu0 0.0
    %3111 = vmatpush1.xpose.msra.mxu0 %v3076
    %3112 = vmatprep.subr.mxu0 0.0
    %3113 = vmatpush2.xpose.msra.mxu0 0.0
    %3114 = vmatprep.subr.mxu0 0.0
    %3115 = vmatpush2.xpose.msra.mxu0 0.0
    %3116 = vmatprep.subr.mxu0 0.0
    %3117 = vmatpush2.xpose.msra.mxu0 0.0
    %3118 = vmatprep.subr.mxu0 0.0
    %3119 = vmatpush2.xpose.msra.mxu0 0.0
    %3120 = vmatprep.subr.mxu0 0.0
    %3121 = vmatpush2.xpose.msra.mxu0 0.0
    %3122 = vmatprep.subr.mxu0 0.0
    %3123 = vmatpush2.xpose.msra.mxu0 0.0
    %3124 = vmatprep.subr.mxu0 0.0
    %3125 = vmatpush2.xpose.msra.mxu0 0.0
    %3126 = vmatprep.subr.mxu0 0.0
    %3127 = vmatpush2.xpose.msra.mxu0 0.0
    %3128 = vmatprep.subr.mxu0 0.0
    %3129 = vmatpush2.xpose.msra.mxu0 0.0
    %3130 = vmatprep.subr.mxu0 0.0
    %3131 = vmatpush2.xpose.msra.mxu0 0.0
    %3132 = vmatprep.subr.mxu0 0.0
    %3133 = vmatpush2.xpose.msra.mxu0 0.0
    %3134 = vmatprep.subr.mxu0 0.0
    %3135 = vmatpush2.xpose.msra.mxu0 0.0
    %3136 = vmatprep.subr.mxu0 0.0
    %3137 = vmatpush2.xpose.msra.mxu0 0.0
    %3138 = vmatprep.subr.mxu0 0.0
    %3139 = vmatpush2.xpose.msra.mxu0 0.0
    %3140 = vmatprep.subr.mxu0 0.0
    %3141 = vmatpush2.xpose.msra.mxu0 0.0
    %3142 = vmatprep.subr.mxu0 0.0
    %3143 = vmatpush2.xpose.msra.mxu0 0.0
    %3144 = vmatprep.mubr.f32.mxu0 0.0
    %3145 = vmatmul.mubr.f32.gmra.mxu0 %v3074
    %v3146 = vpop.f32.mrf.mxu0
    %v3147 = vadd.f32 %v2691, %v3146
    %v3148 = vpop.f32.mrf.mxu0
    %3149 = vdwg.mxu0
    %v3150 = vsel %vm759, %v487, 0
    %v3152 = vsel %vm759, %v541, 0
    %v3154 = vsel %vm759, %v543, 0
    %3156 = vmatprep.subr.mxu0 0.0
    %3157 = vmatpush1.xpose.msra.mxu0 0.0
    %3158 = vmatprep.subr.mxu0 0.0
    %3159 = vmatpush1.xpose.msra.mxu0 0.0
    %3160 = vmatprep.subr.mxu0 0.0
    %3161 = vmatpush1.xpose.msra.mxu0 0.0
    %3162 = vmatprep.subr.mxu0 0.0
    %3163 = vmatpush1.xpose.msra.mxu0 0.0
    %3164 = vmatprep.subr.mxu0 0.0
    %3165 = vmatpush1.xpose.msra.mxu0 0.0
    %3166 = vmatprep.subr.mxu0 0.0
    %3167 = vmatpush1.xpose.msra.mxu0 0.0
    %3168 = vmatprep.subr.mxu0 0.0
    %3169 = vmatpush1.xpose.msra.mxu0 0.0
    %3170 = vmatprep.subr.mxu0 0.0
    %3171 = vmatpush1.xpose.msra.mxu0 0.0
    %3172 = vmatprep.subr.mxu0 0.0
    %3173 = vmatpush1.xpose.msra.mxu0 0.0
    %3174 = vmatprep.subr.mxu0 0.0
    %3175 = vmatpush1.xpose.msra.mxu0 0.0
    %3176 = vmatprep.subr.mxu0 0.0
    %3177 = vmatpush1.xpose.msra.mxu0 0.0
    %3178 = vmatprep.subr.mxu0 0.0
    %3179 = vmatpush1.xpose.msra.mxu0 0.0
    %3180 = vmatprep.subr.mxu0 0.0
    %3181 = vmatpush1.xpose.msra.mxu0 0.0
    %3182 = vmatprep.subr.mxu0 0.0
    %3183 = vmatpush1.xpose.msra.mxu0 0.0
    %3184 = vmatprep.subr.mxu0 0.0
    %3185 = vmatpush1.xpose.msra.mxu0 %v3154
    %3186 = vmatprep.subr.mxu0 0.0
    %3187 = vmatpush1.xpose.msra.mxu0 %v3152
    %3188 = vmatprep.subr.mxu0 0.0
    %3189 = vmatpush2.xpose.msra.mxu0 0.0
    %3190 = vmatprep.subr.mxu0 0.0
    %3191 = vmatpush2.xpose.msra.mxu0 0.0
    %3192 = vmatprep.subr.mxu0 0.0
    %3193 = vmatpush2.xpose.msra.mxu0 0.0
    %3194 = vmatprep.subr.mxu0 0.0
    %3195 = vmatpush2.xpose.msra.mxu0 0.0
    %3196 = vmatprep.subr.mxu0 0.0
    %3197 = vmatpush2.xpose.msra.mxu0 0.0
    %3198 = vmatprep.subr.mxu0 0.0
    %3199 = vmatpush2.xpose.msra.mxu0 0.0
    %3200 = vmatprep.subr.mxu0 0.0
    %3201 = vmatpush2.xpose.msra.mxu0 0.0
    %3202 = vmatprep.subr.mxu0 0.0
    %3203 = vmatpush2.xpose.msra.mxu0 0.0
    %3204 = vmatprep.subr.mxu0 0.0
    %3205 = vmatpush2.xpose.msra.mxu0 0.0
    %3206 = vmatprep.subr.mxu0 0.0
    %3207 = vmatpush2.xpose.msra.mxu0 0.0
    %3208 = vmatprep.subr.mxu0 0.0
    %3209 = vmatpush2.xpose.msra.mxu0 0.0
    %3210 = vmatprep.subr.mxu0 0.0
    %3211 = vmatpush2.xpose.msra.mxu0 0.0
    %3212 = vmatprep.subr.mxu0 0.0
    %3213 = vmatpush2.xpose.msra.mxu0 0.0
    %3214 = vmatprep.subr.mxu0 0.0
    %3215 = vmatpush2.xpose.msra.mxu0 0.0
    %3216 = vmatprep.subr.mxu0 0.0
    %3217 = vmatpush2.xpose.msra.mxu0 0.0
    %3218 = vmatprep.subr.mxu0 0.0
    %3219 = vmatpush2.xpose.msra.mxu0 0.0
    %3220 = vmatprep.mubr.f32.mxu0 0.0
    %3221 = vmatmul.mubr.f32.gmra.mxu0 %v3150
    %v3222 = vpop.f32.mrf.mxu0
    %v3223 = vadd.f32 %v2692, %v3222
    %v3224 = vpop.f32.mrf.mxu0
    %3225 = vdwg.mxu0
    %v3226 = vsel %vm759, %v491, 0
    %v3228 = vsel %vm759, %v549, 0
    %v3230 = vsel %vm759, %v551, 0
    %3232 = vmatprep.subr.mxu0 0.0
    %3233 = vmatpush1.xpose.msra.mxu0 0.0
    %3234 = vmatprep.subr.mxu0 0.0
    %3235 = vmatpush1.xpose.msra.mxu0 0.0
    %3236 = vmatprep.subr.mxu0 0.0
    %3237 = vmatpush1.xpose.msra.mxu0 0.0
    %3238 = vmatprep.subr.mxu0 0.0
    %3239 = vmatpush1.xpose.msra.mxu0 0.0
    %3240 = vmatprep.subr.mxu0 0.0
    %3241 = vmatpush1.xpose.msra.mxu0 0.0
    %3242 = vmatprep.subr.mxu0 0.0
    %3243 = vmatpush1.xpose.msra.mxu0 0.0
    %3244 = vmatprep.subr.mxu0 0.0
    %3245 = vmatpush1.xpose.msra.mxu0 0.0
    %3246 = vmatprep.subr.mxu0 0.0
    %3247 = vmatpush1.xpose.msra.mxu0 0.0
    %3248 = vmatprep.subr.mxu0 0.0
    %3249 = vmatpush1.xpose.msra.mxu0 0.0
    %3250 = vmatprep.subr.mxu0 0.0
    %3251 = vmatpush1.xpose.msra.mxu0 0.0
    %3252 = vmatprep.subr.mxu0 0.0
    %3253 = vmatpush1.xpose.msra.mxu0 0.0
    %3254 = vmatprep.subr.mxu0 0.0
    %3255 = vmatpush1.xpose.msra.mxu0 0.0
    %3256 = vmatprep.subr.mxu0 0.0
    %3257 = vmatpush1.xpose.msra.mxu0 0.0
    %3258 = vmatprep.subr.mxu0 0.0
    %3259 = vmatpush1.xpose.msra.mxu0 0.0
    %3260 = vmatprep.subr.mxu0 0.0
    %3261 = vmatpush1.xpose.msra.mxu0 %v3230
    %3262 = vmatprep.subr.mxu0 0.0
    %3263 = vmatpush1.xpose.msra.mxu0 %v3228
    %3264 = vmatprep.subr.mxu0 0.0
    %3265 = vmatpush2.xpose.msra.mxu0 0.0
    %3266 = vmatprep.subr.mxu0 0.0
    %3267 = vmatpush2.xpose.msra.mxu0 0.0
    %3268 = vmatprep.subr.mxu0 0.0
    %3269 = vmatpush2.xpose.msra.mxu0 0.0
    %3270 = vmatprep.subr.mxu0 0.0
    %3271 = vmatpush2.xpose.msra.mxu0 0.0
    %3272 = vmatprep.subr.mxu0 0.0
    %3273 = vmatpush2.xpose.msra.mxu0 0.0
    %3274 = vmatprep.subr.mxu0 0.0
    %3275 = vmatpush2.xpose.msra.mxu0 0.0
    %3276 = vmatprep.subr.mxu0 0.0
    %3277 = vmatpush2.xpose.msra.mxu0 0.0
    %3278 = vmatprep.subr.mxu0 0.0
    %3279 = vmatpush2.xpose.msra.mxu0 0.0
    %3280 = vmatprep.subr.mxu0 0.0
    %3281 = vmatpush2.xpose.msra.mxu0 0.0
    %3282 = vmatprep.subr.mxu0 0.0
    %3283 = vmatpush2.xpose.msra.mxu0 0.0
    %3284 = vmatprep.subr.mxu0 0.0
    %3285 = vmatpush2.xpose.msra.mxu0 0.0
    %3286 = vmatprep.subr.mxu0 0.0
    %3287 = vmatpush2.xpose.msra.mxu0 0.0
    %3288 = vmatprep.subr.mxu0 0.0
    %3289 = vmatpush2.xpose.msra.mxu0 0.0
    %3290 = vmatprep.subr.mxu0 0.0
    %3291 = vmatpush2.xpose.msra.mxu0 0.0
    %3292 = vmatprep.subr.mxu0 0.0
    %3293 = vmatpush2.xpose.msra.mxu0 0.0
    %3294 = vmatprep.subr.mxu0 0.0
    %3295 = vmatpush2.xpose.msra.mxu0 0.0
    %3296 = vmatprep.mubr.f32.mxu0 0.0
    %3297 = vmatmul.mubr.f32.gmra.mxu0 %v3226
    %v3298 = vpop.f32.mrf.mxu0
    %v3299 = vadd.f32 %v2693, %v3298
    %v3300 = vpop.f32.mrf.mxu0
    %3301 = vdwg.mxu0
    %v3302 = vsel %vm1368, %v2767, -inf
    %3303 = vmax.xlane.f32.xlu0 %v3302
    %v3304 = vpop.xlane.xlu0 %3303
    %v3305 = vsel %vm1368, %v2843, -inf
    %3306 = vmax.xlane.f32.xlu0 %v3305
    %v3307 = vpop.xlane.xlu0 %3306
    %v3308 = vsel %vm1368, %v2919, -inf
    %3309 = vmax.xlane.f32.xlu0 %v3308
    %v3310 = vpop.xlane.xlu0 %3309
    %v3311 = vsel %vm1368, %v2995, -inf
    %3312 = vmax.xlane.f32.xlu0 %v3311
    %v3313 = vpop.xlane.xlu0 %3312
    %v3314 = vsel %vm1368, %v3071, -inf
    %3315 = vmax.xlane.f32.xlu0 %v3314
    %v3316 = vpop.xlane.xlu0 %3315
    %v3317 = vsel %vm1368, %v3147, -inf
    %3318 = vmax.xlane.f32.xlu0 %v3317
    %v3319 = vpop.xlane.xlu0 %3318
    %v3320 = vsel %vm1368, %v3223, -inf
    %3321 = vmax.xlane.f32.xlu0 %v3320
    %v3322 = vpop.xlane.xlu0 %3321
    %v3323 = vsel %vm1368, %v3299, -inf
    %3324 = vmax.xlane.f32.xlu0 %v3323
    %v3325 = vpop.xlane.xlu0 %3324
    %v3326 = vsub.f32 %v2767, %v3304
    %v3327 = vsub.f32 %v2843, %v3307
    %v3328 = vsub.f32 %v2919, %v3310
    %v3329 = vsub.f32 %v2995, %v3313
    %v3330 = vsub.f32 %v3071, %v3316
    %v3331 = vsub.f32 %v3147, %v3319
    %v3332 = vsub.f32 %v3223, %v3322
    %v3333 = vsub.f32 %v3299, %v3325
    %v3334 = vmul.f32 %v3326, 1.442695
    %v3335 = vpow.pop %v3334
    %v3336 = vmul.f32 %v3327, 1.442695
    %v3337 = vpow.pop %v3336
    %v3338 = vmul.f32 %v3328, 1.442695
    %v3339 = vpow.pop %v3338
    %v3340 = vmul.f32 %v3329, 1.442695
    %v3341 = vpow.pop %v3340
    %v3342 = vmul.f32 %v3330, 1.442695
    %v3343 = vpow.pop %v3342
    %v3344 = vmul.f32 %v3331, 1.442695
    %v3345 = vpow.pop %v3344
    %v3346 = vmul.f32 %v3332, 1.442695
    %v3347 = vpow.pop %v3346
    %v3348 = vmul.f32 %v3333, 1.442695
    %v3349 = vpow.pop %v3348
    %v3350 = vsel %vm1368, %v3335, 0.0
    %3351 = vadd.xlane.f32.xlu0 %v3350
    %v3352 = vpop.xlane.xlu0 %3351
    %v3353 = vsel %vm1368, %v3337, 0.0
    %3354 = vadd.xlane.f32.xlu0 %v3353
    %v3355 = vpop.xlane.xlu0 %3354
    %v3356 = vsel %vm1368, %v3339, 0.0
    %3357 = vadd.xlane.f32.xlu0 %v3356
    %v3358 = vpop.xlane.xlu0 %3357
    %v3359 = vsel %vm1368, %v3341, 0.0
    %3360 = vadd.xlane.f32.xlu0 %v3359
    %v3361 = vpop.xlane.xlu0 %3360
    %v3362 = vsel %vm1368, %v3343, 0.0
    %3363 = vadd.xlane.f32.xlu0 %v3362
    %v3364 = vpop.xlane.xlu0 %3363
    %v3365 = vsel %vm1368, %v3345, 0.0
    %3366 = vadd.xlane.f32.xlu0 %v3365
    %v3367 = vpop.xlane.xlu0 %3366
    %v3368 = vsel %vm1368, %v3347, 0.0
    %3369 = vadd.xlane.f32.xlu0 %v3368
    %v3370 = vpop.xlane.xlu0 %3369
    %v3371 = vsel %vm1368, %v3349, 0.0
    %3372 = vadd.xlane.f32.xlu0 %v3371
    %v3373 = vpop.xlane.xlu0 %3372
    %v3374 = vrcp.pop %v3352
    %v3375 = vrcp.pop %v3355
    %v3376 = vrcp.pop %v3358
    %v3377 = vrcp.pop %v3361
    %v3378 = vrcp.pop %v3364
    %v3379 = vrcp.pop %v3367
    %v3380 = vrcp.pop %v3370
    %v3381 = vrcp.pop %v3373
    %v3382 = vmul.f32 %v3335, %v3374
    %v3383 = vmul.f32 %v3337, %v3375
    %v3384 = vmul.f32 %v3339, %v3376
    %v3385 = vmul.f32 %v3341, %v3377
    %v3386 = vmul.f32 %v3343, %v3378
    %v3387 = vmul.f32 %v3345, %v3379
    %v3388 = vmul.f32 %v3347, %v3380
    %v3389 = vmul.f32 %v3349, %v3381
    %v3391 = vsel %vm1368, %v3382, 0
    %3393 = vmatprep.subr.mxu0 0.0
    %3394 = vmatpush1.msra.mxu0 0.0
    %3395 = vmatprep.subr.mxu0 0.0
    %3396 = vmatpush1.msra.mxu0 0.0
    %3397 = vmatprep.subr.mxu0 0.0
    %3398 = vmatpush1.msra.mxu0 0.0
    %3399 = vmatprep.subr.mxu0 0.0
    %3400 = vmatpush1.msra.mxu0 0.0
    %3401 = vmatprep.subr.mxu0 0.0
    %3402 = vmatpush1.msra.mxu0 0.0
    %3403 = vmatprep.subr.mxu0 0.0
    %3404 = vmatpush1.msra.mxu0 0.0
    %3405 = vmatprep.subr.mxu0 0.0
    %3406 = vmatpush1.msra.mxu0 0.0
    %3407 = vmatprep.subr.mxu0 0.0
    %3408 = vmatpush1.msra.mxu0 0.0
    %3409 = vmatprep.subr.mxu0 0.0
    %3410 = vmatpush1.msra.mxu0 0.0
    %3411 = vmatprep.subr.mxu0 0.0
    %3412 = vmatpush1.msra.mxu0 0.0
    %3413 = vmatprep.subr.mxu0 0.0
    %3414 = vmatpush1.msra.mxu0 0.0
    %3415 = vmatprep.subr.mxu0 0.0
    %3416 = vmatpush1.msra.mxu0 0.0
    %3417 = vmatprep.subr.mxu0 0.0
    %3418 = vmatpush1.msra.mxu0 0.0
    %3419 = vmatprep.subr.mxu0 0.0
    %3420 = vmatpush1.msra.mxu0 0.0
    %3421 = vmatprep.subr.mxu0 0.0
    %3422 = vmatpush1.msra.mxu0 %v459
    %3423 = vmatprep.subr.mxu0 0.0
    %3424 = vmatpush1.msra.mxu0 %v454
    %3425 = vmatprep.subr.mxu0 0.0
    %3426 = vmatpush2.msra.mxu0 0.0
    %3427 = vmatprep.subr.mxu0 0.0
    %3428 = vmatpush2.msra.mxu0 0.0
    %3429 = vmatprep.subr.mxu0 0.0
    %3430 = vmatpush2.msra.mxu0 0.0
    %3431 = vmatprep.subr.mxu0 0.0
    %3432 = vmatpush2.msra.mxu0 0.0
    %3433 = vmatprep.subr.mxu0 0.0
    %3434 = vmatpush2.msra.mxu0 0.0
    %3435 = vmatprep.subr.mxu0 0.0
    %3436 = vmatpush2.msra.mxu0 0.0
    %3437 = vmatprep.subr.mxu0 0.0
    %3438 = vmatpush2.msra.mxu0 0.0
    %3439 = vmatprep.subr.mxu0 0.0
    %3440 = vmatpush2.msra.mxu0 0.0
    %3441 = vmatprep.subr.mxu0 0.0
    %3442 = vmatpush2.msra.mxu0 0.0
    %3443 = vmatprep.subr.mxu0 0.0
    %3444 = vmatpush2.msra.mxu0 0.0
    %3445 = vmatprep.subr.mxu0 0.0
    %3446 = vmatpush2.msra.mxu0 0.0
    %3447 = vmatprep.subr.mxu0 0.0
    %3448 = vmatpush2.msra.mxu0 0.0
    %3449 = vmatprep.subr.mxu0 0.0
    %3450 = vmatpush2.msra.mxu0 0.0
    %3451 = vmatprep.subr.mxu0 0.0
    %3452 = vmatpush2.msra.mxu0 0.0
    %3453 = vmatprep.subr.mxu0 0.0
    %3454 = vmatpush2.msra.mxu0 0.0
    %3455 = vmatprep.subr.mxu0 0.0
    %3456 = vmatpush2.msra.mxu0 0.0
    %3457 = vmatprep.mubr.f32.mxu0 0.0
    %3458 = vmatmul.mubr.f32.gmra.mxu0 %v3391
    %v3459 = vpop.f32.mrf.mxu0
    %v3460 = vadd.f32 0.0, %v3459
    %v3461 = vpop.f32.mrf.mxu0
    %3462 = vdwg.mxu0
    %v3464 = vsel %vm1368, %v3383, 0
    %3466 = vmatprep.subr.mxu0 0.0
    %3467 = vmatpush1.msra.mxu0 0.0
    %3468 = vmatprep.subr.mxu0 0.0
    %3469 = vmatpush1.msra.mxu0 0.0
    %3470 = vmatprep.subr.mxu0 0.0
    %3471 = vmatpush1.msra.mxu0 0.0
    %3472 = vmatprep.subr.mxu0 0.0
    %3473 = vmatpush1.msra.mxu0 0.0
    %3474 = vmatprep.subr.mxu0 0.0
    %3475 = vmatpush1.msra.mxu0 0.0
    %3476 = vmatprep.subr.mxu0 0.0
    %3477 = vmatpush1.msra.mxu0 0.0
    %3478 = vmatprep.subr.mxu0 0.0
    %3479 = vmatpush1.msra.mxu0 0.0
    %3480 = vmatprep.subr.mxu0 0.0
    %3481 = vmatpush1.msra.mxu0 0.0
    %3482 = vmatprep.subr.mxu0 0.0
    %3483 = vmatpush1.msra.mxu0 0.0
    %3484 = vmatprep.subr.mxu0 0.0
    %3485 = vmatpush1.msra.mxu0 0.0
    %3486 = vmatprep.subr.mxu0 0.0
    %3487 = vmatpush1.msra.mxu0 0.0
    %3488 = vmatprep.subr.mxu0 0.0
    %3489 = vmatpush1.msra.mxu0 0.0
    %3490 = vmatprep.subr.mxu0 0.0
    %3491 = vmatpush1.msra.mxu0 0.0
    %3492 = vmatprep.subr.mxu0 0.0
    %3493 = vmatpush1.msra.mxu0 0.0
    %3494 = vmatprep.subr.mxu0 0.0
    %3495 = vmatpush1.msra.mxu0 %v563
    %3496 = vmatprep.subr.mxu0 0.0
    %3497 = vmatpush1.msra.mxu0 %v561
    %3498 = vmatprep.subr.mxu0 0.0
    %3499 = vmatpush2.msra.mxu0 0.0
    %3500 = vmatprep.subr.mxu0 0.0
    %3501 = vmatpush2.msra.mxu0 0.0
    %3502 = vmatprep.subr.mxu0 0.0
    %3503 = vmatpush2.msra.mxu0 0.0
    %3504 = vmatprep.subr.mxu0 0.0
    %3505 = vmatpush2.msra.mxu0 0.0
    %3506 = vmatprep.subr.mxu0 0.0
    %3507 = vmatpush2.msra.mxu0 0.0
    %3508 = vmatprep.subr.mxu0 0.0
    %3509 = vmatpush2.msra.mxu0 0.0
    %3510 = vmatprep.subr.mxu0 0.0
    %3511 = vmatpush2.msra.mxu0 0.0
    %3512 = vmatprep.subr.mxu0 0.0
    %3513 = vmatpush2.msra.mxu0 0.0
    %3514 = vmatprep.subr.mxu0 0.0
    %3515 = vmatpush2.msra.mxu0 0.0
    %3516 = vmatprep.subr.mxu0 0.0
    %3517 = vmatpush2.msra.mxu0 0.0
    %3518 = vmatprep.subr.mxu0 0.0
    %3519 = vmatpush2.msra.mxu0 0.0
    %3520 = vmatprep.subr.mxu0 0.0
    %3521 = vmatpush2.msra.mxu0 0.0
    %3522 = vmatprep.subr.mxu0 0.0
    %3523 = vmatpush2.msra.mxu0 0.0
    %3524 = vmatprep.subr.mxu0 0.0
    %3525 = vmatpush2.msra.mxu0 0.0
    %3526 = vmatprep.subr.mxu0 0.0
    %3527 = vmatpush2.msra.mxu0 0.0
    %3528 = vmatprep.subr.mxu0 0.0
    %3529 = vmatpush2.msra.mxu0 0.0
    %3530 = vmatprep.mubr.f32.mxu0 0.0
    %3531 = vmatmul.mubr.f32.gmra.mxu0 %v3464
    %v3532 = vpop.f32.mrf.mxu0
    %v3533 = vadd.f32 0.0, %v3532
    %v3534 = vpop.f32.mrf.mxu0
    %3535 = vdwg.mxu0
    %v3537 = vsel %vm1368, %v3384, 0
    %3539 = vmatprep.subr.mxu0 0.0
    %3540 = vmatpush1.msra.mxu0 0.0
    %3541 = vmatprep.subr.mxu0 0.0
    %3542 = vmatpush1.msra.mxu0 0.0
    %3543 = vmatprep.subr.mxu0 0.0
    %3544 = vmatpush1.msra.mxu0 0.0
    %3545 = vmatprep.subr.mxu0 0.0
    %3546 = vmatpush1.msra.mxu0 0.0
    %3547 = vmatprep.subr.mxu0 0.0
    %3548 = vmatpush1.msra.mxu0 0.0
    %3549 = vmatprep.subr.mxu0 0.0
    %3550 = vmatpush1.msra.mxu0 0.0
    %3551 = vmatprep.subr.mxu0 0.0
    %3552 = vmatpush1.msra.mxu0 0.0
    %3553 = vmatprep.subr.mxu0 0.0
    %3554 = vmatpush1.msra.mxu0 0.0
    %3555 = vmatprep.subr.mxu0 0.0
    %3556 = vmatpush1.msra.mxu0 0.0
    %3557 = vmatprep.subr.mxu0 0.0
    %3558 = vmatpush1.msra.mxu0 0.0
    %3559 = vmatprep.subr.mxu0 0.0
    %3560 = vmatpush1.msra.mxu0 0.0
    %3561 = vmatprep.subr.mxu0 0.0
    %3562 = vmatpush1.msra.mxu0 0.0
    %3563 = vmatprep.subr.mxu0 0.0
    %3564 = vmatpush1.msra.mxu0 0.0
    %3565 = vmatprep.subr.mxu0 0.0
    %3566 = vmatpush1.msra.mxu0 0.0
    %3567 = vmatprep.subr.mxu0 0.0
    %3568 = vmatpush1.msra.mxu0 %v575
    %3569 = vmatprep.subr.mxu0 0.0
    %3570 = vmatpush1.msra.mxu0 %v573
    %3571 = vmatprep.subr.mxu0 0.0
    %3572 = vmatpush2.msra.mxu0 0.0
    %3573 = vmatprep.subr.mxu0 0.0
    %3574 = vmatpush2.msra.mxu0 0.0
    %3575 = vmatprep.subr.mxu0 0.0
    %3576 = vmatpush2.msra.mxu0 0.0
    %3577 = vmatprep.subr.mxu0 0.0
    %3578 = vmatpush2.msra.mxu0 0.0
    %3579 = vmatprep.subr.mxu0 0.0
    %3580 = vmatpush2.msra.mxu0 0.0
    %3581 = vmatprep.subr.mxu0 0.0
    %3582 = vmatpush2.msra.mxu0 0.0
    %3583 = vmatprep.subr.mxu0 0.0
    %3584 = vmatpush2.msra.mxu0 0.0
    %3585 = vmatprep.subr.mxu0 0.0
    %3586 = vmatpush2.msra.mxu0 0.0
    %3587 = vmatprep.subr.mxu0 0.0
    %3588 = vmatpush2.msra.mxu0 0.0
    %3589 = vmatprep.subr.mxu0 0.0
    %3590 = vmatpush2.msra.mxu0 0.0
    %3591 = vmatprep.subr.mxu0 0.0
    %3592 = vmatpush2.msra.mxu0 0.0
    %3593 = vmatprep.subr.mxu0 0.0
    %3594 = vmatpush2.msra.mxu0 0.0
    %3595 = vmatprep.subr.mxu0 0.0
    %3596 = vmatpush2.msra.mxu0 0.0
    %3597 = vmatprep.subr.mxu0 0.0
    %3598 = vmatpush2.msra.mxu0 0.0
    %3599 = vmatprep.subr.mxu0 0.0
    %3600 = vmatpush2.msra.mxu0 0.0
    %3601 = vmatprep.subr.mxu0 0.0
    %3602 = vmatpush2.msra.mxu0 0.0
    %3603 = vmatprep.mubr.f32.mxu0 0.0
    %3604 = vmatmul.mubr.f32.gmra.mxu0 %v3537
    %v3605 = vpop.f32.mrf.mxu0
    %v3606 = vadd.f32 0.0, %v3605
    %v3607 = vpop.f32.mrf.mxu0
    %3608 = vdwg.mxu0
    %v3610 = vsel %vm1368, %v3385, 0
    %3612 = vmatprep.subr.mxu0 0.0
    %3613 = vmatpush1.msra.mxu0 0.0
    %3614 = vmatprep.subr.mxu0 0.0
    %3615 = vmatpush1.msra.mxu0 0.0
    %3616 = vmatprep.subr.mxu0 0.0
    %3617 = vmatpush1.msra.mxu0 0.0
    %3618 = vmatprep.subr.mxu0 0.0
    %3619 = vmatpush1.msra.mxu0 0.0
    %3620 = vmatprep.subr.mxu0 0.0
    %3621 = vmatpush1.msra.mxu0 0.0
    %3622 = vmatprep.subr.mxu0 0.0
    %3623 = vmatpush1.msra.mxu0 0.0
    %3624 = vmatprep.subr.mxu0 0.0
    %3625 = vmatpush1.msra.mxu0 0.0
    %3626 = vmatprep.subr.mxu0 0.0
    %3627 = vmatpush1.msra.mxu0 0.0
    %3628 = vmatprep.subr.mxu0 0.0
    %3629 = vmatpush1.msra.mxu0 0.0
    %3630 = vmatprep.subr.mxu0 0.0
    %3631 = vmatpush1.msra.mxu0 0.0
    %3632 = vmatprep.subr.mxu0 0.0
    %3633 = vmatpush1.msra.mxu0 0.0
    %3634 = vmatprep.subr.mxu0 0.0
    %3635 = vmatpush1.msra.mxu0 0.0
    %3636 = vmatprep.subr.mxu0 0.0
    %3637 = vmatpush1.msra.mxu0 0.0
    %3638 = vmatprep.subr.mxu0 0.0
    %3639 = vmatpush1.msra.mxu0 0.0
    %3640 = vmatprep.subr.mxu0 0.0
    %3641 = vmatpush1.msra.mxu0 %v587
    %3642 = vmatprep.subr.mxu0 0.0
    %3643 = vmatpush1.msra.mxu0 %v585
    %3644 = vmatprep.subr.mxu0 0.0
    %3645 = vmatpush2.msra.mxu0 0.0
    %3646 = vmatprep.subr.mxu0 0.0
    %3647 = vmatpush2.msra.mxu0 0.0
    %3648 = vmatprep.subr.mxu0 0.0
    %3649 = vmatpush2.msra.mxu0 0.0
    %3650 = vmatprep.subr.mxu0 0.0
    %3651 = vmatpush2.msra.mxu0 0.0
    %3652 = vmatprep.subr.mxu0 0.0
    %3653 = vmatpush2.msra.mxu0 0.0
    %3654 = vmatprep.subr.mxu0 0.0
    %3655 = vmatpush2.msra.mxu0 0.0
    %3656 = vmatprep.subr.mxu0 0.0
    %3657 = vmatpush2.msra.mxu0 0.0
    %3658 = vmatprep.subr.mxu0 0.0
    %3659 = vmatpush2.msra.mxu0 0.0
    %3660 = vmatprep.subr.mxu0 0.0
    %3661 = vmatpush2.msra.mxu0 0.0
    %3662 = vmatprep.subr.mxu0 0.0
    %3663 = vmatpush2.msra.mxu0 0.0
    %3664 = vmatprep.subr.mxu0 0.0
    %3665 = vmatpush2.msra.mxu0 0.0
    %3666 = vmatprep.subr.mxu0 0.0
    %3667 = vmatpush2.msra.mxu0 0.0
    %3668 = vmatprep.subr.mxu0 0.0
    %3669 = vmatpush2.msra.mxu0 0.0
    %3670 = vmatprep.subr.mxu0 0.0
    %3671 = vmatpush2.msra.mxu0 0.0
    %3672 = vmatprep.subr.mxu0 0.0
    %3673 = vmatpush2.msra.mxu0 0.0
    %3674 = vmatprep.subr.mxu0 0.0
    %3675 = vmatpush2.msra.mxu0 0.0
    %3676 = vmatprep.mubr.f32.mxu0 0.0
    %3677 = vmatmul.mubr.f32.gmra.mxu0 %v3610
    %v3678 = vpop.f32.mrf.mxu0
    %v3679 = vadd.f32 0.0, %v3678
    %v3680 = vpop.f32.mrf.mxu0
    %3681 = vdwg.mxu0
    %v3683 = vsel %vm1368, %v3386, 0
    %3685 = vmatprep.subr.mxu0 0.0
    %3686 = vmatpush1.msra.mxu0 0.0
    %3687 = vmatprep.subr.mxu0 0.0
    %3688 = vmatpush1.msra.mxu0 0.0
    %3689 = vmatprep.subr.mxu0 0.0
    %3690 = vmatpush1.msra.mxu0 0.0
    %3691 = vmatprep.subr.mxu0 0.0
    %3692 = vmatpush1.msra.mxu0 0.0
    %3693 = vmatprep.subr.mxu0 0.0
    %3694 = vmatpush1.msra.mxu0 0.0
    %3695 = vmatprep.subr.mxu0 0.0
    %3696 = vmatpush1.msra.mxu0 0.0
    %3697 = vmatprep.subr.mxu0 0.0
    %3698 = vmatpush1.msra.mxu0 0.0
    %3699 = vmatprep.subr.mxu0 0.0
    %3700 = vmatpush1.msra.mxu0 0.0
    %3701 = vmatprep.subr.mxu0 0.0
    %3702 = vmatpush1.msra.mxu0 0.0
    %3703 = vmatprep.subr.mxu0 0.0
    %3704 = vmatpush1.msra.mxu0 0.0
    %3705 = vmatprep.subr.mxu0 0.0
    %3706 = vmatpush1.msra.mxu0 0.0
    %3707 = vmatprep.subr.mxu0 0.0
    %3708 = vmatpush1.msra.mxu0 0.0
    %3709 = vmatprep.subr.mxu0 0.0
    %3710 = vmatpush1.msra.mxu0 0.0
    %3711 = vmatprep.subr.mxu0 0.0
    %3712 = vmatpush1.msra.mxu0 0.0
    %3713 = vmatprep.subr.mxu0 0.0
    %3714 = vmatpush1.msra.mxu0 %v599
    %3715 = vmatprep.subr.mxu0 0.0
    %3716 = vmatpush1.msra.mxu0 %v597
    %3717 = vmatprep.subr.mxu0 0.0
    %3718 = vmatpush2.msra.mxu0 0.0
    %3719 = vmatprep.subr.mxu0 0.0
    %3720 = vmatpush2.msra.mxu0 0.0
    %3721 = vmatprep.subr.mxu0 0.0
    %3722 = vmatpush2.msra.mxu0 0.0
    %3723 = vmatprep.subr.mxu0 0.0
    %3724 = vmatpush2.msra.mxu0 0.0
    %3725 = vmatprep.subr.mxu0 0.0
    %3726 = vmatpush2.msra.mxu0 0.0
    %3727 = vmatprep.subr.mxu0 0.0
    %3728 = vmatpush2.msra.mxu0 0.0
    %3729 = vmatprep.subr.mxu0 0.0
    %3730 = vmatpush2.msra.mxu0 0.0
    %3731 = vmatprep.subr.mxu0 0.0
    %3732 = vmatpush2.msra.mxu0 0.0
    %3733 = vmatprep.subr.mxu0 0.0
    %3734 = vmatpush2.msra.mxu0 0.0
    %3735 = vmatprep.subr.mxu0 0.0
    %3736 = vmatpush2.msra.mxu0 0.0
    %3737 = vmatprep.subr.mxu0 0.0
    %3738 = vmatpush2.msra.mxu0 0.0
    %3739 = vmatprep.subr.mxu0 0.0
    %3740 = vmatpush2.msra.mxu0 0.0
    %3741 = vmatprep.subr.mxu0 0.0
    %3742 = vmatpush2.msra.mxu0 0.0
    %3743 = vmatprep.subr.mxu0 0.0
    %3744 = vmatpush2.msra.mxu0 0.0
    %3745 = vmatprep.subr.mxu0 0.0
    %3746 = vmatpush2.msra.mxu0 0.0
    %3747 = vmatprep.subr.mxu0 0.0
    %3748 = vmatpush2.msra.mxu0 0.0
    %3749 = vmatprep.mubr.f32.mxu0 0.0
    %3750 = vmatmul.mubr.f32.gmra.mxu0 %v3683
    %v3751 = vpop.f32.mrf.mxu0
    %v3752 = vadd.f32 0.0, %v3751
    %v3753 = vpop.f32.mrf.mxu0
    %3754 = vdwg.mxu0
    %v3756 = vsel %vm1368, %v3387, 0
    %3758 = vmatprep.subr.mxu0 0.0
    %3759 = vmatpush1.msra.mxu0 0.0
    %3760 = vmatprep.subr.mxu0 0.0
    %3761 = vmatpush1.msra.mxu0 0.0
    %3762 = vmatprep.subr.mxu0 0.0
    %3763 = vmatpush1.msra.mxu0 0.0
    %3764 = vmatprep.subr.mxu0 0.0
    %3765 = vmatpush1.msra.mxu0 0.0
    %3766 = vmatprep.subr.mxu0 0.0
    %3767 = vmatpush1.msra.mxu0 0.0
    %3768 = vmatprep.subr.mxu0 0.0
    %3769 = vmatpush1.msra.mxu0 0.0
    %3770 = vmatprep.subr.mxu0 0.0
    %3771 = vmatpush1.msra.mxu0 0.0
    %3772 = vmatprep.subr.mxu0 0.0
    %3773 = vmatpush1.msra.mxu0 0.0
    %3774 = vmatprep.subr.mxu0 0.0
    %3775 = vmatpush1.msra.mxu0 0.0
    %3776 = vmatprep.subr.mxu0 0.0
    %3777 = vmatpush1.msra.mxu0 0.0
    %3778 = vmatprep.subr.mxu0 0.0
    %3779 = vmatpush1.msra.mxu0 0.0
    %3780 = vmatprep.subr.mxu0 0.0
    %3781 = vmatpush1.msra.mxu0 0.0
    %3782 = vmatprep.subr.mxu0 0.0
    %3783 = vmatpush1.msra.mxu0 0.0
    %3784 = vmatprep.subr.mxu0 0.0
    %3785 = vmatpush1.msra.mxu0 0.0
    %3786 = vmatprep.subr.mxu0 0.0
    %3787 = vmatpush1.msra.mxu0 %v611
    %3788 = vmatprep.subr.mxu0 0.0
    %3789 = vmatpush1.msra.mxu0 %v609
    %3790 = vmatprep.subr.mxu0 0.0
    %3791 = vmatpush2.msra.mxu0 0.0
    %3792 = vmatprep.subr.mxu0 0.0
    %3793 = vmatpush2.msra.mxu0 0.0
    %3794 = vmatprep.subr.mxu0 0.0
    %3795 = vmatpush2.msra.mxu0 0.0
    %3796 = vmatprep.subr.mxu0 0.0
    %3797 = vmatpush2.msra.mxu0 0.0
    %3798 = vmatprep.subr.mxu0 0.0
    %3799 = vmatpush2.msra.mxu0 0.0
    %3800 = vmatprep.subr.mxu0 0.0
    %3801 = vmatpush2.msra.mxu0 0.0
    %3802 = vmatprep.subr.mxu0 0.0
    %3803 = vmatpush2.msra.mxu0 0.0
    %3804 = vmatprep.subr.mxu0 0.0
    %3805 = vmatpush2.msra.mxu0 0.0
    %3806 = vmatprep.subr.mxu0 0.0
    %3807 = vmatpush2.msra.mxu0 0.0
    %3808 = vmatprep.subr.mxu0 0.0
    %3809 = vmatpush2.msra.mxu0 0.0
    %3810 = vmatprep.subr.mxu0 0.0
    %3811 = vmatpush2.msra.mxu0 0.0
    %3812 = vmatprep.subr.mxu0 0.0
    %3813 = vmatpush2.msra.mxu0 0.0
    %3814 = vmatprep.subr.mxu0 0.0
    %3815 = vmatpush2.msra.mxu0 0.0
    %3816 = vmatprep.subr.mxu0 0.0
    %3817 = vmatpush2.msra.mxu0 0.0
    %3818 = vmatprep.subr.mxu0 0.0
    %3819 = vmatpush2.msra.mxu0 0.0
    %3820 = vmatprep.subr.mxu0 0.0
    %3821 = vmatpush2.msra.mxu0 0.0
    %3822 = vmatprep.mubr.f32.mxu0 0.0
    %3823 = vmatmul.mubr.f32.gmra.mxu0 %v3756
    %v3824 = vpop.f32.mrf.mxu0
    %v3825 = vadd.f32 0.0, %v3824
    %v3826 = vpop.f32.mrf.mxu0
    %3827 = vdwg.mxu0
    %v3829 = vsel %vm1368, %v3388, 0
    %3831 = vmatprep.subr.mxu0 0.0
    %3832 = vmatpush1.msra.mxu0 0.0
    %3833 = vmatprep.subr.mxu0 0.0
    %3834 = vmatpush1.msra.mxu0 0.0
    %3835 = vmatprep.subr.mxu0 0.0
    %3836 = vmatpush1.msra.mxu0 0.0
    %3837 = vmatprep.subr.mxu0 0.0
    %3838 = vmatpush1.msra.mxu0 0.0
    %3839 = vmatprep.subr.mxu0 0.0
    %3840 = vmatpush1.msra.mxu0 0.0
    %3841 = vmatprep.subr.mxu0 0.0
    %3842 = vmatpush1.msra.mxu0 0.0
    %3843 = vmatprep.subr.mxu0 0.0
    %3844 = vmatpush1.msra.mxu0 0.0
    %3845 = vmatprep.subr.mxu0 0.0
    %3846 = vmatpush1.msra.mxu0 0.0
    %3847 = vmatprep.subr.mxu0 0.0
    %3848 = vmatpush1.msra.mxu0 0.0
    %3849 = vmatprep.subr.mxu0 0.0
    %3850 = vmatpush1.msra.mxu0 0.0
    %3851 = vmatprep.subr.mxu0 0.0
    %3852 = vmatpush1.msra.mxu0 0.0
    %3853 = vmatprep.subr.mxu0 0.0
    %3854 = vmatpush1.msra.mxu0 0.0
    %3855 = vmatprep.subr.mxu0 0.0
    %3856 = vmatpush1.msra.mxu0 0.0
    %3857 = vmatprep.subr.mxu0 0.0
    %3858 = vmatpush1.msra.mxu0 0.0
    %3859 = vmatprep.subr.mxu0 0.0
    %3860 = vmatpush1.msra.mxu0 %v623
    %3861 = vmatprep.subr.mxu0 0.0
    %3862 = vmatpush1.msra.mxu0 %v621
    %3863 = vmatprep.subr.mxu0 0.0
    %3864 = vmatpush2.msra.mxu0 0.0
    %3865 = vmatprep.subr.mxu0 0.0
    %3866 = vmatpush2.msra.mxu0 0.0
    %3867 = vmatprep.subr.mxu0 0.0
    %3868 = vmatpush2.msra.mxu0 0.0
    %3869 = vmatprep.subr.mxu0 0.0
    %3870 = vmatpush2.msra.mxu0 0.0
    %3871 = vmatprep.subr.mxu0 0.0
    %3872 = vmatpush2.msra.mxu0 0.0
    %3873 = vmatprep.subr.mxu0 0.0
    %3874 = vmatpush2.msra.mxu0 0.0
    %3875 = vmatprep.subr.mxu0 0.0
    %3876 = vmatpush2.msra.mxu0 0.0
    %3877 = vmatprep.subr.mxu0 0.0
    %3878 = vmatpush2.msra.mxu0 0.0
    %3879 = vmatprep.subr.mxu0 0.0
    %3880 = vmatpush2.msra.mxu0 0.0
    %3881 = vmatprep.subr.mxu0 0.0
    %3882 = vmatpush2.msra.mxu0 0.0
    %3883 = vmatprep.subr.mxu0 0.0
    %3884 = vmatpush2.msra.mxu0 0.0
    %3885 = vmatprep.subr.mxu0 0.0
    %3886 = vmatpush2.msra.mxu0 0.0
    %3887 = vmatprep.subr.mxu0 0.0
    %3888 = vmatpush2.msra.mxu0 0.0
    %3889 = vmatprep.subr.mxu0 0.0
    %3890 = vmatpush2.msra.mxu0 0.0
    %3891 = vmatprep.subr.mxu0 0.0
    %3892 = vmatpush2.msra.mxu0 0.0
    %3893 = vmatprep.subr.mxu0 0.0
    %3894 = vmatpush2.msra.mxu0 0.0
    %3895 = vmatprep.mubr.f32.mxu0 0.0
    %3896 = vmatmul.mubr.f32.gmra.mxu0 %v3829
    %v3897 = vpop.f32.mrf.mxu0
    %v3898 = vadd.f32 0.0, %v3897
    %v3899 = vpop.f32.mrf.mxu0
    %3900 = vdwg.mxu0
    %v3902 = vsel %vm1368, %v3389, 0
    %3904 = vmatprep.subr.mxu0 0.0
    %3905 = vmatpush1.msra.mxu0 0.0
    %3906 = vmatprep.subr.mxu0 0.0
    %3907 = vmatpush1.msra.mxu0 0.0
    %3908 = vmatprep.subr.mxu0 0.0
    %3909 = vmatpush1.msra.mxu0 0.0
    %3910 = vmatprep.subr.mxu0 0.0
    %3911 = vmatpush1.msra.mxu0 0.0
    %3912 = vmatprep.subr.mxu0 0.0
    %3913 = vmatpush1.msra.mxu0 0.0
    %3914 = vmatprep.subr.mxu0 0.0
    %3915 = vmatpush1.msra.mxu0 0.0
    %3916 = vmatprep.subr.mxu0 0.0
    %3917 = vmatpush1.msra.mxu0 0.0
    %3918 = vmatprep.subr.mxu0 0.0
    %3919 = vmatpush1.msra.mxu0 0.0
    %3920 = vmatprep.subr.mxu0 0.0
    %3921 = vmatpush1.msra.mxu0 0.0
    %3922 = vmatprep.subr.mxu0 0.0
    %3923 = vmatpush1.msra.mxu0 0.0
    %3924 = vmatprep.subr.mxu0 0.0
    %3925 = vmatpush1.msra.mxu0 0.0
    %3926 = vmatprep.subr.mxu0 0.0
    %3927 = vmatpush1.msra.mxu0 0.0
    %3928 = vmatprep.subr.mxu0 0.0
    %3929 = vmatpush1.msra.mxu0 0.0
    %3930 = vmatprep.subr.mxu0 0.0
    %3931 = vmatpush1.msra.mxu0 0.0
    %3932 = vmatprep.subr.mxu0 0.0
    %3933 = vmatpush1.msra.mxu0 %v635
    %3934 = vmatprep.subr.mxu0 0.0
    %3935 = vmatpush1.msra.mxu0 %v633
    %3936 = vmatprep.subr.mxu0 0.0
    %3937 = vmatpush2.msra.mxu0 0.0
    %3938 = vmatprep.subr.mxu0 0.0
    %3939 = vmatpush2.msra.mxu0 0.0
    %3940 = vmatprep.subr.mxu0 0.0
    %3941 = vmatpush2.msra.mxu0 0.0
    %3942 = vmatprep.subr.mxu0 0.0
    %3943 = vmatpush2.msra.mxu0 0.0
    %3944 = vmatprep.subr.mxu0 0.0
    %3945 = vmatpush2.msra.mxu0 0.0
    %3946 = vmatprep.subr.mxu0 0.0
    %3947 = vmatpush2.msra.mxu0 0.0
    %3948 = vmatprep.subr.mxu0 0.0
    %3949 = vmatpush2.msra.mxu0 0.0
    %3950 = vmatprep.subr.mxu0 0.0
    %3951 = vmatpush2.msra.mxu0 0.0
    %3952 = vmatprep.subr.mxu0 0.0
    %3953 = vmatpush2.msra.mxu0 0.0
    %3954 = vmatprep.subr.mxu0 0.0
    %3955 = vmatpush2.msra.mxu0 0.0
    %3956 = vmatprep.subr.mxu0 0.0
    %3957 = vmatpush2.msra.mxu0 0.0
    %3958 = vmatprep.subr.mxu0 0.0
    %3959 = vmatpush2.msra.mxu0 0.0
    %3960 = vmatprep.subr.mxu0 0.0
    %3961 = vmatpush2.msra.mxu0 0.0
    %3962 = vmatprep.subr.mxu0 0.0
    %3963 = vmatpush2.msra.mxu0 0.0
    %3964 = vmatprep.subr.mxu0 0.0
    %3965 = vmatpush2.msra.mxu0 0.0
    %3966 = vmatprep.subr.mxu0 0.0
    %3967 = vmatpush2.msra.mxu0 0.0
    %3968 = vmatprep.mubr.f32.mxu0 0.0
    %3969 = vmatmul.mubr.f32.gmra.mxu0 %v3902
    %v3970 = vpop.f32.mrf.mxu0
    %v3971 = vadd.f32 0.0, %v3970
    %v3972 = vpop.f32.mrf.mxu0
    %3973 = vdwg.mxu0
    %v3975 = vsel %vm759, %v3460, 0
    %3977 = vmatprep.subr.mxu0 0.0
    %3978 = vmatpush1.msra.mxu0 0.0
    %3979 = vmatprep.subr.mxu0 0.0
    %3980 = vmatpush1.msra.mxu0 0.0
    %3981 = vmatprep.subr.mxu0 0.0
    %3982 = vmatpush1.msra.mxu0 0.0
    %3983 = vmatprep.subr.mxu0 0.0
    %3984 = vmatpush1.msra.mxu0 0.0
    %3985 = vmatprep.subr.mxu0 0.0
    %3986 = vmatpush1.msra.mxu0 0.0
    %3987 = vmatprep.subr.mxu0 0.0
    %3988 = vmatpush1.msra.mxu0 0.0
    %3989 = vmatprep.subr.mxu0 0.0
    %3990 = vmatpush1.msra.mxu0 0.0
    %3991 = vmatprep.subr.mxu0 0.0
    %3992 = vmatpush1.msra.mxu0 0.0
    %3993 = vmatprep.subr.mxu0 0.0
    %3994 = vmatpush1.msra.mxu0 0.0
    %3995 = vmatprep.subr.mxu0 0.0
    %3996 = vmatpush1.msra.mxu0 0.0
    %3997 = vmatprep.subr.mxu0 0.0
    %3998 = vmatpush1.msra.mxu0 0.0
    %3999 = vmatprep.subr.mxu0 0.0
    %4000 = vmatpush1.msra.mxu0 0.0
    %4001 = vmatprep.subr.mxu0 0.0
    %4002 = vmatpush1.msra.mxu0 0.0
    %4003 = vmatprep.subr.mxu0 0.0
    %4004 = vmatpush1.msra.mxu0 0.0
    %4005 = vmatprep.subr.mxu0 0.0
    %4006 = vmatpush1.msra.mxu0 0.0
    %4007 = vmatprep.subr.mxu0 0.0
    %4008 = vmatpush1.msra.mxu0 %v2046
    %4009 = vmatprep.subr.mxu0 0.0
    %4010 = vmatpush2.msra.mxu0 0.0
    %4011 = vmatprep.subr.mxu0 0.0
    %4012 = vmatpush2.msra.mxu0 0.0
    %4013 = vmatprep.subr.mxu0 0.0
    %4014 = vmatpush2.msra.mxu0 0.0
    %4015 = vmatprep.subr.mxu0 0.0
    %4016 = vmatpush2.msra.mxu0 0.0
    %4017 = vmatprep.subr.mxu0 0.0
    %4018 = vmatpush2.msra.mxu0 0.0
    %4019 = vmatprep.subr.mxu0 0.0
    %4020 = vmatpush2.msra.mxu0 0.0
    %4021 = vmatprep.subr.mxu0 0.0
    %4022 = vmatpush2.msra.mxu0 0.0
    %4023 = vmatprep.subr.mxu0 0.0
    %4024 = vmatpush2.msra.mxu0 0.0
    %4025 = vmatprep.subr.mxu0 0.0
    %4026 = vmatpush2.msra.mxu0 0.0
    %4027 = vmatprep.subr.mxu0 0.0
    %4028 = vmatpush2.msra.mxu0 0.0
    %4029 = vmatprep.subr.mxu0 0.0
    %4030 = vmatpush2.msra.mxu0 0.0
    %4031 = vmatprep.subr.mxu0 0.0
    %4032 = vmatpush2.msra.mxu0 0.0
    %4033 = vmatprep.subr.mxu0 0.0
    %4034 = vmatpush2.msra.mxu0 0.0
    %4035 = vmatprep.subr.mxu0 0.0
    %4036 = vmatpush2.msra.mxu0 0.0
    %4037 = vmatprep.subr.mxu0 0.0
    %4038 = vmatpush2.msra.mxu0 0.0
    %4039 = vmatprep.subr.mxu0 0.0
    %4040 = vmatpush2.msra.mxu0 0.0
    %4041 = vmatprep.mubr.f32.mxu0 0.0
    %4042 = vmatmul.mubr.f32.gmra.mxu0 %v3975
    %v4043 = vpop.f32.mrf.mxu0
    %v4044 = vadd.f32 0.0, %v4043
    %v4045 = vpop.f32.mrf.mxu0
    %4046 = vdwg.mxu0
    %v4048 = vsel %vm759, %v3533, 0
    %4050 = vmatprep.subr.mxu0 0.0
    %4051 = vmatpush1.msra.mxu0 0.0
    %4052 = vmatprep.subr.mxu0 0.0
    %4053 = vmatpush1.msra.mxu0 0.0
    %4054 = vmatprep.subr.mxu0 0.0
    %4055 = vmatpush1.msra.mxu0 0.0
    %4056 = vmatprep.subr.mxu0 0.0
    %4057 = vmatpush1.msra.mxu0 0.0
    %4058 = vmatprep.subr.mxu0 0.0
    %4059 = vmatpush1.msra.mxu0 0.0
    %4060 = vmatprep.subr.mxu0 0.0
    %4061 = vmatpush1.msra.mxu0 0.0
    %4062 = vmatprep.subr.mxu0 0.0
    %4063 = vmatpush1.msra.mxu0 0.0
    %4064 = vmatprep.subr.mxu0 0.0
    %4065 = vmatpush1.msra.mxu0 0.0
    %4066 = vmatprep.subr.mxu0 0.0
    %4067 = vmatpush1.msra.mxu0 0.0
    %4068 = vmatprep.subr.mxu0 0.0
    %4069 = vmatpush1.msra.mxu0 0.0
    %4070 = vmatprep.subr.mxu0 0.0
    %4071 = vmatpush1.msra.mxu0 0.0
    %4072 = vmatprep.subr.mxu0 0.0
    %4073 = vmatpush1.msra.mxu0 0.0
    %4074 = vmatprep.subr.mxu0 0.0
    %4075 = vmatpush1.msra.mxu0 0.0
    %4076 = vmatprep.subr.mxu0 0.0
    %4077 = vmatpush1.msra.mxu0 0.0
    %4078 = vmatprep.subr.mxu0 0.0
    %4079 = vmatpush1.msra.mxu0 0.0
    %4080 = vmatprep.subr.mxu0 0.0
    %4081 = vmatpush1.msra.mxu0 %v2122
    %4082 = vmatprep.subr.mxu0 0.0
    %4083 = vmatpush2.msra.mxu0 0.0
    %4084 = vmatprep.subr.mxu0 0.0
    %4085 = vmatpush2.msra.mxu0 0.0
    %4086 = vmatprep.subr.mxu0 0.0
    %4087 = vmatpush2.msra.mxu0 0.0
    %4088 = vmatprep.subr.mxu0 0.0
    %4089 = vmatpush2.msra.mxu0 0.0
    %4090 = vmatprep.subr.mxu0 0.0
    %4091 = vmatpush2.msra.mxu0 0.0
    %4092 = vmatprep.subr.mxu0 0.0
    %4093 = vmatpush2.msra.mxu0 0.0
    %4094 = vmatprep.subr.mxu0 0.0
    %4095 = vmatpush2.msra.mxu0 0.0
    %4096 = vmatprep.subr.mxu0 0.0
    %4097 = vmatpush2.msra.mxu0 0.0
    %4098 = vmatprep.subr.mxu0 0.0
    %4099 = vmatpush2.msra.mxu0 0.0
    %4100 = vmatprep.subr.mxu0 0.0
    %4101 = vmatpush2.msra.mxu0 0.0
    %4102 = vmatprep.subr.mxu0 0.0
    %4103 = vmatpush2.msra.mxu0 0.0
    %4104 = vmatprep.subr.mxu0 0.0
    %4105 = vmatpush2.msra.mxu0 0.0
    %4106 = vmatprep.subr.mxu0 0.0
    %4107 = vmatpush2.msra.mxu0 0.0
    %4108 = vmatprep.subr.mxu0 0.0
    %4109 = vmatpush2.msra.mxu0 0.0
    %4110 = vmatprep.subr.mxu0 0.0
    %4111 = vmatpush2.msra.mxu0 0.0
    %4112 = vmatprep.subr.mxu0 0.0
    %4113 = vmatpush2.msra.mxu0 0.0
    %4114 = vmatprep.mubr.f32.mxu0 0.0
    %4115 = vmatmul.mubr.f32.gmra.mxu0 %v4048
    %v4116 = vpop.f32.mrf.mxu0
    %v4117 = vadd.f32 0.0, %v4116
    %v4118 = vpop.f32.mrf.mxu0
    %4119 = vdwg.mxu0
    %v4121 = vsel %vm759, %v3606, 0
    %4123 = vmatprep.subr.mxu0 0.0
    %4124 = vmatpush1.msra.mxu0 0.0
    %4125 = vmatprep.subr.mxu0 0.0
    %4126 = vmatpush1.msra.mxu0 0.0
    %4127 = vmatprep.subr.mxu0 0.0
    %4128 = vmatpush1.msra.mxu0 0.0
    %4129 = vmatprep.subr.mxu0 0.0
    %4130 = vmatpush1.msra.mxu0 0.0
    %4131 = vmatprep.subr.mxu0 0.0
    %4132 = vmatpush1.msra.mxu0 0.0
    %4133 = vmatprep.subr.mxu0 0.0
    %4134 = vmatpush1.msra.mxu0 0.0
    %4135 = vmatprep.subr.mxu0 0.0
    %4136 = vmatpush1.msra.mxu0 0.0
    %4137 = vmatprep.subr.mxu0 0.0
    %4138 = vmatpush1.msra.mxu0 0.0
    %4139 = vmatprep.subr.mxu0 0.0
    %4140 = vmatpush1.msra.mxu0 0.0
    %4141 = vmatprep.subr.mxu0 0.0
    %4142 = vmatpush1.msra.mxu0 0.0
    %4143 = vmatprep.subr.mxu0 0.0
    %4144 = vmatpush1.msra.mxu0 0.0
    %4145 = vmatprep.subr.mxu0 0.0
    %4146 = vmatpush1.msra.mxu0 0.0
    %4147 = vmatprep.subr.mxu0 0.0
    %4148 = vmatpush1.msra.mxu0 0.0
    %4149 = vmatprep.subr.mxu0 0.0
    %4150 = vmatpush1.msra.mxu0 0.0
    %4151 = vmatprep.subr.mxu0 0.0
    %4152 = vmatpush1.msra.mxu0 0.0
    %4153 = vmatprep.subr.mxu0 0.0
    %4154 = vmatpush1.msra.mxu0 %v2198
    %4155 = vmatprep.subr.mxu0 0.0
    %4156 = vmatpush2.msra.mxu0 0.0
    %4157 = vmatprep.subr.mxu0 0.0
    %4158 = vmatpush2.msra.mxu0 0.0
    %4159 = vmatprep.subr.mxu0 0.0
    %4160 = vmatpush2.msra.mxu0 0.0
    %4161 = vmatprep.subr.mxu0 0.0
    %4162 = vmatpush2.msra.mxu0 0.0
    %4163 = vmatprep.subr.mxu0 0.0
    %4164 = vmatpush2.msra.mxu0 0.0
    %4165 = vmatprep.subr.mxu0 0.0
    %4166 = vmatpush2.msra.mxu0 0.0
    %4167 = vmatprep.subr.mxu0 0.0
    %4168 = vmatpush2.msra.mxu0 0.0
    %4169 = vmatprep.subr.mxu0 0.0
    %4170 = vmatpush2.msra.mxu0 0.0
    %4171 = vmatprep.subr.mxu0 0.0
    %4172 = vmatpush2.msra.mxu0 0.0
    %4173 = vmatprep.subr.mxu0 0.0
    %4174 = vmatpush2.msra.mxu0 0.0
    %4175 = vmatprep.subr.mxu0 0.0
    %4176 = vmatpush2.msra.mxu0 0.0
    %4177 = vmatprep.subr.mxu0 0.0
    %4178 = vmatpush2.msra.mxu0 0.0
    %4179 = vmatprep.subr.mxu0 0.0
    %4180 = vmatpush2.msra.mxu0 0.0
    %4181 = vmatprep.subr.mxu0 0.0
    %4182 = vmatpush2.msra.mxu0 0.0
    %4183 = vmatprep.subr.mxu0 0.0
    %4184 = vmatpush2.msra.mxu0 0.0
    %4185 = vmatprep.subr.mxu0 0.0
    %4186 = vmatpush2.msra.mxu0 0.0
    %4187 = vmatprep.mubr.f32.mxu0 0.0
    %4188 = vmatmul.mubr.f32.gmra.mxu0 %v4121
    %v4189 = vpop.f32.mrf.mxu0
    %v4190 = vadd.f32 0.0, %v4189
    %v4191 = vpop.f32.mrf.mxu0
    %4192 = vdwg.mxu0
    %v4194 = vsel %vm759, %v3679, 0
    %4196 = vmatprep.subr.mxu0 0.0
    %4197 = vmatpush1.msra.mxu0 0.0
    %4198 = vmatprep.subr.mxu0 0.0
    %4199 = vmatpush1.msra.mxu0 0.0
    %4200 = vmatprep.subr.mxu0 0.0
    %4201 = vmatpush1.msra.mxu0 0.0
    %4202 = vmatprep.subr.mxu0 0.0
    %4203 = vmatpush1.msra.mxu0 0.0
    %4204 = vmatprep.subr.mxu0 0.0
    %4205 = vmatpush1.msra.mxu0 0.0
    %4206 = vmatprep.subr.mxu0 0.0
    %4207 = vmatpush1.msra.mxu0 0.0
    %4208 = vmatprep.subr.mxu0 0.0
    %4209 = vmatpush1.msra.mxu0 0.0
    %4210 = vmatprep.subr.mxu0 0.0
    %4211 = vmatpush1.msra.mxu0 0.0
    %4212 = vmatprep.subr.mxu0 0.0
    %4213 = vmatpush1.msra.mxu0 0.0
    %4214 = vmatprep.subr.mxu0 0.0
    %4215 = vmatpush1.msra.mxu0 0.0
    %4216 = vmatprep.subr.mxu0 0.0
    %4217 = vmatpush1.msra.mxu0 0.0
    %4218 = vmatprep.subr.mxu0 0.0
    %4219 = vmatpush1.msra.mxu0 0.0
    %4220 = vmatprep.subr.mxu0 0.0
    %4221 = vmatpush1.msra.mxu0 0.0
    %4222 = vmatprep.subr.mxu0 0.0
    %4223 = vmatpush1.msra.mxu0 0.0
    %4224 = vmatprep.subr.mxu0 0.0
    %4225 = vmatpush1.msra.mxu0 0.0
    %4226 = vmatprep.subr.mxu0 0.0
    %4227 = vmatpush1.msra.mxu0 %v2274
    %4228 = vmatprep.subr.mxu0 0.0
    %4229 = vmatpush2.msra.mxu0 0.0
    %4230 = vmatprep.subr.mxu0 0.0
    %4231 = vmatpush2.msra.mxu0 0.0
    %4232 = vmatprep.subr.mxu0 0.0
    %4233 = vmatpush2.msra.mxu0 0.0
    %4234 = vmatprep.subr.mxu0 0.0
    %4235 = vmatpush2.msra.mxu0 0.0
    %4236 = vmatprep.subr.mxu0 0.0
    %4237 = vmatpush2.msra.mxu0 0.0
    %4238 = vmatprep.subr.mxu0 0.0
    %4239 = vmatpush2.msra.mxu0 0.0
    %4240 = vmatprep.subr.mxu0 0.0
    %4241 = vmatpush2.msra.mxu0 0.0
    %4242 = vmatprep.subr.mxu0 0.0
    %4243 = vmatpush2.msra.mxu0 0.0
    %4244 = vmatprep.subr.mxu0 0.0
    %4245 = vmatpush2.msra.mxu0 0.0
    %4246 = vmatprep.subr.mxu0 0.0
    %4247 = vmatpush2.msra.mxu0 0.0
    %4248 = vmatprep.subr.mxu0 0.0
    %4249 = vmatpush2.msra.mxu0 0.0
    %4250 = vmatprep.subr.mxu0 0.0
    %4251 = vmatpush2.msra.mxu0 0.0
    %4252 = vmatprep.subr.mxu0 0.0
    %4253 = vmatpush2.msra.mxu0 0.0
    %4254 = vmatprep.subr.mxu0 0.0
    %4255 = vmatpush2.msra.mxu0 0.0
    %4256 = vmatprep.subr.mxu0 0.0
    %4257 = vmatpush2.msra.mxu0 0.0
    %4258 = vmatprep.subr.mxu0 0.0
    %4259 = vmatpush2.msra.mxu0 0.0
    %4260 = vmatprep.mubr.f32.mxu0 0.0
    %4261 = vmatmul.mubr.f32.gmra.mxu0 %v4194
    %v4262 = vpop.f32.mrf.mxu0
    %v4263 = vadd.f32 0.0, %v4262
    %v4264 = vpop.f32.mrf.mxu0
    %4265 = vdwg.mxu0
    %v4267 = vsel %vm759, %v3752, 0
    %4269 = vmatprep.subr.mxu0 0.0
    %4270 = vmatpush1.msra.mxu0 0.0
    %4271 = vmatprep.subr.mxu0 0.0
    %4272 = vmatpush1.msra.mxu0 0.0
    %4273 = vmatprep.subr.mxu0 0.0
    %4274 = vmatpush1.msra.mxu0 0.0
    %4275 = vmatprep.subr.mxu0 0.0
    %4276 = vmatpush1.msra.mxu0 0.0
    %4277 = vmatprep.subr.mxu0 0.0
    %4278 = vmatpush1.msra.mxu0 0.0
    %4279 = vmatprep.subr.mxu0 0.0
    %4280 = vmatpush1.msra.mxu0 0.0
    %4281 = vmatprep.subr.mxu0 0.0
    %4282 = vmatpush1.msra.mxu0 0.0
    %4283 = vmatprep.subr.mxu0 0.0
    %4284 = vmatpush1.msra.mxu0 0.0
    %4285 = vmatprep.subr.mxu0 0.0
    %4286 = vmatpush1.msra.mxu0 0.0
    %4287 = vmatprep.subr.mxu0 0.0
    %4288 = vmatpush1.msra.mxu0 0.0
    %4289 = vmatprep.subr.mxu0 0.0
    %4290 = vmatpush1.msra.mxu0 0.0
    %4291 = vmatprep.subr.mxu0 0.0
    %4292 = vmatpush1.msra.mxu0 0.0
    %4293 = vmatprep.subr.mxu0 0.0
    %4294 = vmatpush1.msra.mxu0 0.0
    %4295 = vmatprep.subr.mxu0 0.0
    %4296 = vmatpush1.msra.mxu0 0.0
    %4297 = vmatprep.subr.mxu0 0.0
    %4298 = vmatpush1.msra.mxu0 0.0
    %4299 = vmatprep.subr.mxu0 0.0
    %4300 = vmatpush1.msra.mxu0 %v2350
    %4301 = vmatprep.subr.mxu0 0.0
    %4302 = vmatpush2.msra.mxu0 0.0
    %4303 = vmatprep.subr.mxu0 0.0
    %4304 = vmatpush2.msra.mxu0 0.0
    %4305 = vmatprep.subr.mxu0 0.0
    %4306 = vmatpush2.msra.mxu0 0.0
    %4307 = vmatprep.subr.mxu0 0.0
    %4308 = vmatpush2.msra.mxu0 0.0
    %4309 = vmatprep.subr.mxu0 0.0
    %4310 = vmatpush2.msra.mxu0 0.0
    %4311 = vmatprep.subr.mxu0 0.0
    %4312 = vmatpush2.msra.mxu0 0.0
    %4313 = vmatprep.subr.mxu0 0.0
    %4314 = vmatpush2.msra.mxu0 0.0
    %4315 = vmatprep.subr.mxu0 0.0
    %4316 = vmatpush2.msra.mxu0 0.0
    %4317 = vmatprep.subr.mxu0 0.0
    %4318 = vmatpush2.msra.mxu0 0.0
    %4319 = vmatprep.subr.mxu0 0.0
    %4320 = vmatpush2.msra.mxu0 0.0
    %4321 = vmatprep.subr.mxu0 0.0
    %4322 = vmatpush2.msra.mxu0 0.0
    %4323 = vmatprep.subr.mxu0 0.0
    %4324 = vmatpush2.msra.mxu0 0.0
    %4325 = vmatprep.subr.mxu0 0.0
    %4326 = vmatpush2.msra.mxu0 0.0
    %4327 = vmatprep.subr.mxu0 0.0
    %4328 = vmatpush2.msra.mxu0 0.0
    %4329 = vmatprep.subr.mxu0 0.0
    %4330 = vmatpush2.msra.mxu0 0.0
    %4331 = vmatprep.subr.mxu0 0.0
    %4332 = vmatpush2.msra.mxu0 0.0
    %4333 = vmatprep.mubr.f32.mxu0 0.0
    %4334 = vmatmul.mubr.f32.gmra.mxu0 %v4267
    %v4335 = vpop.f32.mrf.mxu0
    %v4336 = vadd.f32 0.0, %v4335
    %v4337 = vpop.f32.mrf.mxu0
    %4338 = vdwg.mxu0
    %v4340 = vsel %vm759, %v3825, 0
    %4342 = vmatprep.subr.mxu0 0.0
    %4343 = vmatpush1.msra.mxu0 0.0
    %4344 = vmatprep.subr.mxu0 0.0
    %4345 = vmatpush1.msra.mxu0 0.0
    %4346 = vmatprep.subr.mxu0 0.0
    %4347 = vmatpush1.msra.mxu0 0.0
    %4348 = vmatprep.subr.mxu0 0.0
    %4349 = vmatpush1.msra.mxu0 0.0
    %4350 = vmatprep.subr.mxu0 0.0
    %4351 = vmatpush1.msra.mxu0 0.0
    %4352 = vmatprep.subr.mxu0 0.0
    %4353 = vmatpush1.msra.mxu0 0.0
    %4354 = vmatprep.subr.mxu0 0.0
    %4355 = vmatpush1.msra.mxu0 0.0
    %4356 = vmatprep.subr.mxu0 0.0
    %4357 = vmatpush1.msra.mxu0 0.0
    %4358 = vmatprep.subr.mxu0 0.0
    %4359 = vmatpush1.msra.mxu0 0.0
    %4360 = vmatprep.subr.mxu0 0.0
    %4361 = vmatpush1.msra.mxu0 0.0
    %4362 = vmatprep.subr.mxu0 0.0
    %4363 = vmatpush1.msra.mxu0 0.0
    %4364 = vmatprep.subr.mxu0 0.0
    %4365 = vmatpush1.msra.mxu0 0.0
    %4366 = vmatprep.subr.mxu0 0.0
    %4367 = vmatpush1.msra.mxu0 0.0
    %4368 = vmatprep.subr.mxu0 0.0
    %4369 = vmatpush1.msra.mxu0 0.0
    %4370 = vmatprep.subr.mxu0 0.0
    %4371 = vmatpush1.msra.mxu0 0.0
    %4372 = vmatprep.subr.mxu0 0.0
    %4373 = vmatpush1.msra.mxu0 %v2426
    %4374 = vmatprep.subr.mxu0 0.0
    %4375 = vmatpush2.msra.mxu0 0.0
    %4376 = vmatprep.subr.mxu0 0.0
    %4377 = vmatpush2.msra.mxu0 0.0
    %4378 = vmatprep.subr.mxu0 0.0
    %4379 = vmatpush2.msra.mxu0 0.0
    %4380 = vmatprep.subr.mxu0 0.0
    %4381 = vmatpush2.msra.mxu0 0.0
    %4382 = vmatprep.subr.mxu0 0.0
    %4383 = vmatpush2.msra.mxu0 0.0
    %4384 = vmatprep.subr.mxu0 0.0
    %4385 = vmatpush2.msra.mxu0 0.0
    %4386 = vmatprep.subr.mxu0 0.0
    %4387 = vmatpush2.msra.mxu0 0.0
    %4388 = vmatprep.subr.mxu0 0.0
    %4389 = vmatpush2.msra.mxu0 0.0
    %4390 = vmatprep.subr.mxu0 0.0
    %4391 = vmatpush2.msra.mxu0 0.0
    %4392 = vmatprep.subr.mxu0 0.0
    %4393 = vmatpush2.msra.mxu0 0.0
    %4394 = vmatprep.subr.mxu0 0.0
    %4395 = vmatpush2.msra.mxu0 0.0
    %4396 = vmatprep.subr.mxu0 0.0
    %4397 = vmatpush2.msra.mxu0 0.0
    %4398 = vmatprep.subr.mxu0 0.0
    %4399 = vmatpush2.msra.mxu0 0.0
    %4400 = vmatprep.subr.mxu0 0.0
    %4401 = vmatpush2.msra.mxu0 0.0
    %4402 = vmatprep.subr.mxu0 0.0
    %4403 = vmatpush2.msra.mxu0 0.0
    %4404 = vmatprep.subr.mxu0 0.0
    %4405 = vmatpush2.msra.mxu0 0.0
    %4406 = vmatprep.mubr.f32.mxu0 0.0
    %4407 = vmatmul.mubr.f32.gmra.mxu0 %v4340
    %v4408 = vpop.f32.mrf.mxu0
    %v4409 = vadd.f32 0.0, %v4408
    %v4410 = vpop.f32.mrf.mxu0
    %4411 = vdwg.mxu0
    %v4413 = vsel %vm759, %v3898, 0
    %4415 = vmatprep.subr.mxu0 0.0
    %4416 = vmatpush1.msra.mxu0 0.0
    %4417 = vmatprep.subr.mxu0 0.0
    %4418 = vmatpush1.msra.mxu0 0.0
    %4419 = vmatprep.subr.mxu0 0.0
    %4420 = vmatpush1.msra.mxu0 0.0
    %4421 = vmatprep.subr.mxu0 0.0
    %4422 = vmatpush1.msra.mxu0 0.0
    %4423 = vmatprep.subr.mxu0 0.0
    %4424 = vmatpush1.msra.mxu0 0.0
    %4425 = vmatprep.subr.mxu0 0.0
    %4426 = vmatpush1.msra.mxu0 0.0
    %4427 = vmatprep.subr.mxu0 0.0
    %4428 = vmatpush1.msra.mxu0 0.0
    %4429 = vmatprep.subr.mxu0 0.0
    %4430 = vmatpush1.msra.mxu0 0.0
    %4431 = vmatprep.subr.mxu0 0.0
    %4432 = vmatpush1.msra.mxu0 0.0
    %4433 = vmatprep.subr.mxu0 0.0
    %4434 = vmatpush1.msra.mxu0 0.0
    %4435 = vmatprep.subr.mxu0 0.0
    %4436 = vmatpush1.msra.mxu0 0.0
    %4437 = vmatprep.subr.mxu0 0.0
    %4438 = vmatpush1.msra.mxu0 0.0
    %4439 = vmatprep.subr.mxu0 0.0
    %4440 = vmatpush1.msra.mxu0 0.0
    %4441 = vmatprep.subr.mxu0 0.0
    %4442 = vmatpush1.msra.mxu0 0.0
    %4443 = vmatprep.subr.mxu0 0.0
    %4444 = vmatpush1.msra.mxu0 0.0
    %4445 = vmatprep.subr.mxu0 0.0
    %4446 = vmatpush1.msra.mxu0 %v2502
    %4447 = vmatprep.subr.mxu0 0.0
    %4448 = vmatpush2.msra.mxu0 0.0
    %4449 = vmatprep.subr.mxu0 0.0
    %4450 = vmatpush2.msra.mxu0 0.0
    %4451 = vmatprep.subr.mxu0 0.0
    %4452 = vmatpush2.msra.mxu0 0.0
    %4453 = vmatprep.subr.mxu0 0.0
    %4454 = vmatpush2.msra.mxu0 0.0
    %4455 = vmatprep.subr.mxu0 0.0
    %4456 = vmatpush2.msra.mxu0 0.0
    %4457 = vmatprep.subr.mxu0 0.0
    %4458 = vmatpush2.msra.mxu0 0.0
    %4459 = vmatprep.subr.mxu0 0.0
    %4460 = vmatpush2.msra.mxu0 0.0
    %4461 = vmatprep.subr.mxu0 0.0
    %4462 = vmatpush2.msra.mxu0 0.0
    %4463 = vmatprep.subr.mxu0 0.0
    %4464 = vmatpush2.msra.mxu0 0.0
    %4465 = vmatprep.subr.mxu0 0.0
    %4466 = vmatpush2.msra.mxu0 0.0
    %4467 = vmatprep.subr.mxu0 0.0
    %4468 = vmatpush2.msra.mxu0 0.0
    %4469 = vmatprep.subr.mxu0 0.0
    %4470 = vmatpush2.msra.mxu0 0.0
    %4471 = vmatprep.subr.mxu0 0.0
    %4472 = vmatpush2.msra.mxu0 0.0
    %4473 = vmatprep.subr.mxu0 0.0
    %4474 = vmatpush2.msra.mxu0 0.0
    %4475 = vmatprep.subr.mxu0 0.0
    %4476 = vmatpush2.msra.mxu0 0.0
    %4477 = vmatprep.subr.mxu0 0.0
    %4478 = vmatpush2.msra.mxu0 0.0
    %4479 = vmatprep.mubr.f32.mxu0 0.0
    %4480 = vmatmul.mubr.f32.gmra.mxu0 %v4413
    %v4481 = vpop.f32.mrf.mxu0
    %v4482 = vadd.f32 0.0, %v4481
    %v4483 = vpop.f32.mrf.mxu0
    %4484 = vdwg.mxu0
    %v4486 = vsel %vm759, %v3971, 0
    %4488 = vmatprep.subr.mxu0 0.0
    %4489 = vmatpush1.msra.mxu0 0.0
    %4490 = vmatprep.subr.mxu0 0.0
    %4491 = vmatpush1.msra.mxu0 0.0
    %4492 = vmatprep.subr.mxu0 0.0
    %4493 = vmatpush1.msra.mxu0 0.0
    %4494 = vmatprep.subr.mxu0 0.0
    %4495 = vmatpush1.msra.mxu0 0.0
    %4496 = vmatprep.subr.mxu0 0.0
    %4497 = vmatpush1.msra.mxu0 0.0
    %4498 = vmatprep.subr.mxu0 0.0
    %4499 = vmatpush1.msra.mxu0 0.0
    %4500 = vmatprep.subr.mxu0 0.0
    %4501 = vmatpush1.msra.mxu0 0.0
    %4502 = vmatprep.subr.mxu0 0.0
    %4503 = vmatpush1.msra.mxu0 0.0
    %4504 = vmatprep.subr.mxu0 0.0
    %4505 = vmatpush1.msra.mxu0 0.0
    %4506 = vmatprep.subr.mxu0 0.0
    %4507 = vmatpush1.msra.mxu0 0.0
    %4508 = vmatprep.subr.mxu0 0.0
    %4509 = vmatpush1.msra.mxu0 0.0
    %4510 = vmatprep.subr.mxu0 0.0
    %4511 = vmatpush1.msra.mxu0 0.0
    %4512 = vmatprep.subr.mxu0 0.0
    %4513 = vmatpush1.msra.mxu0 0.0
    %4514 = vmatprep.subr.mxu0 0.0
    %4515 = vmatpush1.msra.mxu0 0.0
    %4516 = vmatprep.subr.mxu0 0.0
    %4517 = vmatpush1.msra.mxu0 0.0
    %4518 = vmatprep.subr.mxu0 0.0
    %4519 = vmatpush1.msra.mxu0 %v2578
    %4520 = vmatprep.subr.mxu0 0.0
    %4521 = vmatpush2.msra.mxu0 0.0
    %4522 = vmatprep.subr.mxu0 0.0
    %4523 = vmatpush2.msra.mxu0 0.0
    %4524 = vmatprep.subr.mxu0 0.0
    %4525 = vmatpush2.msra.mxu0 0.0
    %4526 = vmatprep.subr.mxu0 0.0
    %4527 = vmatpush2.msra.mxu0 0.0
    %4528 = vmatprep.subr.mxu0 0.0
    %4529 = vmatpush2.msra.mxu0 0.0
    %4530 = vmatprep.subr.mxu0 0.0
    %4531 = vmatpush2.msra.mxu0 0.0
    %4532 = vmatprep.subr.mxu0 0.0
    %4533 = vmatpush2.msra.mxu0 0.0
    %4534 = vmatprep.subr.mxu0 0.0
    %4535 = vmatpush2.msra.mxu0 0.0
    %4536 = vmatprep.subr.mxu0 0.0
    %4537 = vmatpush2.msra.mxu0 0.0
    %4538 = vmatprep.subr.mxu0 0.0
    %4539 = vmatpush2.msra.mxu0 0.0
    %4540 = vmatprep.subr.mxu0 0.0
    %4541 = vmatpush2.msra.mxu0 0.0
    %4542 = vmatprep.subr.mxu0 0.0
    %4543 = vmatpush2.msra.mxu0 0.0
    %4544 = vmatprep.subr.mxu0 0.0
    %4545 = vmatpush2.msra.mxu0 0.0
    %4546 = vmatprep.subr.mxu0 0.0
    %4547 = vmatpush2.msra.mxu0 0.0
    %4548 = vmatprep.subr.mxu0 0.0
    %4549 = vmatpush2.msra.mxu0 0.0
    %4550 = vmatprep.subr.mxu0 0.0
    %4551 = vmatpush2.msra.mxu0 0.0
    %4552 = vmatprep.mubr.f32.mxu0 0.0
    %4553 = vmatmul.mubr.f32.gmra.mxu0 %v4486
    %v4554 = vpop.f32.mrf.mxu0
    %v4555 = vadd.f32 0.0, %v4554
    %v4556 = vpop.f32.mrf.mxu0
    %4557 = vdwg.mxu0
    %v4558 = vsel %vm164, %v4044, 0.0
    %v4559 = vsel %vm164, %v4117, 0.0
    %v4560 = vadd.f32 %v4558, %v4559
    %v4561 = vsel %vm164, %v4190, 0.0
    %v4562 = vadd.f32 %v4560, %v4561
    %v4563 = vsel %vm164, %v4263, 0.0
    %v4564 = vadd.f32 %v4562, %v4563
    %v4565 = vsel %vm164, %v4336, 0.0
    %v4566 = vadd.f32 %v4564, %v4565
    %v4567 = vsel %vm164, %v4409, 0.0
    %v4568 = vadd.f32 %v4566, %v4567
    %v4569 = vsel %vm164, %v4482, 0.0
    %v4570 = vadd.f32 %v4568, %v4569
    %v4571 = vsel %vm164, %v4555, 0.0
    %v4572 = vadd.f32 %v4570, %v4571
    %v4573 = vadd.f32 %v4572, %v2669
    %4574 = vst.msk [vmem:[#allocation14] sm:$0xff] %vm164, %v2671
    %4575 = vst.msk [vmem:[#allocation14 + $0x8] sm:$0xff] %vm164, %v4573
    // Predicated region
    $region86: #{tpu_custom_call.1} parent=1 // pred_check
      _
    $region87: #{tpu_custom_call.1} parent=1 // pred_check_branch
      %4577 = sbr.rel (0) target = $region89
    $region88: #{tpu_custom_call.1} parent=1 // pred_region
      %s4579 = ssub.s32 256, 256
      %4580 = vsyncadd [#allocation4], %s4579
      %s4581 = sshll.u32 [#allocation14], 4
      %s4582 = int_to_ptr.vmem [resolvable:$true] %s4581
      %4587 = dma.vmem_to_hbm [thread:$0]  %s4582, 256, %s14, [#allocation4], 128, 128, 8
    $region89: #{tpu_custom_call.1} parent=1 // pred_fallthru
      _
    // Predicated region
    $region90: #{tpu_custom_call.1} parent=1 // pred_check
      _
    $region91: #{tpu_custom_call.1} parent=1 // pred_check_branch
      %4589 = sbr.rel (0) target = $region93
    $region92: #{tpu_custom_call.1} parent=1 // pred_region
      %4590 = dma.done [#allocation4], 256
    $region93: #{tpu_custom_call.1} parent=1 // pred_fallthru
      _
    %4591 = vsyncpa [#allocation3], 1
    %4592 = vsyncpa [#allocation6], 1
    %4593 = vsyncpa [#allocation9], 1
    %4594 = vsyncpa [#allocation12], 1
    %4595 = vsyncpa [#allocation4], 1

</llo_original>
